<compile_context>
chip_gen: v5e
topology: v5e:2x2
jax: 0.10.0
libtpu: 0.0.40
codegen_flags: <defaults>
</compile_context>

<pallas_src>
import math
from types import SimpleNamespace

import numpy as np
import jax
import jax.numpy as jnp
from jax.experimental import pallas as pl
from jax.experimental.pallas import tpu as pltpu


# canonical ordering of the 16 parameters of one attention block (K|V fused)
_BLOCK_KEYS = (
    "ln_q_g", "ln_q_b", "ln_kv_g", "ln_kv_b",
    "wq", "bq", "wkv", "bkv", "wo", "bo",
    "ln2_g", "ln2_b", "w1", "b1", "w2", "b2",
)
_MATMUL_KEYS = frozenset({"wq", "wkv", "wo", "w1", "w2"})
_NB = len(_BLOCK_KEYS)  # 16


def _round8(n):
    return (n + 7) // 8 * 8


# ----------------------------------------------------------------------------
# In-kernel helpers (operate on loaded arrays, batch folded into rows)
# ----------------------------------------------------------------------------
def _layer_norm(x, g, b, eps=1e-5):
    mu = jnp.mean(x, axis=-1, keepdims=True)
    xc = x - mu
    var = jnp.mean(xc * xc, axis=-1, keepdims=True)
    return xc * jax.lax.rsqrt(var + eps) * g + b


def _proj(x2, w_bf16, b_f32):
    # (M, K) @ (K, N) + (1, N); bf16 MXU inputs, f32 accumulation.
    y = jnp.dot(x2.astype(jnp.bfloat16), w_bf16, preferred_element_type=jnp.float32)
    return y + b_f32


def _attn_mlp_block(xq2, kv2, bias, w):
    """Pre-LN single-head cross/self-attention + MLP block.

    xq2:  (R, dq)   activations (batch folded into rows).
    kv2:  (C, dkv)  key/value input (batch folded into rows).
    bias: (R, C)    additive block-diagonal mask (0 / -1e30), precomputed.
    w:    dict of parameters; wk|wv fused into wkv, 1/sqrt(dq) folded into wq/bq.
    """
    dq = w["wq"].shape[-1]

    qn = _layer_norm(xq2, w["ln_q_g"], w["ln_q_b"])
    q = _proj(qn, w["wq"], w["bq"])                  # scale already folded in

    kvn = _layer_norm(kv2, w["ln_kv_g"], w["ln_kv_b"])
    kv = _proj(kvn, w["wkv"], w["bkv"])              # single fused K|V matmul
    k = kv[:, :dq]
    v = kv[:, dq:]

    # scores = q @ k^T ('rd,cd->rc'), plus precomputed block-diagonal bias
    s = jax.lax.dot_general(
        q.astype(jnp.bfloat16), k.astype(jnp.bfloat16),
        (((1,), (1,)), ((), ())),
        preferred_element_type=jnp.float32,
    ) + bias

    m = s.max(axis=-1, keepdims=True)
    p = jnp.exp(s - m)
    denom = jnp.sum(p, axis=-1, keepdims=True)
    pv = jnp.dot(p.astype(jnp.bfloat16), v.astype(jnp.bfloat16),
                 preferred_element_type=jnp.float32)
    attn = pv * pl.reciprocal(denom, approx=True)

    x = xq2 + _proj(attn, w["wo"], w["bo"])          # residual 1

    xn = _layer_norm(x, w["ln2_g"], w["ln2_b"])
    # TODO(synk): PyTorch nn.GELU default is exact (erf); tanh approximation used.
    hmid = jax.nn.gelu(_proj(xn, w["w1"], w["b1"]), approximate=True)
    return x + _proj(hmid, w["w2"], w["b2"])         # residual 2


# ----------------------------------------------------------------------------
# Fused kernel
# ----------------------------------------------------------------------------
def _make_fused_kernel(depth):
    def kernel(*refs):
        (x_ref, h_ref, q_ref, lat_ref, encb_ref, procb_ref, decb_ref,
         tok_w_ref, tok_b_ref, hid_w_ref, hid_b_ref) = refs[:11]
        enc_refs = refs[11:11 + _NB]
        proc_refs = refs[11 + _NB:11 + 2 * _NB]       # stacked along depth
        dec_refs = refs[11 + 2 * _NB:11 + 3 * _NB]
        out_ref, hidden_ref = refs[11 + 3 * _NB:]

        def load(block_refs, idx=None):
            return {k: (r[idx] if idx is not None else r[...])
                    for k, r in zip(_BLOCK_KEYS, block_refs)}

        tok_w = tok_w_ref[...]
        tok_b = tok_b_ref[...]

        # token_embedding(x) and token_embedding(query); whole batch per matmul
        tok2 = _proj(x_ref[...], tok_w, tok_b)          # (Rx_pad, emb)
        q_emb2 = _proj(q_ref[...], tok_w, tok_b)        # (Rq_pad, emb)

        # encoder KV = cat(tokens, h) as ONE row-concatenated buffer
        kv_enc = jnp.concatenate([tok2, h_ref[...]], axis=0)

        # encoder: latents attend to cat(tokens, h)
        z2 = _attn_mlp_block(lat_ref[...], kv_enc, encb_ref[...], load(enc_refs))

        # hidden = hidden_embedding(encoder output)  (before process, per spec)
        hidden_ref[...] = _proj(z2, hid_w_ref[...], hid_b_ref[...]).astype(
            hidden_ref.dtype)

        # process: self-attention over latents; bias hoisted + reused per layer
        proc_bias = procb_ref[...]
        if depth <= 4:
            for d in range(depth):
                z2 = _attn_mlp_block(z2, z2, proc_bias, load(proc_refs, d))
        else:
            def body(d, z):
                return _attn_mlp_block(z, z, proc_bias, load(proc_refs, d))
            z2 = jax.lax.fori_loop(0, depth, body, z2)

        # decoder: embedded queries attend to processed latents
        out = _attn_mlp_block(q_emb2, z2, decb_ref[...], load(dec_refs))
        out_ref[...] = out.astype(out_ref.dtype)

    return kernel


# ----------------------------------------------------------------------------
# Wrapper-side weight preparation
# ----------------------------------------------------------------------------
def _fuse_block(p):
    dq = p["wq"].shape[1]
    scale = 1.0 / math.sqrt(dq)
    return {
        "ln_q_g": p["ln_q_g"], "ln_q_b": p["ln_q_b"],
        "ln_kv_g": p["ln_kv_g"], "ln_kv_b": p["ln_kv_b"],
        "wq": p["wq"] * scale, "bq": p["bq"] * scale,     # fold 1/sqrt(dq)
        "wkv": jnp.concatenate([p["wk"], p["wv"]], axis=1),
        "bkv": jnp.concatenate([p["bk"], p["bv"]], axis=1),
        "wo": p["wo"], "bo": p["bo"],
        "ln2_g": p["ln2_g"], "ln2_b": p["ln2_b"],
        "w1": p["w1"], "b1": p["b1"], "w2": p["w2"], "b2": p["b2"],
    }


def _flat_block(p):
    f = _fuse_block(p)
    return [f[k].astype(jnp.bfloat16) if k in _MATMUL_KEYS else f[k]
            for k in _BLOCK_KEYS]


def _flat_stacked(plist):
    fused = [_fuse_block(p) for p in plist]
    out = []
    for k in _BLOCK_KEYS:
        a = jnp.stack([f[k] for f in fused], axis=0)
        if k in _MATMUL_KEYS:
            a = a.astype(jnp.bfloat16)
        out.append(a)
    return out


# precomputed block-diagonal additive biases (static shapes -> numpy constants)
def _batch_ids(n_real, per, n_pad, sentinel):
    bid = np.full((n_pad,), sentinel, dtype=np.int32)
    bid[:n_real] = np.arange(n_real, dtype=np.int32) // per
    return bid


def _bias_from_ids(row_bid, col_bid):
    m = row_bid[:, None] == col_bid[None, :]
    return jnp.asarray(np.where(m, 0.0, -1e30).astype(np.float32))


# ----------------------------------------------------------------------------
# Wrapper (one pallas_call for the whole forward pass)
# ----------------------------------------------------------------------------
def perceiver_io_forward(params, args, x, h, query):
    B, Lx, _ = x.shape
    Lh = h.shape[1]
    Lq = query.shape[1]
    Llat = args.latent_length
    depth = args.depth
    emb = args.emb
    enc_d = args.encode_out

    Rx, Rh, Rq, Rl = B * Lx, B * Lh, B * Lq, B * Llat
    Rx_p, Rh_p, Rq_p, Rl_p = map(_round8, (Rx, Rh, Rq, Rl))
    TD_p = _round8(args.token_dim)

    def pad2(a, rows, cols):
        r, c = a.shape
        return jnp.pad(a, ((0, rows - r), (0, cols - c)))

    x2 = pad2(x.reshape(Rx, args.token_dim), Rx_p, TD_p)
    h2 = pad2(h.reshape(Rh, emb), Rh_p, emb)
    q2 = pad2(query.reshape(Rq, args.token_dim), Rq_p, TD_p)
    lat2 = pad2(
        jnp.broadcast_to(params["latent"][None], (B, Llat, enc_d)).reshape(Rl, enc_d),
        Rl_p, enc_d)                                  # latent pre-replicated

    bid_tok = _batch_ids(Rx, Lx, Rx_p, B)
    bid_h = _batch_ids(Rh, Lh, Rh_p, B)
    bid_lat = _batch_ids(Rl, Llat, Rl_p, B)
    bid_q = _batch_ids(Rq, Lq, Rq_p, B)
    enc_bias = _bias_from_ids(bid_lat, np.concatenate([bid_tok, bid_h]))
    proc_bias = _bias_from_ids(bid_lat, bid_lat)
    dec_bias = _bias_from_ids(bid_q, bid_lat)

    tok_w = pad2(params["tok_w"], TD_p, emb).astype(jnp.bfloat16)

    inputs = [
        x2, h2, q2, lat2, enc_bias, proc_bias, dec_bias,
        tok_w, params["tok_b"],
        params["hid_w"].astype(jnp.bfloat16), params["hid_b"],
        *_flat_block(params["encoder"]),
        *_flat_stacked(params["process"]),
        *_flat_block(params["decoder"]),
    ]

    out2, hidden2 = pl.pallas_call(
        _make_fused_kernel(depth),
        out_shape=(
            jax.ShapeDtypeStruct((Rq_p, emb), jnp.float32),
            jax.ShapeDtypeStruct((Rl_p, emb), jnp.float32),
        ),
        compiler_params=pltpu.CompilerParams(vmem_limit_bytes=32 * 1024 * 1024),
    )(*inputs)

    out2 = out2[:Rq]
    hidden = hidden2[:Rl].reshape(B, Llat, emb)
    if args.agent == "perceiver_io":
        out = out2.reshape(B, args.action_space_size + args.enemy_num, emb)
    else:
        out = out2.reshape(B, 1, emb)
    return out, hidden


# ----------------------------------------------------------------------------
# Deterministic parameter init (mirrors _init_parameters: N(0, 0.02), zero bias)
# ----------------------------------------------------------------------------
def init_linear(key, din, dout, std=0.02):
    w = std * jax.random.normal(key, (din, dout), jnp.float32)
    b = jnp.zeros((1, dout), jnp.float32)
    return w, b


def init_xattn_params(key, dq, dkv, widen=1, std=0.02):
    ks = jax.random.split(key, 6)
    p = {
        "ln_q_g": jnp.ones((1, dq), jnp.float32),
        "ln_q_b": jnp.zeros((1, dq), jnp.float32),
        "ln_kv_g": jnp.ones((1, dkv), jnp.float32),
        "ln_kv_b": jnp.zeros((1, dkv), jnp.float32),
        "ln2_g": jnp.ones((1, dq), jnp.float32),
        "ln2_b": jnp.zeros((1, dq), jnp.float32),
    }
    p["wq"], p["bq"] = init_linear(ks[0], dq, dq, std)
    p["wk"], p["bk"] = init_linear(ks[1], dkv, dq, std)
    p["wv"], p["bv"] = init_linear(ks[2], dkv, dq, std)
    p["wo"], p["bo"] = init_linear(ks[3], dq, dq, std)
    p["w1"], p["b1"] = init_linear(ks[4], dq, widen * dq, std)
    p["w2"], p["b2"] = init_linear(ks[5], widen * dq, dq, std)
    return p


def init_perceiver_io_params(key, args, std=0.02):
    keys = jax.random.split(key, 5 + args.depth)
    params = {}
    params["latent"] = std * jax.random.normal(
        keys[0], (args.latent_length, args.encode_out), jnp.float32)
    params["tok_w"], params["tok_b"] = init_linear(keys[1], args.token_dim, args.emb, std)
    params["hid_w"], params["hid_b"] = init_linear(keys[2], args.encode_out, args.emb, std)
    # encoder: latent (encode_out) attends to tokens (emb)
    params["encoder"] = init_xattn_params(keys[3], args.encode_out, args.emb, std=std)
    # process: self-attention over latents (encode_out)
    params["process"] = [
        init_xattn_params(keys[5 + i], args.encode_out, args.encode_out, std=std)
        for i in range(args.depth)
    ]
    # decoder: query (emb) attends to latents (encode_out)
    params["decoder"] = init_xattn_params(keys[4], args.emb, args.encode_out, std=std)
    return params


# ----------------------------------------------------------------------------
if __name__ == "__main__":
    args = SimpleNamespace(
        token_dim=12,
        emb=32,
        encode_out=32,
        latent_length=8,
        depth=2,
        action_space_size=6,
        enemy_num=3,
        agent="perceiver_io",
    )

    key = jax.random.PRNGKey(0)
    k_param, k_x, k_h, k_q = jax.random.split(key, 4)

    params = init_perceiver_io_params(k_param, args)

    B, Lx, Lh = 2, 10, 4
    Lq = args.action_space_size + args.enemy_num  # 9 (so the .view() is consistent)

    x = jax.random.normal(k_x, (B, Lx, args.token_dim), jnp.float32)
    h = jax.random.normal(k_h, (B, Lh, args.emb), jnp.float32)
    query = jax.random.normal(k_q, (B, Lq, args.token_dim), jnp.float32)

    fwd = jax.jit(lambda p, xx, hh, qq: perceiver_io_forward(p, args, xx, hh, qq))
    out, hidden = fwd(params, x, h, query)
    jax.block_until_ready((out, hidden))

    assert out.shape == (B, args.action_space_size + args.enemy_num, args.emb)
    assert hidden.shape == (B, args.latent_length, args.emb)
    assert bool(jnp.all(jnp.isfinite(out))) and bool(jnp.all(jnp.isfinite(hidden)))

    print("KERNEL_OK")
</pallas_src>

<mosaic_0001>
module attributes {stable_mosaic.version = 11 : i64} {
  func.func @kernel(%arg0: memref<24x16xf32, #tpu.memory_space<vmem>>, %arg1: memref<8x32xf32, #tpu.memory_space<vmem>>, %arg2: memref<24x16xf32, #tpu.memory_space<vmem>>, %arg3: memref<16x32xf32, #tpu.memory_space<vmem>>, %arg4: memref<16x32xf32, #tpu.memory_space<vmem>>, %arg5: memref<16x16xf32, #tpu.memory_space<vmem>>, %arg6: memref<24x16xf32, #tpu.memory_space<vmem>>, %arg7: memref<16x32xbf16, #tpu.memory_space<vmem>>, %arg8: memref<1x32xf32, #tpu.memory_space<vmem>>, %arg9: memref<32x32xbf16, #tpu.memory_space<vmem>>, %arg10: memref<1x32xf32, #tpu.memory_space<vmem>>, %arg11: memref<1x32xf32, #tpu.memory_space<vmem>>, %arg12: memref<1x32xf32, #tpu.memory_space<vmem>>, %arg13: memref<1x32xf32, #tpu.memory_space<vmem>>, %arg14: memref<1x32xf32, #tpu.memory_space<vmem>>, %arg15: memref<32x32xbf16, #tpu.memory_space<vmem>>, %arg16: memref<1x32xf32, #tpu.memory_space<vmem>>, %arg17: memref<32x64xbf16, #tpu.memory_space<vmem>>, %arg18: memref<1x64xf32, #tpu.memory_space<vmem>>, %arg19: memref<32x32xbf16, #tpu.memory_space<vmem>>, %arg20: memref<1x32xf32, #tpu.memory_space<vmem>>, %arg21: memref<1x32xf32, #tpu.memory_space<vmem>>, %arg22: memref<1x32xf32, #tpu.memory_space<vmem>>, %arg23: memref<32x32xbf16, #tpu.memory_space<vmem>>, %arg24: memref<1x32xf32, #tpu.memory_space<vmem>>, %arg25: memref<32x32xbf16, #tpu.memory_space<vmem>>, %arg26: memref<1x32xf32, #tpu.memory_space<vmem>>, %arg27: memref<2x1x32xf32, #tpu.memory_space<vmem>>, %arg28: memref<2x1x32xf32, #tpu.memory_space<vmem>>, %arg29: memref<2x1x32xf32, #tpu.memory_space<vmem>>, %arg30: memref<2x1x32xf32, #tpu.memory_space<vmem>>, %arg31: memref<2x32x32xbf16, #tpu.memory_space<vmem>>, %arg32: memref<2x1x32xf32, #tpu.memory_space<vmem>>, %arg33: memref<2x32x64xbf16, #tpu.memory_space<vmem>>, %arg34: memref<2x1x64xf32, #tpu.memory_space<vmem>>, %arg35: memref<2x32x32xbf16, #tpu.memory_space<vmem>>, %arg36: memref<2x1x32xf32, #tpu.memory_space<vmem>>, %arg37: memref<2x1x32xf32, #tpu.memory_space<vmem>>, %arg38: memref<2x1x32xf32, #tpu.memory_space<vmem>>, %arg39: memref<2x32x32xbf16, #tpu.memory_space<vmem>>, %arg40: memref<2x1x32xf32, #tpu.memory_space<vmem>>, %arg41: memref<2x32x32xbf16, #tpu.memory_space<vmem>>, %arg42: memref<2x1x32xf32, #tpu.memory_space<vmem>>, %arg43: memref<1x32xf32, #tpu.memory_space<vmem>>, %arg44: memref<1x32xf32, #tpu.memory_space<vmem>>, %arg45: memref<1x32xf32, #tpu.memory_space<vmem>>, %arg46: memref<1x32xf32, #tpu.memory_space<vmem>>, %arg47: memref<32x32xbf16, #tpu.memory_space<vmem>>, %arg48: memref<1x32xf32, #tpu.memory_space<vmem>>, %arg49: memref<32x64xbf16, #tpu.memory_space<vmem>>, %arg50: memref<1x64xf32, #tpu.memory_space<vmem>>, %arg51: memref<32x32xbf16, #tpu.memory_space<vmem>>, %arg52: memref<1x32xf32, #tpu.memory_space<vmem>>, %arg53: memref<1x32xf32, #tpu.memory_space<vmem>>, %arg54: memref<1x32xf32, #tpu.memory_space<vmem>>, %arg55: memref<32x32xbf16, #tpu.memory_space<vmem>>, %arg56: memref<1x32xf32, #tpu.memory_space<vmem>>, %arg57: memref<32x32xbf16, #tpu.memory_space<vmem>>, %arg58: memref<1x32xf32, #tpu.memory_space<vmem>>, %arg59: memref<24x32xf32, #tpu.memory_space<vmem>>, %arg60: memref<16x32xf32, #tpu.memory_space<vmem>>) attributes {dimension_semantics = [], scalar_prefetch = 0 : i64, scratch_operands = 0 : i64, tpu.core_type = #tpu.core_type<tc>} {
    %c0 = arith.constant 0 : index
    %c0_0 = arith.constant 0 : index
    %0 = vector.load %arg7[%c0, %c0_0] : memref<16x32xbf16, #tpu.memory_space<vmem>>, vector<16x32xbf16>
    %c0_1 = arith.constant 0 : index
    %c0_2 = arith.constant 0 : index
    %1 = vector.load %arg8[%c0_1, %c0_2] : memref<1x32xf32, #tpu.memory_space<vmem>>, vector<1x32xf32>
    %c0_3 = arith.constant 0 : index
    %c0_4 = arith.constant 0 : index
    %2 = vector.load %arg0[%c0_3, %c0_4] : memref<24x16xf32, #tpu.memory_space<vmem>>, vector<24x16xf32>
    %3 = arith.truncf %2 : vector<24x16xf32> to vector<24x16xbf16>
    %cst = arith.constant dense<0.000000e+00> : vector<24x32xf32>
    %4 = tpu.matmul %3, %0, %cst {dimension_numbers = #tpu.dot_dimension_numbers<[1], [0], [0], [1], [0, 0, 1, 1], [], []>} : vector<24x16xbf16>, vector<16x32xbf16>, vector<24x32xf32> -> vector<24x32xf32>
    %5 = vector.broadcast %1 : vector<1x32xf32> to vector<24x32xf32>
    %6 = arith.addf %4, %5 : vector<24x32xf32>
    %c0_5 = arith.constant 0 : index
    %c0_6 = arith.constant 0 : index
    %7 = vector.load %arg2[%c0_5, %c0_6] : memref<24x16xf32, #tpu.memory_space<vmem>>, vector<24x16xf32>
    %8 = arith.truncf %7 : vector<24x16xf32> to vector<24x16xbf16>
    %cst_7 = arith.constant dense<0.000000e+00> : vector<24x32xf32>
    %9 = tpu.matmul %8, %0, %cst_7 {dimension_numbers = #tpu.dot_dimension_numbers<[1], [0], [0], [1], [0, 0, 1, 1], [], []>} : vector<24x16xbf16>, vector<16x32xbf16>, vector<24x32xf32> -> vector<24x32xf32>
    %10 = vector.broadcast %1 : vector<1x32xf32> to vector<24x32xf32>
    %11 = arith.addf %9, %10 : vector<24x32xf32>
    %c0_8 = arith.constant 0 : index
    %c0_9 = arith.constant 0 : index
    %12 = vector.load %arg1[%c0_8, %c0_9] : memref<8x32xf32, #tpu.memory_space<vmem>>, vector<8x32xf32>
    %13 = tpu.concatenate %6, %12 in 0 : vector<24x32xf32>, vector<8x32xf32> -> vector<32x32xf32>
    %c0_10 = arith.constant 0 : index
    %c0_11 = arith.constant 0 : index
    %14 = vector.load %arg3[%c0_10, %c0_11] : memref<16x32xf32, #tpu.memory_space<vmem>>, vector<16x32xf32>
    %c0_12 = arith.constant 0 : index
    %c0_13 = arith.constant 0 : index
    %15 = vector.load %arg4[%c0_12, %c0_13] : memref<16x32xf32, #tpu.memory_space<vmem>>, vector<16x32xf32>
    %c0_14 = arith.constant 0 : index
    %c0_15 = arith.constant 0 : index
    %16 = vector.load %arg11[%c0_14, %c0_15] : memref<1x32xf32, #tpu.memory_space<vmem>>, vector<1x32xf32>
    %c0_16 = arith.constant 0 : index
    %c0_17 = arith.constant 0 : index
    %17 = vector.load %arg12[%c0_16, %c0_17] : memref<1x32xf32, #tpu.memory_space<vmem>>, vector<1x32xf32>
    %c0_18 = arith.constant 0 : index
    %c0_19 = arith.constant 0 : index
    %18 = vector.load %arg13[%c0_18, %c0_19] : memref<1x32xf32, #tpu.memory_space<vmem>>, vector<1x32xf32>
    %c0_20 = arith.constant 0 : index
    %c0_21 = arith.constant 0 : index
    %19 = vector.load %arg14[%c0_20, %c0_21] : memref<1x32xf32, #tpu.memory_space<vmem>>, vector<1x32xf32>
    %c0_22 = arith.constant 0 : index
    %c0_23 = arith.constant 0 : index
    %20 = vector.load %arg15[%c0_22, %c0_23] : memref<32x32xbf16, #tpu.memory_space<vmem>>, vector<32x32xbf16>
    %c0_24 = arith.constant 0 : index
    %c0_25 = arith.constant 0 : index
    %21 = vector.load %arg16[%c0_24, %c0_25] : memref<1x32xf32, #tpu.memory_space<vmem>>, vector<1x32xf32>
    %c0_26 = arith.constant 0 : index
    %c0_27 = arith.constant 0 : index
    %22 = vector.load %arg17[%c0_26, %c0_27] : memref<32x64xbf16, #tpu.memory_space<vmem>>, vector<32x64xbf16>
    %c0_28 = arith.constant 0 : index
    %c0_29 = arith.constant 0 : index
    %23 = vector.load %arg18[%c0_28, %c0_29] : memref<1x64xf32, #tpu.memory_space<vmem>>, vector<1x64xf32>
    %c0_30 = arith.constant 0 : index
    %c0_31 = arith.constant 0 : index
    %24 = vector.load %arg19[%c0_30, %c0_31] : memref<32x32xbf16, #tpu.memory_space<vmem>>, vector<32x32xbf16>
    %c0_32 = arith.constant 0 : index
    %c0_33 = arith.constant 0 : index
    %25 = vector.load %arg20[%c0_32, %c0_33] : memref<1x32xf32, #tpu.memory_space<vmem>>, vector<1x32xf32>
    %c0_34 = arith.constant 0 : index
    %c0_35 = arith.constant 0 : index
    %26 = vector.load %arg21[%c0_34, %c0_35] : memref<1x32xf32, #tpu.memory_space<vmem>>, vector<1x32xf32>
    %c0_36 = arith.constant 0 : index
    %c0_37 = arith.constant 0 : index
    %27 = vector.load %arg22[%c0_36, %c0_37] : memref<1x32xf32, #tpu.memory_space<vmem>>, vector<1x32xf32>
    %c0_38 = arith.constant 0 : index
    %c0_39 = arith.constant 0 : index
    %28 = vector.load %arg23[%c0_38, %c0_39] : memref<32x32xbf16, #tpu.memory_space<vmem>>, vector<32x32xbf16>
    %c0_40 = arith.constant 0 : index
    %c0_41 = arith.constant 0 : index
    %29 = vector.load %arg24[%c0_40, %c0_41] : memref<1x32xf32, #tpu.memory_space<vmem>>, vector<1x32xf32>
    %c0_42 = arith.constant 0 : index
    %c0_43 = arith.constant 0 : index
    %30 = vector.load %arg25[%c0_42, %c0_43] : memref<32x32xbf16, #tpu.memory_space<vmem>>, vector<32x32xbf16>
    %c0_44 = arith.constant 0 : index
    %c0_45 = arith.constant 0 : index
    %31 = vector.load %arg26[%c0_44, %c0_45] : memref<1x32xf32, #tpu.memory_space<vmem>>, vector<1x32xf32>
    %cst_46 = arith.constant dense<0.000000e+00> : vector<16xf32>
    %32 = vector.multi_reduction <add>, %14, %cst_46 [1] : vector<16x32xf32> to vector<16xf32>
    %33 = vector.shape_cast %32 : vector<16xf32> to vector<16x1xf32>
    %cst_47 = arith.constant 3.200000e+01 : f32
    %34 = vector.broadcast %cst_47 : f32 to vector<16x1xf32>
    %35 = arith.divf %33, %34 : vector<16x1xf32>
    %36 = vector.broadcast %35 : vector<16x1xf32> to vector<16x32xf32>
    %37 = arith.subf %14, %36 : vector<16x32xf32>
    %38 = arith.mulf %37, %37 : vector<16x32xf32>
    %cst_48 = arith.constant dense<0.000000e+00> : vector<16xf32>
    %39 = vector.multi_reduction <add>, %38, %cst_48 [1] : vector<16x32xf32> to vector<16xf32>
    %40 = vector.shape_cast %39 : vector<16xf32> to vector<16x1xf32>
    %cst_49 = arith.constant 3.200000e+01 : f32
    %41 = vector.broadcast %cst_49 : f32 to vector<16x1xf32>
    %42 = arith.divf %40, %41 : vector<16x1xf32>
    %cst_50 = arith.constant 9.99999974E-6 : f32
    %43 = vector.broadcast %cst_50 : f32 to vector<16x1xf32>
    %44 = arith.addf %42, %43 : vector<16x1xf32>
    %45 = math.rsqrt %44 : vector<16x1xf32>
    %46 = vector.broadcast %45 : vector<16x1xf32> to vector<16x32xf32>
    %47 = arith.mulf %37, %46 : vector<16x32xf32>
    %48 = vector.broadcast %16 : vector<1x32xf32> to vector<16x32xf32>
    %49 = arith.mulf %47, %48 : vector<16x32xf32>
    %50 = vector.broadcast %17 : vector<1x32xf32> to vector<16x32xf32>
    %51 = arith.addf %49, %50 : vector<16x32xf32>
    %52 = arith.truncf %51 : vector<16x32xf32> to vector<16x32xbf16>
    %cst_51 = arith.constant dense<0.000000e+00> : vector<16x32xf32>
    %53 = tpu.matmul %52, %20, %cst_51 {dimension_numbers = #tpu.dot_dimension_numbers<[1], [0], [0], [1], [0, 0, 1, 1], [], []>} : vector<16x32xbf16>, vector<32x32xbf16>, vector<16x32xf32> -> vector<16x32xf32>
    %54 = vector.broadcast %21 : vector<1x32xf32> to vector<16x32xf32>
    %55 = arith.addf %53, %54 : vector<16x32xf32>
    %cst_52 = arith.constant dense<0.000000e+00> : vector<32xf32>
    %56 = vector.multi_reduction <add>, %13, %cst_52 [1] : vector<32x32xf32> to vector<32xf32>
    %57 = vector.shape_cast %56 : vector<32xf32> to vector<32x1xf32>
    %cst_53 = arith.constant 3.200000e+01 : f32
    %58 = vector.broadcast %cst_53 : f32 to vector<32x1xf32>
    %59 = arith.divf %57, %58 : vector<32x1xf32>
    %60 = vector.broadcast %59 : vector<32x1xf32> to vector<32x32xf32>
    %61 = arith.subf %13, %60 : vector<32x32xf32>
    %62 = arith.mulf %61, %61 : vector<32x32xf32>
    %cst_54 = arith.constant dense<0.000000e+00> : vector<32xf32>
    %63 = vector.multi_reduction <add>, %62, %cst_54 [1] : vector<32x32xf32> to vector<32xf32>
    %64 = vector.shape_cast %63 : vector<32xf32> to vector<32x1xf32>
    %cst_55 = arith.constant 3.200000e+01 : f32
    %65 = vector.broadcast %cst_55 : f32 to vector<32x1xf32>
    %66 = arith.divf %64, %65 : vector<32x1xf32>
    %cst_56 = arith.constant 9.99999974E-6 : f32
    %67 = vector.broadcast %cst_56 : f32 to vector<32x1xf32>
    %68 = arith.addf %66, %67 : vector<32x1xf32>
    %69 = math.rsqrt %68 : vector<32x1xf32>
    %70 = vector.broadcast %69 : vector<32x1xf32> to vector<32x32xf32>
    %71 = arith.mulf %61, %70 : vector<32x32xf32>
    %72 = vector.broadcast %18 : vector<1x32xf32> to vector<32x32xf32>
    %73 = arith.mulf %71, %72 : vector<32x32xf32>
    %74 = vector.broadcast %19 : vector<1x32xf32> to vector<32x32xf32>
    %75 = arith.addf %73, %74 : vector<32x32xf32>
    %76 = arith.truncf %75 : vector<32x32xf32> to vector<32x32xbf16>
    %cst_57 = arith.constant dense<0.000000e+00> : vector<32x64xf32>
    %77 = tpu.matmul %76, %22, %cst_57 {dimension_numbers = #tpu.dot_dimension_numbers<[1], [0], [0], [1], [0, 0, 1, 1], [], []>} : vector<32x32xbf16>, vector<32x64xbf16>, vector<32x64xf32> -> vector<32x64xf32>
    %78 = vector.broadcast %23 : vector<1x64xf32> to vector<32x64xf32>
    %79 = arith.addf %77, %78 : vector<32x64xf32>
    %80 = vector.extract_strided_slice %79 {offsets = [0, 0], sizes = [32, 32], strides = [1, 1]} : vector<32x64xf32> to vector<32x32xf32>
    %81 = vector.extract_strided_slice %79 {offsets = [0, 32], sizes = [32, 32], strides = [1, 1]} : vector<32x64xf32> to vector<32x32xf32>
    %82 = arith.truncf %55 : vector<16x32xf32> to vector<16x32xbf16>
    %83 = arith.truncf %80 : vector<32x32xf32> to vector<32x32xbf16>
    %cst_58 = arith.constant dense<0.000000e+00> : vector<16x32xf32>
    %84 = tpu.matmul %82, %83, %cst_58 {dimension_numbers = #tpu.dot_dimension_numbers<[1], [1], [0], [0], [0, 0, 1, 0], [], []>} : vector<16x32xbf16>, vector<32x32xbf16>, vector<16x32xf32> -> vector<16x32xf32>
    %85 = arith.addf %84, %15 : vector<16x32xf32>
    %cst_59 = arith.constant dense<0xFF800000> : vector<16xf32>
    %86 = vector.multi_reduction <maximumf>, %85, %cst_59 [1] : vector<16x32xf32> to vector<16xf32>
    %87 = vector.shape_cast %86 : vector<16xf32> to vector<16x1xf32>
    %88 = vector.broadcast %87 : vector<16x1xf32> to vector<16x32xf32>
    %89 = arith.subf %85, %88 : vector<16x32xf32>
    %90 = math.exp %89 : vector<16x32xf32>
    %cst_60 = arith.constant dense<0.000000e+00> : vector<16xf32>
    %91 = vector.multi_reduction <add>, %90, %cst_60 [1] : vector<16x32xf32> to vector<16xf32>
    %92 = vector.shape_cast %91 : vector<16xf32> to vector<16x1xf32>
    %93 = arith.truncf %90 : vector<16x32xf32> to vector<16x32xbf16>
    %94 = arith.truncf %81 : vector<32x32xf32> to vector<32x32xbf16>
    %cst_61 = arith.constant dense<0.000000e+00> : vector<16x32xf32>
    %95 = tpu.matmul %93, %94, %cst_61 {dimension_numbers = #tpu.dot_dimension_numbers<[1], [0], [0], [1], [0, 0, 1, 1], [], []>} : vector<16x32xbf16>, vector<32x32xbf16>, vector<16x32xf32> -> vector<16x32xf32>
    %96 = tpu.reciprocal %92 {approx = true} : vector<16x1xf32> -> vector<16x1xf32>
    %97 = vector.broadcast %96 : vector<16x1xf32> to vector<16x32xf32>
    %98 = arith.mulf %95, %97 : vector<16x32xf32>
    %99 = arith.truncf %98 : vector<16x32xf32> to vector<16x32xbf16>
    %cst_62 = arith.constant dense<0.000000e+00> : vector<16x32xf32>
    %100 = tpu.matmul %99, %24, %cst_62 {dimension_numbers = #tpu.dot_dimension_numbers<[1], [0], [0], [1], [0, 0, 1, 1], [], []>} : vector<16x32xbf16>, vector<32x32xbf16>, vector<16x32xf32> -> vector<16x32xf32>
    %101 = vector.broadcast %25 : vector<1x32xf32> to vector<16x32xf32>
    %102 = arith.addf %100, %101 : vector<16x32xf32>
    %103 = arith.addf %14, %102 : vector<16x32xf32>
    %cst_63 = arith.constant dense<0.000000e+00> : vector<16xf32>
    %104 = vector.multi_reduction <add>, %103, %cst_63 [1] : vector<16x32xf32> to vector<16xf32>
    %105 = vector.shape_cast %104 : vector<16xf32> to vector<16x1xf32>
    %cst_64 = arith.constant 3.200000e+01 : f32
    %106 = vector.broadcast %cst_64 : f32 to vector<16x1xf32>
    %107 = arith.divf %105, %106 : vector<16x1xf32>
    %108 = vector.broadcast %107 : vector<16x1xf32> to vector<16x32xf32>
    %109 = arith.subf %103, %108 : vector<16x32xf32>
    %110 = arith.mulf %109, %109 : vector<16x32xf32>
    %cst_65 = arith.constant dense<0.000000e+00> : vector<16xf32>
    %111 = vector.multi_reduction <add>, %110, %cst_65 [1] : vector<16x32xf32> to vector<16xf32>
    %112 = vector.shape_cast %111 : vector<16xf32> to vector<16x1xf32>
    %cst_66 = arith.constant 3.200000e+01 : f32
    %113 = vector.broadcast %cst_66 : f32 to vector<16x1xf32>
    %114 = arith.divf %112, %113 : vector<16x1xf32>
    %cst_67 = arith.constant 9.99999974E-6 : f32
    %115 = vector.broadcast %cst_67 : f32 to vector<16x1xf32>
    %116 = arith.addf %114, %115 : vector<16x1xf32>
    %117 = math.rsqrt %116 : vector<16x1xf32>
    %118 = vector.broadcast %117 : vector<16x1xf32> to vector<16x32xf32>
    %119 = arith.mulf %109, %118 : vector<16x32xf32>
    %120 = vector.broadcast %26 : vector<1x32xf32> to vector<16x32xf32>
    %121 = arith.mulf %119, %120 : vector<16x32xf32>
    %122 = vector.broadcast %27 : vector<1x32xf32> to vector<16x32xf32>
    %123 = arith.addf %121, %122 : vector<16x32xf32>
    %124 = arith.truncf %123 : vector<16x32xf32> to vector<16x32xbf16>
    %cst_68 = arith.constant dense<0.000000e+00> : vector<16x32xf32>
    %125 = tpu.matmul %124, %28, %cst_68 {dimension_numbers = #tpu.dot_dimension_numbers<[1], [0], [0], [1], [0, 0, 1, 1], [], []>} : vector<16x32xbf16>, vector<32x32xbf16>, vector<16x32xf32> -> vector<16x32xf32>
    %126 = vector.broadcast %29 : vector<1x32xf32> to vector<16x32xf32>
    %127 = arith.addf %125, %126 : vector<16x32xf32>
    %128 = arith.mulf %127, %127 : vector<16x32xf32>
    %129 = arith.mulf %127, %128 : vector<16x32xf32>
    %cst_69 = arith.constant 4.471500e-02 : f32
    %130 = vector.broadcast %cst_69 : f32 to vector<16x32xf32>
    %131 = arith.mulf %130, %129 : vector<16x32xf32>
    %132 = arith.addf %127, %131 : vector<16x32xf32>
    %cst_70 = arith.constant 0.797884583 : f32
    %133 = vector.broadcast %cst_70 : f32 to vector<16x32xf32>
    %134 = arith.mulf %133, %132 : vector<16x32xf32>
    %135 = math.tanh %134 : vector<16x32xf32>
    %cst_71 = arith.constant 1.000000e+00 : f32
    %136 = vector.broadcast %cst_71 : f32 to vector<16x32xf32>
    %137 = arith.addf %136, %135 : vector<16x32xf32>
    %cst_72 = arith.constant 5.000000e-01 : f32
    %138 = vector.broadcast %cst_72 : f32 to vector<16x32xf32>
    %139 = arith.mulf %138, %137 : vector<16x32xf32>
    %140 = arith.mulf %127, %139 : vector<16x32xf32>
    %141 = arith.truncf %140 : vector<16x32xf32> to vector<16x32xbf16>
    %cst_73 = arith.constant dense<0.000000e+00> : vector<16x32xf32>
    %142 = tpu.matmul %141, %30, %cst_73 {dimension_numbers = #tpu.dot_dimension_numbers<[1], [0], [0], [1], [0, 0, 1, 1], [], []>} : vector<16x32xbf16>, vector<32x32xbf16>, vector<16x32xf32> -> vector<16x32xf32>
    %143 = vector.broadcast %31 : vector<1x32xf32> to vector<16x32xf32>
    %144 = arith.addf %142, %143 : vector<16x32xf32>
    %145 = arith.addf %103, %144 : vector<16x32xf32>
    %c0_74 = arith.constant 0 : index
    %c0_75 = arith.constant 0 : index
    %146 = vector.load %arg9[%c0_74, %c0_75] : memref<32x32xbf16, #tpu.memory_space<vmem>>, vector<32x32xbf16>
    %c0_76 = arith.constant 0 : index
    %c0_77 = arith.constant 0 : index
    %147 = vector.load %arg10[%c0_76, %c0_77] : memref<1x32xf32, #tpu.memory_space<vmem>>, vector<1x32xf32>
    %148 = arith.truncf %145 : vector<16x32xf32> to vector<16x32xbf16>
    %cst_78 = arith.constant dense<0.000000e+00> : vector<16x32xf32>
    %149 = tpu.matmul %148, %146, %cst_78 {dimension_numbers = #tpu.dot_dimension_numbers<[1], [0], [0], [1], [0, 0, 1, 1], [], []>} : vector<16x32xbf16>, vector<32x32xbf16>, vector<16x32xf32> -> vector<16x32xf32>
    %150 = vector.broadcast %147 : vector<1x32xf32> to vector<16x32xf32>
    %151 = arith.addf %149, %150 : vector<16x32xf32>
    %c0_79 = arith.constant 0 : index
    %c0_80 = arith.constant 0 : index
    %152 = vector.load %arg60[%c0_79, %c0_80] : memref<16x32xf32, #tpu.memory_space<vmem>>, vector<16x32xf32>
    tpu.vector_store %arg60[%c0_79, %c0_80], %151 {strides = array<i32>} : memref<16x32xf32, #tpu.memory_space<vmem>>, vector<16x32xf32>,
    %c0_81 = arith.constant 0 : index
    %c0_82 = arith.constant 0 : index
    %153 = vector.load %arg5[%c0_81, %c0_82] : memref<16x16xf32, #tpu.memory_space<vmem>>, vector<16x16xf32>
    %c0_83 = arith.constant 0 : index
    %c0_84 = arith.constant 0 : index
    %c0_85 = arith.constant 0 : index
    %154 = vector.load %arg27[%c0_83, %c0_84, %c0_85] : memref<2x1x32xf32, #tpu.memory_space<vmem>>, vector<1x1x32xf32>
    %155 = vector.shape_cast %154 : vector<1x1x32xf32> to vector<1x32xf32>
    %c0_86 = arith.constant 0 : index
    %c0_87 = arith.constant 0 : index
    %c0_88 = arith.constant 0 : index
    %156 = vector.load %arg28[%c0_86, %c0_87, %c0_88] : memref<2x1x32xf32, #tpu.memory_space<vmem>>, vector<1x1x32xf32>
    %157 = vector.shape_cast %156 : vector<1x1x32xf32> to vector<1x32xf32>
    %c0_89 = arith.constant 0 : index
    %c0_90 = arith.constant 0 : index
    %c0_91 = arith.constant 0 : index
    %158 = vector.load %arg29[%c0_89, %c0_90, %c0_91] : memref<2x1x32xf32, #tpu.memory_space<vmem>>, vector<1x1x32xf32>
    %159 = vector.shape_cast %158 : vector<1x1x32xf32> to vector<1x32xf32>
    %c0_92 = arith.constant 0 : index
    %c0_93 = arith.constant 0 : index
    %c0_94 = arith.constant 0 : index
    %160 = vector.load %arg30[%c0_92, %c0_93, %c0_94] : memref<2x1x32xf32, #tpu.memory_space<vmem>>, vector<1x1x32xf32>
    %161 = vector.shape_cast %160 : vector<1x1x32xf32> to vector<1x32xf32>
    %c0_95 = arith.constant 0 : index
    %c0_96 = arith.constant 0 : index
    %c0_97 = arith.constant 0 : index
    %162 = vector.load %arg31[%c0_95, %c0_96, %c0_97] : memref<2x32x32xbf16, #tpu.memory_space<vmem>>, vector<1x32x32xbf16>
    %163 = vector.shape_cast %162 : vector<1x32x32xbf16> to vector<32x32xbf16>
    %c0_98 = arith.constant 0 : index
    %c0_99 = arith.constant 0 : index
    %c0_100 = arith.constant 0 : index
    %164 = vector.load %arg32[%c0_98, %c0_99, %c0_100] : memref<2x1x32xf32, #tpu.memory_space<vmem>>, vector<1x1x32xf32>
    %165 = vector.shape_cast %164 : vector<1x1x32xf32> to vector<1x32xf32>
    %c0_101 = arith.constant 0 : index
    %c0_102 = arith.constant 0 : index
    %c0_103 = arith.constant 0 : index
    %166 = vector.load %arg33[%c0_101, %c0_102, %c0_103] : memref<2x32x64xbf16, #tpu.memory_space<vmem>>, vector<1x32x64xbf16>
    %167 = vector.shape_cast %166 : vector<1x32x64xbf16> to vector<32x64xbf16>
    %c0_104 = arith.constant 0 : index
    %c0_105 = arith.constant 0 : index
    %c0_106 = arith.constant 0 : index
    %168 = vector.load %arg34[%c0_104, %c0_105, %c0_106] : memref<2x1x64xf32, #tpu.memory_space<vmem>>, vector<1x1x64xf32>
    %169 = vector.shape_cast %168 : vector<1x1x64xf32> to vector<1x64xf32>
    %c0_107 = arith.constant 0 : index
    %c0_108 = arith.constant 0 : index
    %c0_109 = arith.constant 0 : index
    %170 = vector.load %arg35[%c0_107, %c0_108, %c0_109] : memref<2x32x32xbf16, #tpu.memory_space<vmem>>, vector<1x32x32xbf16>
    %171 = vector.shape_cast %170 : vector<1x32x32xbf16> to vector<32x32xbf16>
    %c0_110 = arith.constant 0 : index
    %c0_111 = arith.constant 0 : index
    %c0_112 = arith.constant 0 : index
    %172 = vector.load %arg36[%c0_110, %c0_111, %c0_112] : memref<2x1x32xf32, #tpu.memory_space<vmem>>, vector<1x1x32xf32>
    %173 = vector.shape_cast %172 : vector<1x1x32xf32> to vector<1x32xf32>
    %c0_113 = arith.constant 0 : index
    %c0_114 = arith.constant 0 : index
    %c0_115 = arith.constant 0 : index
    %174 = vector.load %arg37[%c0_113, %c0_114, %c0_115] : memref<2x1x32xf32, #tpu.memory_space<vmem>>, vector<1x1x32xf32>
    %175 = vector.shape_cast %174 : vector<1x1x32xf32> to vector<1x32xf32>
    %c0_116 = arith.constant 0 : index
    %c0_117 = arith.constant 0 : index
    %c0_118 = arith.constant 0 : index
    %176 = vector.load %arg38[%c0_116, %c0_117, %c0_118] : memref<2x1x32xf32, #tpu.memory_space<vmem>>, vector<1x1x32xf32>
    %177 = vector.shape_cast %176 : vector<1x1x32xf32> to vector<1x32xf32>
    %c0_119 = arith.constant 0 : index
    %c0_120 = arith.constant 0 : index
    %c0_121 = arith.constant 0 : index
    %178 = vector.load %arg39[%c0_119, %c0_120, %c0_121] : memref<2x32x32xbf16, #tpu.memory_space<vmem>>, vector<1x32x32xbf16>
    %179 = vector.shape_cast %178 : vector<1x32x32xbf16> to vector<32x32xbf16>
    %c0_122 = arith.constant 0 : index
    %c0_123 = arith.constant 0 : index
    %c0_124 = arith.constant 0 : index
    %180 = vector.load %arg40[%c0_122, %c0_123, %c0_124] : memref<2x1x32xf32, #tpu.memory_space<vmem>>, vector<1x1x32xf32>
    %181 = vector.shape_cast %180 : vector<1x1x32xf32> to vector<1x32xf32>
    %c0_125 = arith.constant 0 : index
    %c0_126 = arith.constant 0 : index
    %c0_127 = arith.constant 0 : index
    %182 = vector.load %arg41[%c0_125, %c0_126, %c0_127] : memref<2x32x32xbf16, #tpu.memory_space<vmem>>, vector<1x32x32xbf16>
    %183 = vector.shape_cast %182 : vector<1x32x32xbf16> to vector<32x32xbf16>
    %c0_128 = arith.constant 0 : index
    %c0_129 = arith.constant 0 : index
    %c0_130 = arith.constant 0 : index
    %184 = vector.load %arg42[%c0_128, %c0_129, %c0_130] : memref<2x1x32xf32, #tpu.memory_space<vmem>>, vector<1x1x32xf32>
    %185 = vector.shape_cast %184 : vector<1x1x32xf32> to vector<1x32xf32>
    %cst_131 = arith.constant dense<0.000000e+00> : vector<16xf32>
    %186 = vector.multi_reduction <add>, %145, %cst_131 [1] : vector<16x32xf32> to vector<16xf32>
    %187 = vector.shape_cast %186 : vector<16xf32> to vector<16x1xf32>
    %cst_132 = arith.constant 3.200000e+01 : f32
    %188 = vector.broadcast %cst_132 : f32 to vector<16x1xf32>
    %189 = arith.divf %187, %188 : vector<16x1xf32>
    %190 = vector.broadcast %189 : vector<16x1xf32> to vector<16x32xf32>
    %191 = arith.subf %145, %190 : vector<16x32xf32>
    %192 = arith.mulf %191, %191 : vector<16x32xf32>
    %cst_133 = arith.constant dense<0.000000e+00> : vector<16xf32>
    %193 = vector.multi_reduction <add>, %192, %cst_133 [1] : vector<16x32xf32> to vector<16xf32>
    %194 = vector.shape_cast %193 : vector<16xf32> to vector<16x1xf32>
    %cst_134 = arith.constant 3.200000e+01 : f32
    %195 = vector.broadcast %cst_134 : f32 to vector<16x1xf32>
    %196 = arith.divf %194, %195 : vector<16x1xf32>
    %cst_135 = arith.constant 9.99999974E-6 : f32
    %197 = vector.broadcast %cst_135 : f32 to vector<16x1xf32>
    %198 = arith.addf %196, %197 : vector<16x1xf32>
    %199 = math.rsqrt %198 : vector<16x1xf32>
    %200 = vector.broadcast %199 : vector<16x1xf32> to vector<16x32xf32>
    %201 = arith.mulf %191, %200 : vector<16x32xf32>
    %202 = vector.broadcast %155 : vector<1x32xf32> to vector<16x32xf32>
    %203 = arith.mulf %201, %202 : vector<16x32xf32>
    %204 = vector.broadcast %157 : vector<1x32xf32> to vector<16x32xf32>
    %205 = arith.addf %203, %204 : vector<16x32xf32>
    %206 = arith.truncf %205 : vector<16x32xf32> to vector<16x32xbf16>
    %cst_136 = arith.constant dense<0.000000e+00> : vector<16x32xf32>
    %207 = tpu.matmul %206, %163, %cst_136 {dimension_numbers = #tpu.dot_dimension_numbers<[1], [0], [0], [1], [0, 0, 1, 1], [], []>} : vector<16x32xbf16>, vector<32x32xbf16>, vector<16x32xf32> -> vector<16x32xf32>
    %208 = vector.broadcast %165 : vector<1x32xf32> to vector<16x32xf32>
    %209 = arith.addf %207, %208 : vector<16x32xf32>
    %cst_137 = arith.constant dense<0.000000e+00> : vector<16xf32>
    %210 = vector.multi_reduction <add>, %145, %cst_137 [1] : vector<16x32xf32> to vector<16xf32>
    %211 = vector.shape_cast %210 : vector<16xf32> to vector<16x1xf32>
    %cst_138 = arith.constant 3.200000e+01 : f32
    %212 = vector.broadcast %cst_138 : f32 to vector<16x1xf32>
    %213 = arith.divf %211, %212 : vector<16x1xf32>
    %214 = vector.broadcast %213 : vector<16x1xf32> to vector<16x32xf32>
    %215 = arith.subf %145, %214 : vector<16x32xf32>
    %216 = arith.mulf %215, %215 : vector<16x32xf32>
    %cst_139 = arith.constant dense<0.000000e+00> : vector<16xf32>
    %217 = vector.multi_reduction <add>, %216, %cst_139 [1] : vector<16x32xf32> to vector<16xf32>
    %218 = vector.shape_cast %217 : vector<16xf32> to vector<16x1xf32>
    %cst_140 = arith.constant 3.200000e+01 : f32
    %219 = vector.broadcast %cst_140 : f32 to vector<16x1xf32>
    %220 = arith.divf %218, %219 : vector<16x1xf32>
    %cst_141 = arith.constant 9.99999974E-6 : f32
    %221 = vector.broadcast %cst_141 : f32 to vector<16x1xf32>
    %222 = arith.addf %220, %221 : vector<16x1xf32>
    %223 = math.rsqrt %222 : vector<16x1xf32>
    %224 = vector.broadcast %223 : vector<16x1xf32> to vector<16x32xf32>
    %225 = arith.mulf %215, %224 : vector<16x32xf32>
    %226 = vector.broadcast %159 : vector<1x32xf32> to vector<16x32xf32>
    %227 = arith.mulf %225, %226 : vector<16x32xf32>
    %228 = vector.broadcast %161 : vector<1x32xf32> to vector<16x32xf32>
    %229 = arith.addf %227, %228 : vector<16x32xf32>
    %230 = arith.truncf %229 : vector<16x32xf32> to vector<16x32xbf16>
    %cst_142 = arith.constant dense<0.000000e+00> : vector<16x64xf32>
    %231 = tpu.matmul %230, %167, %cst_142 {dimension_numbers = #tpu.dot_dimension_numbers<[1], [0], [0], [1], [0, 0, 1, 1], [], []>} : vector<16x32xbf16>, vector<32x64xbf16>, vector<16x64xf32> -> vector<16x64xf32>
    %232 = vector.broadcast %169 : vector<1x64xf32> to vector<16x64xf32>
    %233 = arith.addf %231, %232 : vector<16x64xf32>
    %234 = vector.extract_strided_slice %233 {offsets = [0, 0], sizes = [16, 32], strides = [1, 1]} : vector<16x64xf32> to vector<16x32xf32>
    %235 = vector.extract_strided_slice %233 {offsets = [0, 32], sizes = [16, 32], strides = [1, 1]} : vector<16x64xf32> to vector<16x32xf32>
    %236 = arith.truncf %209 : vector<16x32xf32> to vector<16x32xbf16>
    %237 = arith.truncf %234 : vector<16x32xf32> to vector<16x32xbf16>
    %cst_143 = arith.constant dense<0.000000e+00> : vector<16x16xf32>
    %238 = tpu.matmul %236, %237, %cst_143 {dimension_numbers = #tpu.dot_dimension_numbers<[1], [1], [0], [0], [0, 0, 1, 0], [], []>} : vector<16x32xbf16>, vector<16x32xbf16>, vector<16x16xf32> -> vector<16x16xf32>
    %239 = arith.addf %238, %153 : vector<16x16xf32>
    %cst_144 = arith.constant dense<0xFF800000> : vector<16xf32>
    %240 = vector.multi_reduction <maximumf>, %239, %cst_144 [1] : vector<16x16xf32> to vector<16xf32>
    %241 = vector.shape_cast %240 : vector<16xf32> to vector<16x1xf32>
    %242 = vector.broadcast %241 : vector<16x1xf32> to vector<16x16xf32>
    %243 = arith.subf %239, %242 : vector<16x16xf32>
    %244 = math.exp %243 : vector<16x16xf32>
    %cst_145 = arith.constant dense<0.000000e+00> : vector<16xf32>
    %245 = vector.multi_reduction <add>, %244, %cst_145 [1] : vector<16x16xf32> to vector<16xf32>
    %246 = vector.shape_cast %245 : vector<16xf32> to vector<16x1xf32>
    %247 = arith.truncf %244 : vector<16x16xf32> to vector<16x16xbf16>
    %248 = arith.truncf %235 : vector<16x32xf32> to vector<16x32xbf16>
    %cst_146 = arith.constant dense<0.000000e+00> : vector<16x32xf32>
    %249 = tpu.matmul %247, %248, %cst_146 {dimension_numbers = #tpu.dot_dimension_numbers<[1], [0], [0], [1], [0, 0, 1, 1], [], []>} : vector<16x16xbf16>, vector<16x32xbf16>, vector<16x32xf32> -> vector<16x32xf32>
    %250 = tpu.reciprocal %246 {approx = true} : vector<16x1xf32> -> vector<16x1xf32>
    %251 = vector.broadcast %250 : vector<16x1xf32> to vector<16x32xf32>
    %252 = arith.mulf %249, %251 : vector<16x32xf32>
    %253 = arith.truncf %252 : vector<16x32xf32> to vector<16x32xbf16>
    %cst_147 = arith.constant dense<0.000000e+00> : vector<16x32xf32>
    %254 = tpu.matmul %253, %171, %cst_147 {dimension_numbers = #tpu.dot_dimension_numbers<[1], [0], [0], [1], [0, 0, 1, 1], [], []>} : vector<16x32xbf16>, vector<32x32xbf16>, vector<16x32xf32> -> vector<16x32xf32>
    %255 = vector.broadcast %173 : vector<1x32xf32> to vector<16x32xf32>
    %256 = arith.addf %254, %255 : vector<16x32xf32>
    %257 = arith.addf %145, %256 : vector<16x32xf32>
    %cst_148 = arith.constant dense<0.000000e+00> : vector<16xf32>
    %258 = vector.multi_reduction <add>, %257, %cst_148 [1] : vector<16x32xf32> to vector<16xf32>
    %259 = vector.shape_cast %258 : vector<16xf32> to vector<16x1xf32>
    %cst_149 = arith.constant 3.200000e+01 : f32
    %260 = vector.broadcast %cst_149 : f32 to vector<16x1xf32>
    %261 = arith.divf %259, %260 : vector<16x1xf32>
    %262 = vector.broadcast %261 : vector<16x1xf32> to vector<16x32xf32>
    %263 = arith.subf %257, %262 : vector<16x32xf32>
    %264 = arith.mulf %263, %263 : vector<16x32xf32>
    %cst_150 = arith.constant dense<0.000000e+00> : vector<16xf32>
    %265 = vector.multi_reduction <add>, %264, %cst_150 [1] : vector<16x32xf32> to vector<16xf32>
    %266 = vector.shape_cast %265 : vector<16xf32> to vector<16x1xf32>
    %cst_151 = arith.constant 3.200000e+01 : f32
    %267 = vector.broadcast %cst_151 : f32 to vector<16x1xf32>
    %268 = arith.divf %266, %267 : vector<16x1xf32>
    %cst_152 = arith.constant 9.99999974E-6 : f32
    %269 = vector.broadcast %cst_152 : f32 to vector<16x1xf32>
    %270 = arith.addf %268, %269 : vector<16x1xf32>
    %271 = math.rsqrt %270 : vector<16x1xf32>
    %272 = vector.broadcast %271 : vector<16x1xf32> to vector<16x32xf32>
    %273 = arith.mulf %263, %272 : vector<16x32xf32>
    %274 = vector.broadcast %175 : vector<1x32xf32> to vector<16x32xf32>
    %275 = arith.mulf %273, %274 : vector<16x32xf32>
    %276 = vector.broadcast %177 : vector<1x32xf32> to vector<16x32xf32>
    %277 = arith.addf %275, %276 : vector<16x32xf32>
    %278 = arith.truncf %277 : vector<16x32xf32> to vector<16x32xbf16>
    %cst_153 = arith.constant dense<0.000000e+00> : vector<16x32xf32>
    %279 = tpu.matmul %278, %179, %cst_153 {dimension_numbers = #tpu.dot_dimension_numbers<[1], [0], [0], [1], [0, 0, 1, 1], [], []>} : vector<16x32xbf16>, vector<32x32xbf16>, vector<16x32xf32> -> vector<16x32xf32>
    %280 = vector.broadcast %181 : vector<1x32xf32> to vector<16x32xf32>
    %281 = arith.addf %279, %280 : vector<16x32xf32>
    %282 = arith.mulf %281, %281 : vector<16x32xf32>
    %283 = arith.mulf %281, %282 : vector<16x32xf32>
    %cst_154 = arith.constant 4.471500e-02 : f32
    %284 = vector.broadcast %cst_154 : f32 to vector<16x32xf32>
    %285 = arith.mulf %284, %283 : vector<16x32xf32>
    %286 = arith.addf %281, %285 : vector<16x32xf32>
    %cst_155 = arith.constant 0.797884583 : f32
    %287 = vector.broadcast %cst_155 : f32 to vector<16x32xf32>
    %288 = arith.mulf %287, %286 : vector<16x32xf32>
    %289 = math.tanh %288 : vector<16x32xf32>
    %cst_156 = arith.constant 1.000000e+00 : f32
    %290 = vector.broadcast %cst_156 : f32 to vector<16x32xf32>
    %291 = arith.addf %290, %289 : vector<16x32xf32>
    %cst_157 = arith.constant 5.000000e-01 : f32
    %292 = vector.broadcast %cst_157 : f32 to vector<16x32xf32>
    %293 = arith.mulf %292, %291 : vector<16x32xf32>
    %294 = arith.mulf %281, %293 : vector<16x32xf32>
    %295 = arith.truncf %294 : vector<16x32xf32> to vector<16x32xbf16>
    %cst_158 = arith.constant dense<0.000000e+00> : vector<16x32xf32>
    %296 = tpu.matmul %295, %183, %cst_158 {dimension_numbers = #tpu.dot_dimension_numbers<[1], [0], [0], [1], [0, 0, 1, 1], [], []>} : vector<16x32xbf16>, vector<32x32xbf16>, vector<16x32xf32> -> vector<16x32xf32>
    %297 = vector.broadcast %185 : vector<1x32xf32> to vector<16x32xf32>
    %298 = arith.addf %296, %297 : vector<16x32xf32>
    %299 = arith.addf %257, %298 : vector<16x32xf32>
    %c1 = arith.constant 1 : index
    %c0_159 = arith.constant 0 : index
    %c0_160 = arith.constant 0 : index
    %300 = vector.load %arg27[%c1, %c0_159, %c0_160] : memref<2x1x32xf32, #tpu.memory_space<vmem>>, vector<1x1x32xf32>
    %301 = vector.shape_cast %300 : vector<1x1x32xf32> to vector<1x32xf32>
    %c1_161 = arith.constant 1 : index
    %c0_162 = arith.constant 0 : index
    %c0_163 = arith.constant 0 : index
    %302 = vector.load %arg28[%c1_161, %c0_162, %c0_163] : memref<2x1x32xf32, #tpu.memory_space<vmem>>, vector<1x1x32xf32>
    %303 = vector.shape_cast %302 : vector<1x1x32xf32> to vector<1x32xf32>
    %c1_164 = arith.constant 1 : index
    %c0_165 = arith.constant 0 : index
    %c0_166 = arith.constant 0 : index
    %304 = vector.load %arg29[%c1_164, %c0_165, %c0_166] : memref<2x1x32xf32, #tpu.memory_space<vmem>>, vector<1x1x32xf32>
    %305 = vector.shape_cast %304 : vector<1x1x32xf32> to vector<1x32xf32>
    %c1_167 = arith.constant 1 : index
    %c0_168 = arith.constant 0 : index
    %c0_169 = arith.constant 0 : index
    %306 = vector.load %arg30[%c1_167, %c0_168, %c0_169] : memref<2x1x32xf32, #tpu.memory_space<vmem>>, vector<1x1x32xf32>
    %307 = vector.shape_cast %306 : vector<1x1x32xf32> to vector<1x32xf32>
    %c1_170 = arith.constant 1 : index
    %c0_171 = arith.constant 0 : index
    %c0_172 = arith.constant 0 : index
    %308 = vector.load %arg31[%c1_170, %c0_171, %c0_172] : memref<2x32x32xbf16, #tpu.memory_space<vmem>>, vector<1x32x32xbf16>
    %309 = vector.shape_cast %308 : vector<1x32x32xbf16> to vector<32x32xbf16>
    %c1_173 = arith.constant 1 : index
    %c0_174 = arith.constant 0 : index
    %c0_175 = arith.constant 0 : index
    %310 = vector.load %arg32[%c1_173, %c0_174, %c0_175] : memref<2x1x32xf32, #tpu.memory_space<vmem>>, vector<1x1x32xf32>
    %311 = vector.shape_cast %310 : vector<1x1x32xf32> to vector<1x32xf32>
    %c1_176 = arith.constant 1 : index
    %c0_177 = arith.constant 0 : index
    %c0_178 = arith.constant 0 : index
    %312 = vector.load %arg33[%c1_176, %c0_177, %c0_178] : memref<2x32x64xbf16, #tpu.memory_space<vmem>>, vector<1x32x64xbf16>
    %313 = vector.shape_cast %312 : vector<1x32x64xbf16> to vector<32x64xbf16>
    %c1_179 = arith.constant 1 : index
    %c0_180 = arith.constant 0 : index
    %c0_181 = arith.constant 0 : index
    %314 = vector.load %arg34[%c1_179, %c0_180, %c0_181] : memref<2x1x64xf32, #tpu.memory_space<vmem>>, vector<1x1x64xf32>
    %315 = vector.shape_cast %314 : vector<1x1x64xf32> to vector<1x64xf32>
    %c1_182 = arith.constant 1 : index
    %c0_183 = arith.constant 0 : index
    %c0_184 = arith.constant 0 : index
    %316 = vector.load %arg35[%c1_182, %c0_183, %c0_184] : memref<2x32x32xbf16, #tpu.memory_space<vmem>>, vector<1x32x32xbf16>
    %317 = vector.shape_cast %316 : vector<1x32x32xbf16> to vector<32x32xbf16>
    %c1_185 = arith.constant 1 : index
    %c0_186 = arith.constant 0 : index
    %c0_187 = arith.constant 0 : index
    %318 = vector.load %arg36[%c1_185, %c0_186, %c0_187] : memref<2x1x32xf32, #tpu.memory_space<vmem>>, vector<1x1x32xf32>
    %319 = vector.shape_cast %318 : vector<1x1x32xf32> to vector<1x32xf32>
    %c1_188 = arith.constant 1 : index
    %c0_189 = arith.constant 0 : index
    %c0_190 = arith.constant 0 : index
    %320 = vector.load %arg37[%c1_188, %c0_189, %c0_190] : memref<2x1x32xf32, #tpu.memory_space<vmem>>, vector<1x1x32xf32>
    %321 = vector.shape_cast %320 : vector<1x1x32xf32> to vector<1x32xf32>
    %c1_191 = arith.constant 1 : index
    %c0_192 = arith.constant 0 : index
    %c0_193 = arith.constant 0 : index
    %322 = vector.load %arg38[%c1_191, %c0_192, %c0_193] : memref<2x1x32xf32, #tpu.memory_space<vmem>>, vector<1x1x32xf32>
    %323 = vector.shape_cast %322 : vector<1x1x32xf32> to vector<1x32xf32>
    %c1_194 = arith.constant 1 : index
    %c0_195 = arith.constant 0 : index
    %c0_196 = arith.constant 0 : index
    %324 = vector.load %arg39[%c1_194, %c0_195, %c0_196] : memref<2x32x32xbf16, #tpu.memory_space<vmem>>, vector<1x32x32xbf16>
    %325 = vector.shape_cast %324 : vector<1x32x32xbf16> to vector<32x32xbf16>
    %c1_197 = arith.constant 1 : index
    %c0_198 = arith.constant 0 : index
    %c0_199 = arith.constant 0 : index
    %326 = vector.load %arg40[%c1_197, %c0_198, %c0_199] : memref<2x1x32xf32, #tpu.memory_space<vmem>>, vector<1x1x32xf32>
    %327 = vector.shape_cast %326 : vector<1x1x32xf32> to vector<1x32xf32>
    %c1_200 = arith.constant 1 : index
    %c0_201 = arith.constant 0 : index
    %c0_202 = arith.constant 0 : index
    %328 = vector.load %arg41[%c1_200, %c0_201, %c0_202] : memref<2x32x32xbf16, #tpu.memory_space<vmem>>, vector<1x32x32xbf16>
    %329 = vector.shape_cast %328 : vector<1x32x32xbf16> to vector<32x32xbf16>
    %c1_203 = arith.constant 1 : index
    %c0_204 = arith.constant 0 : index
    %c0_205 = arith.constant 0 : index
    %330 = vector.load %arg42[%c1_203, %c0_204, %c0_205] : memref<2x1x32xf32, #tpu.memory_space<vmem>>, vector<1x1x32xf32>
    %331 = vector.shape_cast %330 : vector<1x1x32xf32> to vector<1x32xf32>
    %cst_206 = arith.constant dense<0.000000e+00> : vector<16xf32>
    %332 = vector.multi_reduction <add>, %299, %cst_206 [1] : vector<16x32xf32> to vector<16xf32>
    %333 = vector.shape_cast %332 : vector<16xf32> to vector<16x1xf32>
    %cst_207 = arith.constant 3.200000e+01 : f32
    %334 = vector.broadcast %cst_207 : f32 to vector<16x1xf32>
    %335 = arith.divf %333, %334 : vector<16x1xf32>
    %336 = vector.broadcast %335 : vector<16x1xf32> to vector<16x32xf32>
    %337 = arith.subf %299, %336 : vector<16x32xf32>
    %338 = arith.mulf %337, %337 : vector<16x32xf32>
    %cst_208 = arith.constant dense<0.000000e+00> : vector<16xf32>
    %339 = vector.multi_reduction <add>, %338, %cst_208 [1] : vector<16x32xf32> to vector<16xf32>
    %340 = vector.shape_cast %339 : vector<16xf32> to vector<16x1xf32>
    %cst_209 = arith.constant 3.200000e+01 : f32
    %341 = vector.broadcast %cst_209 : f32 to vector<16x1xf32>
    %342 = arith.divf %340, %341 : vector<16x1xf32>
    %cst_210 = arith.constant 9.99999974E-6 : f32
    %343 = vector.broadcast %cst_210 : f32 to vector<16x1xf32>
    %344 = arith.addf %342, %343 : vector<16x1xf32>
    %345 = math.rsqrt %344 : vector<16x1xf32>
    %346 = vector.broadcast %345 : vector<16x1xf32> to vector<16x32xf32>
    %347 = arith.mulf %337, %346 : vector<16x32xf32>
    %348 = vector.broadcast %301 : vector<1x32xf32> to vector<16x32xf32>
    %349 = arith.mulf %347, %348 : vector<16x32xf32>
    %350 = vector.broadcast %303 : vector<1x32xf32> to vector<16x32xf32>
    %351 = arith.addf %349, %350 : vector<16x32xf32>
    %352 = arith.truncf %351 : vector<16x32xf32> to vector<16x32xbf16>
    %cst_211 = arith.constant dense<0.000000e+00> : vector<16x32xf32>
    %353 = tpu.matmul %352, %309, %cst_211 {dimension_numbers = #tpu.dot_dimension_numbers<[1], [0], [0], [1], [0, 0, 1, 1], [], []>} : vector<16x32xbf16>, vector<32x32xbf16>, vector<16x32xf32> -> vector<16x32xf32>
    %354 = vector.broadcast %311 : vector<1x32xf32> to vector<16x32xf32>
    %355 = arith.addf %353, %354 : vector<16x32xf32>
    %cst_212 = arith.constant dense<0.000000e+00> : vector<16xf32>
    %356 = vector.multi_reduction <add>, %299, %cst_212 [1] : vector<16x32xf32> to vector<16xf32>
    %357 = vector.shape_cast %356 : vector<16xf32> to vector<16x1xf32>
    %cst_213 = arith.constant 3.200000e+01 : f32
    %358 = vector.broadcast %cst_213 : f32 to vector<16x1xf32>
    %359 = arith.divf %357, %358 : vector<16x1xf32>
    %360 = vector.broadcast %359 : vector<16x1xf32> to vector<16x32xf32>
    %361 = arith.subf %299, %360 : vector<16x32xf32>
    %362 = arith.mulf %361, %361 : vector<16x32xf32>
    %cst_214 = arith.constant dense<0.000000e+00> : vector<16xf32>
    %363 = vector.multi_reduction <add>, %362, %cst_214 [1] : vector<16x32xf32> to vector<16xf32>
    %364 = vector.shape_cast %363 : vector<16xf32> to vector<16x1xf32>
    %cst_215 = arith.constant 3.200000e+01 : f32
    %365 = vector.broadcast %cst_215 : f32 to vector<16x1xf32>
    %366 = arith.divf %364, %365 : vector<16x1xf32>
    %cst_216 = arith.constant 9.99999974E-6 : f32
    %367 = vector.broadcast %cst_216 : f32 to vector<16x1xf32>
    %368 = arith.addf %366, %367 : vector<16x1xf32>
    %369 = math.rsqrt %368 : vector<16x1xf32>
    %370 = vector.broadcast %369 : vector<16x1xf32> to vector<16x32xf32>
    %371 = arith.mulf %361, %370 : vector<16x32xf32>
    %372 = vector.broadcast %305 : vector<1x32xf32> to vector<16x32xf32>
    %373 = arith.mulf %371, %372 : vector<16x32xf32>
    %374 = vector.broadcast %307 : vector<1x32xf32> to vector<16x32xf32>
    %375 = arith.addf %373, %374 : vector<16x32xf32>
    %376 = arith.truncf %375 : vector<16x32xf32> to vector<16x32xbf16>
    %cst_217 = arith.constant dense<0.000000e+00> : vector<16x64xf32>
    %377 = tpu.matmul %376, %313, %cst_217 {dimension_numbers = #tpu.dot_dimension_numbers<[1], [0], [0], [1], [0, 0, 1, 1], [], []>} : vector<16x32xbf16>, vector<32x64xbf16>, vector<16x64xf32> -> vector<16x64xf32>
    %378 = vector.broadcast %315 : vector<1x64xf32> to vector<16x64xf32>
    %379 = arith.addf %377, %378 : vector<16x64xf32>
    %380 = vector.extract_strided_slice %379 {offsets = [0, 0], sizes = [16, 32], strides = [1, 1]} : vector<16x64xf32> to vector<16x32xf32>
    %381 = vector.extract_strided_slice %379 {offsets = [0, 32], sizes = [16, 32], strides = [1, 1]} : vector<16x64xf32> to vector<16x32xf32>
    %382 = arith.truncf %355 : vector<16x32xf32> to vector<16x32xbf16>
    %383 = arith.truncf %380 : vector<16x32xf32> to vector<16x32xbf16>
    %cst_218 = arith.constant dense<0.000000e+00> : vector<16x16xf32>
    %384 = tpu.matmul %382, %383, %cst_218 {dimension_numbers = #tpu.dot_dimension_numbers<[1], [1], [0], [0], [0, 0, 1, 0], [], []>} : vector<16x32xbf16>, vector<16x32xbf16>, vector<16x16xf32> -> vector<16x16xf32>
    %385 = arith.addf %384, %153 : vector<16x16xf32>
    %cst_219 = arith.constant dense<0xFF800000> : vector<16xf32>
    %386 = vector.multi_reduction <maximumf>, %385, %cst_219 [1] : vector<16x16xf32> to vector<16xf32>
    %387 = vector.shape_cast %386 : vector<16xf32> to vector<16x1xf32>
    %388 = vector.broadcast %387 : vector<16x1xf32> to vector<16x16xf32>
    %389 = arith.subf %385, %388 : vector<16x16xf32>
    %390 = math.exp %389 : vector<16x16xf32>
    %cst_220 = arith.constant dense<0.000000e+00> : vector<16xf32>
    %391 = vector.multi_reduction <add>, %390, %cst_220 [1] : vector<16x16xf32> to vector<16xf32>
    %392 = vector.shape_cast %391 : vector<16xf32> to vector<16x1xf32>
    %393 = arith.truncf %390 : vector<16x16xf32> to vector<16x16xbf16>
    %394 = arith.truncf %381 : vector<16x32xf32> to vector<16x32xbf16>
    %cst_221 = arith.constant dense<0.000000e+00> : vector<16x32xf32>
    %395 = tpu.matmul %393, %394, %cst_221 {dimension_numbers = #tpu.dot_dimension_numbers<[1], [0], [0], [1], [0, 0, 1, 1], [], []>} : vector<16x16xbf16>, vector<16x32xbf16>, vector<16x32xf32> -> vector<16x32xf32>
    %396 = tpu.reciprocal %392 {approx = true} : vector<16x1xf32> -> vector<16x1xf32>
    %397 = vector.broadcast %396 : vector<16x1xf32> to vector<16x32xf32>
    %398 = arith.mulf %395, %397 : vector<16x32xf32>
    %399 = arith.truncf %398 : vector<16x32xf32> to vector<16x32xbf16>
    %cst_222 = arith.constant dense<0.000000e+00> : vector<16x32xf32>
    %400 = tpu.matmul %399, %317, %cst_222 {dimension_numbers = #tpu.dot_dimension_numbers<[1], [0], [0], [1], [0, 0, 1, 1], [], []>} : vector<16x32xbf16>, vector<32x32xbf16>, vector<16x32xf32> -> vector<16x32xf32>
    %401 = vector.broadcast %319 : vector<1x32xf32> to vector<16x32xf32>
    %402 = arith.addf %400, %401 : vector<16x32xf32>
    %403 = arith.addf %299, %402 : vector<16x32xf32>
    %cst_223 = arith.constant dense<0.000000e+00> : vector<16xf32>
    %404 = vector.multi_reduction <add>, %403, %cst_223 [1] : vector<16x32xf32> to vector<16xf32>
    %405 = vector.shape_cast %404 : vector<16xf32> to vector<16x1xf32>
    %cst_224 = arith.constant 3.200000e+01 : f32
    %406 = vector.broadcast %cst_224 : f32 to vector<16x1xf32>
    %407 = arith.divf %405, %406 : vector<16x1xf32>
    %408 = vector.broadcast %407 : vector<16x1xf32> to vector<16x32xf32>
    %409 = arith.subf %403, %408 : vector<16x32xf32>
    %410 = arith.mulf %409, %409 : vector<16x32xf32>
    %cst_225 = arith.constant dense<0.000000e+00> : vector<16xf32>
    %411 = vector.multi_reduction <add>, %410, %cst_225 [1] : vector<16x32xf32> to vector<16xf32>
    %412 = vector.shape_cast %411 : vector<16xf32> to vector<16x1xf32>
    %cst_226 = arith.constant 3.200000e+01 : f32
    %413 = vector.broadcast %cst_226 : f32 to vector<16x1xf32>
    %414 = arith.divf %412, %413 : vector<16x1xf32>
    %cst_227 = arith.constant 9.99999974E-6 : f32
    %415 = vector.broadcast %cst_227 : f32 to vector<16x1xf32>
    %416 = arith.addf %414, %415 : vector<16x1xf32>
    %417 = math.rsqrt %416 : vector<16x1xf32>
    %418 = vector.broadcast %417 : vector<16x1xf32> to vector<16x32xf32>
    %419 = arith.mulf %409, %418 : vector<16x32xf32>
    %420 = vector.broadcast %321 : vector<1x32xf32> to vector<16x32xf32>
    %421 = arith.mulf %419, %420 : vector<16x32xf32>
    %422 = vector.broadcast %323 : vector<1x32xf32> to vector<16x32xf32>
    %423 = arith.addf %421, %422 : vector<16x32xf32>
    %424 = arith.truncf %423 : vector<16x32xf32> to vector<16x32xbf16>
    %cst_228 = arith.constant dense<0.000000e+00> : vector<16x32xf32>
    %425 = tpu.matmul %424, %325, %cst_228 {dimension_numbers = #tpu.dot_dimension_numbers<[1], [0], [0], [1], [0, 0, 1, 1], [], []>} : vector<16x32xbf16>, vector<32x32xbf16>, vector<16x32xf32> -> vector<16x32xf32>
    %426 = vector.broadcast %327 : vector<1x32xf32> to vector<16x32xf32>
    %427 = arith.addf %425, %426 : vector<16x32xf32>
    %428 = arith.mulf %427, %427 : vector<16x32xf32>
    %429 = arith.mulf %427, %428 : vector<16x32xf32>
    %cst_229 = arith.constant 4.471500e-02 : f32
    %430 = vector.broadcast %cst_229 : f32 to vector<16x32xf32>
    %431 = arith.mulf %430, %429 : vector<16x32xf32>
    %432 = arith.addf %427, %431 : vector<16x32xf32>
    %cst_230 = arith.constant 0.797884583 : f32
    %433 = vector.broadcast %cst_230 : f32 to vector<16x32xf32>
    %434 = arith.mulf %433, %432 : vector<16x32xf32>
    %435 = math.tanh %434 : vector<16x32xf32>
    %cst_231 = arith.constant 1.000000e+00 : f32
    %436 = vector.broadcast %cst_231 : f32 to vector<16x32xf32>
    %437 = arith.addf %436, %435 : vector<16x32xf32>
    %cst_232 = arith.constant 5.000000e-01 : f32
    %438 = vector.broadcast %cst_232 : f32 to vector<16x32xf32>
    %439 = arith.mulf %438, %437 : vector<16x32xf32>
    %440 = arith.mulf %427, %439 : vector<16x32xf32>
    %441 = arith.truncf %440 : vector<16x32xf32> to vector<16x32xbf16>
    %cst_233 = arith.constant dense<0.000000e+00> : vector<16x32xf32>
    %442 = tpu.matmul %441, %329, %cst_233 {dimension_numbers = #tpu.dot_dimension_numbers<[1], [0], [0], [1], [0, 0, 1, 1], [], []>} : vector<16x32xbf16>, vector<32x32xbf16>, vector<16x32xf32> -> vector<16x32xf32>
    %443 = vector.broadcast %331 : vector<1x32xf32> to vector<16x32xf32>
    %444 = arith.addf %442, %443 : vector<16x32xf32>
    %445 = arith.addf %403, %444 : vector<16x32xf32>
    %c0_234 = arith.constant 0 : index
    %c0_235 = arith.constant 0 : index
    %446 = vector.load %arg6[%c0_234, %c0_235] : memref<24x16xf32, #tpu.memory_space<vmem>>, vector<24x16xf32>
    %c0_236 = arith.constant 0 : index
    %c0_237 = arith.constant 0 : index
    %447 = vector.load %arg43[%c0_236, %c0_237] : memref<1x32xf32, #tpu.memory_space<vmem>>, vector<1x32xf32>
    %c0_238 = arith.constant 0 : index
    %c0_239 = arith.constant 0 : index
    %448 = vector.load %arg44[%c0_238, %c0_239] : memref<1x32xf32, #tpu.memory_space<vmem>>, vector<1x32xf32>
    %c0_240 = arith.constant 0 : index
    %c0_241 = arith.constant 0 : index
    %449 = vector.load %arg45[%c0_240, %c0_241] : memref<1x32xf32, #tpu.memory_space<vmem>>, vector<1x32xf32>
    %c0_242 = arith.constant 0 : index
    %c0_243 = arith.constant 0 : index
    %450 = vector.load %arg46[%c0_242, %c0_243] : memref<1x32xf32, #tpu.memory_space<vmem>>, vector<1x32xf32>
    %c0_244 = arith.constant 0 : index
    %c0_245 = arith.constant 0 : index
    %451 = vector.load %arg47[%c0_244, %c0_245] : memref<32x32xbf16, #tpu.memory_space<vmem>>, vector<32x32xbf16>
    %c0_246 = arith.constant 0 : index
    %c0_247 = arith.constant 0 : index
    %452 = vector.load %arg48[%c0_246, %c0_247] : memref<1x32xf32, #tpu.memory_space<vmem>>, vector<1x32xf32>
    %c0_248 = arith.constant 0 : index
    %c0_249 = arith.constant 0 : index
    %453 = vector.load %arg49[%c0_248, %c0_249] : memref<32x64xbf16, #tpu.memory_space<vmem>>, vector<32x64xbf16>
    %c0_250 = arith.constant 0 : index
    %c0_251 = arith.constant 0 : index
    %454 = vector.load %arg50[%c0_250, %c0_251] : memref<1x64xf32, #tpu.memory_space<vmem>>, vector<1x64xf32>
    %c0_252 = arith.constant 0 : index
    %c0_253 = arith.constant 0 : index
    %455 = vector.load %arg51[%c0_252, %c0_253] : memref<32x32xbf16, #tpu.memory_space<vmem>>, vector<32x32xbf16>
    %c0_254 = arith.constant 0 : index
    %c0_255 = arith.constant 0 : index
    %456 = vector.load %arg52[%c0_254, %c0_255] : memref<1x32xf32, #tpu.memory_space<vmem>>, vector<1x32xf32>
    %c0_256 = arith.constant 0 : index
    %c0_257 = arith.constant 0 : index
    %457 = vector.load %arg53[%c0_256, %c0_257] : memref<1x32xf32, #tpu.memory_space<vmem>>, vector<1x32xf32>
    %c0_258 = arith.constant 0 : index
    %c0_259 = arith.constant 0 : index
    %458 = vector.load %arg54[%c0_258, %c0_259] : memref<1x32xf32, #tpu.memory_space<vmem>>, vector<1x32xf32>
    %c0_260 = arith.constant 0 : index
    %c0_261 = arith.constant 0 : index
    %459 = vector.load %arg55[%c0_260, %c0_261] : memref<32x32xbf16, #tpu.memory_space<vmem>>, vector<32x32xbf16>
    %c0_262 = arith.constant 0 : index
    %c0_263 = arith.constant 0 : index
    %460 = vector.load %arg56[%c0_262, %c0_263] : memref<1x32xf32, #tpu.memory_space<vmem>>, vector<1x32xf32>
    %c0_264 = arith.constant 0 : index
    %c0_265 = arith.constant 0 : index
    %461 = vector.load %arg57[%c0_264, %c0_265] : memref<32x32xbf16, #tpu.memory_space<vmem>>, vector<32x32xbf16>
    %c0_266 = arith.constant 0 : index
    %c0_267 = arith.constant 0 : index
    %462 = vector.load %arg58[%c0_266, %c0_267] : memref<1x32xf32, #tpu.memory_space<vmem>>, vector<1x32xf32>
    %cst_268 = arith.constant dense<0.000000e+00> : vector<24xf32>
    %463 = vector.multi_reduction <add>, %11, %cst_268 [1] : vector<24x32xf32> to vector<24xf32>
    %464 = vector.shape_cast %463 : vector<24xf32> to vector<24x1xf32>
    %cst_269 = arith.constant 3.200000e+01 : f32
    %465 = vector.broadcast %cst_269 : f32 to vector<24x1xf32>
    %466 = arith.divf %464, %465 : vector<24x1xf32>
    %467 = vector.broadcast %466 : vector<24x1xf32> to vector<24x32xf32>
    %468 = arith.subf %11, %467 : vector<24x32xf32>
    %469 = arith.mulf %468, %468 : vector<24x32xf32>
    %cst_270 = arith.constant dense<0.000000e+00> : vector<24xf32>
    %470 = vector.multi_reduction <add>, %469, %cst_270 [1] : vector<24x32xf32> to vector<24xf32>
    %471 = vector.shape_cast %470 : vector<24xf32> to vector<24x1xf32>
    %cst_271 = arith.constant 3.200000e+01 : f32
    %472 = vector.broadcast %cst_271 : f32 to vector<24x1xf32>
    %473 = arith.divf %471, %472 : vector<24x1xf32>
    %cst_272 = arith.constant 9.99999974E-6 : f32
    %474 = vector.broadcast %cst_272 : f32 to vector<24x1xf32>
    %475 = arith.addf %473, %474 : vector<24x1xf32>
    %476 = math.rsqrt %475 : vector<24x1xf32>
    %477 = vector.broadcast %476 : vector<24x1xf32> to vector<24x32xf32>
    %478 = arith.mulf %468, %477 : vector<24x32xf32>
    %479 = vector.broadcast %447 : vector<1x32xf32> to vector<24x32xf32>
    %480 = arith.mulf %478, %479 : vector<24x32xf32>
    %481 = vector.broadcast %448 : vector<1x32xf32> to vector<24x32xf32>
    %482 = arith.addf %480, %481 : vector<24x32xf32>
    %483 = arith.truncf %482 : vector<24x32xf32> to vector<24x32xbf16>
    %cst_273 = arith.constant dense<0.000000e+00> : vector<24x32xf32>
    %484 = tpu.matmul %483, %451, %cst_273 {dimension_numbers = #tpu.dot_dimension_numbers<[1], [0], [0], [1], [0, 0, 1, 1], [], []>} : vector<24x32xbf16>, vector<32x32xbf16>, vector<24x32xf32> -> vector<24x32xf32>
    %485 = vector.broadcast %452 : vector<1x32xf32> to vector<24x32xf32>
    %486 = arith.addf %484, %485 : vector<24x32xf32>
    %cst_274 = arith.constant dense<0.000000e+00> : vector<16xf32>
    %487 = vector.multi_reduction <add>, %445, %cst_274 [1] : vector<16x32xf32> to vector<16xf32>
    %488 = vector.shape_cast %487 : vector<16xf32> to vector<16x1xf32>
    %cst_275 = arith.constant 3.200000e+01 : f32
    %489 = vector.broadcast %cst_275 : f32 to vector<16x1xf32>
    %490 = arith.divf %488, %489 : vector<16x1xf32>
    %491 = vector.broadcast %490 : vector<16x1xf32> to vector<16x32xf32>
    %492 = arith.subf %445, %491 : vector<16x32xf32>
    %493 = arith.mulf %492, %492 : vector<16x32xf32>
    %cst_276 = arith.constant dense<0.000000e+00> : vector<16xf32>
    %494 = vector.multi_reduction <add>, %493, %cst_276 [1] : vector<16x32xf32> to vector<16xf32>
    %495 = vector.shape_cast %494 : vector<16xf32> to vector<16x1xf32>
    %cst_277 = arith.constant 3.200000e+01 : f32
    %496 = vector.broadcast %cst_277 : f32 to vector<16x1xf32>
    %497 = arith.divf %495, %496 : vector<16x1xf32>
    %cst_278 = arith.constant 9.99999974E-6 : f32
    %498 = vector.broadcast %cst_278 : f32 to vector<16x1xf32>
    %499 = arith.addf %497, %498 : vector<16x1xf32>
    %500 = math.rsqrt %499 : vector<16x1xf32>
    %501 = vector.broadcast %500 : vector<16x1xf32> to vector<16x32xf32>
    %502 = arith.mulf %492, %501 : vector<16x32xf32>
    %503 = vector.broadcast %449 : vector<1x32xf32> to vector<16x32xf32>
    %504 = arith.mulf %502, %503 : vector<16x32xf32>
    %505 = vector.broadcast %450 : vector<1x32xf32> to vector<16x32xf32>
    %506 = arith.addf %504, %505 : vector<16x32xf32>
    %507 = arith.truncf %506 : vector<16x32xf32> to vector<16x32xbf16>
    %cst_279 = arith.constant dense<0.000000e+00> : vector<16x64xf32>
    %508 = tpu.matmul %507, %453, %cst_279 {dimension_numbers = #tpu.dot_dimension_numbers<[1], [0], [0], [1], [0, 0, 1, 1], [], []>} : vector<16x32xbf16>, vector<32x64xbf16>, vector<16x64xf32> -> vector<16x64xf32>
    %509 = vector.broadcast %454 : vector<1x64xf32> to vector<16x64xf32>
    %510 = arith.addf %508, %509 : vector<16x64xf32>
    %511 = vector.extract_strided_slice %510 {offsets = [0, 0], sizes = [16, 32], strides = [1, 1]} : vector<16x64xf32> to vector<16x32xf32>
    %512 = vector.extract_strided_slice %510 {offsets = [0, 32], sizes = [16, 32], strides = [1, 1]} : vector<16x64xf32> to vector<16x32xf32>
    %513 = arith.truncf %486 : vector<24x32xf32> to vector<24x32xbf16>
    %514 = arith.truncf %511 : vector<16x32xf32> to vector<16x32xbf16>
    %cst_280 = arith.constant dense<0.000000e+00> : vector<24x16xf32>
    %515 = tpu.matmul %513, %514, %cst_280 {dimension_numbers = #tpu.dot_dimension_numbers<[1], [1], [0], [0], [0, 0, 1, 0], [], []>} : vector<24x32xbf16>, vector<16x32xbf16>, vector<24x16xf32> -> vector<24x16xf32>
    %516 = arith.addf %515, %446 : vector<24x16xf32>
    %cst_281 = arith.constant dense<0xFF800000> : vector<24xf32>
    %517 = vector.multi_reduction <maximumf>, %516, %cst_281 [1] : vector<24x16xf32> to vector<24xf32>
    %518 = vector.shape_cast %517 : vector<24xf32> to vector<24x1xf32>
    %519 = vector.broadcast %518 : vector<24x1xf32> to vector<24x16xf32>
    %520 = arith.subf %516, %519 : vector<24x16xf32>
    %521 = math.exp %520 : vector<24x16xf32>
    %cst_282 = arith.constant dense<0.000000e+00> : vector<24xf32>
    %522 = vector.multi_reduction <add>, %521, %cst_282 [1] : vector<24x16xf32> to vector<24xf32>
    %523 = vector.shape_cast %522 : vector<24xf32> to vector<24x1xf32>
    %524 = arith.truncf %521 : vector<24x16xf32> to vector<24x16xbf16>
    %525 = arith.truncf %512 : vector<16x32xf32> to vector<16x32xbf16>
    %cst_283 = arith.constant dense<0.000000e+00> : vector<24x32xf32>
    %526 = tpu.matmul %524, %525, %cst_283 {dimension_numbers = #tpu.dot_dimension_numbers<[1], [0], [0], [1], [0, 0, 1, 1], [], []>} : vector<24x16xbf16>, vector<16x32xbf16>, vector<24x32xf32> -> vector<24x32xf32>
    %527 = tpu.reciprocal %523 {approx = true} : vector<24x1xf32> -> vector<24x1xf32>
    %528 = vector.broadcast %527 : vector<24x1xf32> to vector<24x32xf32>
    %529 = arith.mulf %526, %528 : vector<24x32xf32>
    %530 = arith.truncf %529 : vector<24x32xf32> to vector<24x32xbf16>
    %cst_284 = arith.constant dense<0.000000e+00> : vector<24x32xf32>
    %531 = tpu.matmul %530, %455, %cst_284 {dimension_numbers = #tpu.dot_dimension_numbers<[1], [0], [0], [1], [0, 0, 1, 1], [], []>} : vector<24x32xbf16>, vector<32x32xbf16>, vector<24x32xf32> -> vector<24x32xf32>
    %532 = vector.broadcast %456 : vector<1x32xf32> to vector<24x32xf32>
    %533 = arith.addf %531, %532 : vector<24x32xf32>
    %534 = arith.addf %11, %533 : vector<24x32xf32>
    %cst_285 = arith.constant dense<0.000000e+00> : vector<24xf32>
    %535 = vector.multi_reduction <add>, %534, %cst_285 [1] : vector<24x32xf32> to vector<24xf32>
    %536 = vector.shape_cast %535 : vector<24xf32> to vector<24x1xf32>
    %cst_286 = arith.constant 3.200000e+01 : f32
    %537 = vector.broadcast %cst_286 : f32 to vector<24x1xf32>
    %538 = arith.divf %536, %537 : vector<24x1xf32>
    %539 = vector.broadcast %538 : vector<24x1xf32> to vector<24x32xf32>
    %540 = arith.subf %534, %539 : vector<24x32xf32>
    %541 = arith.mulf %540, %540 : vector<24x32xf32>
    %cst_287 = arith.constant dense<0.000000e+00> : vector<24xf32>
    %542 = vector.multi_reduction <add>, %541, %cst_287 [1] : vector<24x32xf32> to vector<24xf32>
    %543 = vector.shape_cast %542 : vector<24xf32> to vector<24x1xf32>
    %cst_288 = arith.constant 3.200000e+01 : f32
    %544 = vector.broadcast %cst_288 : f32 to vector<24x1xf32>
    %545 = arith.divf %543, %544 : vector<24x1xf32>
    %cst_289 = arith.constant 9.99999974E-6 : f32
    %546 = vector.broadcast %cst_289 : f32 to vector<24x1xf32>
    %547 = arith.addf %545, %546 : vector<24x1xf32>
    %548 = math.rsqrt %547 : vector<24x1xf32>
    %549 = vector.broadcast %548 : vector<24x1xf32> to vector<24x32xf32>
    %550 = arith.mulf %540, %549 : vector<24x32xf32>
    %551 = vector.broadcast %457 : vector<1x32xf32> to vector<24x32xf32>
    %552 = arith.mulf %550, %551 : vector<24x32xf32>
    %553 = vector.broadcast %458 : vector<1x32xf32> to vector<24x32xf32>
    %554 = arith.addf %552, %553 : vector<24x32xf32>
    %555 = arith.truncf %554 : vector<24x32xf32> to vector<24x32xbf16>
    %cst_290 = arith.constant dense<0.000000e+00> : vector<24x32xf32>
    %556 = tpu.matmul %555, %459, %cst_290 {dimension_numbers = #tpu.dot_dimension_numbers<[1], [0], [0], [1], [0, 0, 1, 1], [], []>} : vector<24x32xbf16>, vector<32x32xbf16>, vector<24x32xf32> -> vector<24x32xf32>
    %557 = vector.broadcast %460 : vector<1x32xf32> to vector<24x32xf32>
    %558 = arith.addf %556, %557 : vector<24x32xf32>
    %559 = arith.mulf %558, %558 : vector<24x32xf32>
    %560 = arith.mulf %558, %559 : vector<24x32xf32>
    %cst_291 = arith.constant 4.471500e-02 : f32
    %561 = vector.broadcast %cst_291 : f32 to vector<24x32xf32>
    %562 = arith.mulf %561, %560 : vector<24x32xf32>
    %563 = arith.addf %558, %562 : vector<24x32xf32>
    %cst_292 = arith.constant 0.797884583 : f32
    %564 = vector.broadcast %cst_292 : f32 to vector<24x32xf32>
    %565 = arith.mulf %564, %563 : vector<24x32xf32>
    %566 = math.tanh %565 : vector<24x32xf32>
    %cst_293 = arith.constant 1.000000e+00 : f32
    %567 = vector.broadcast %cst_293 : f32 to vector<24x32xf32>
    %568 = arith.addf %567, %566 : vector<24x32xf32>
    %cst_294 = arith.constant 5.000000e-01 : f32
    %569 = vector.broadcast %cst_294 : f32 to vector<24x32xf32>
    %570 = arith.mulf %569, %568 : vector<24x32xf32>
    %571 = arith.mulf %558, %570 : vector<24x32xf32>
    %572 = arith.truncf %571 : vector<24x32xf32> to vector<24x32xbf16>
    %cst_295 = arith.constant dense<0.000000e+00> : vector<24x32xf32>
    %573 = tpu.matmul %572, %461, %cst_295 {dimension_numbers = #tpu.dot_dimension_numbers<[1], [0], [0], [1], [0, 0, 1, 1], [], []>} : vector<24x32xbf16>, vector<32x32xbf16>, vector<24x32xf32> -> vector<24x32xf32>
    %574 = vector.broadcast %462 : vector<1x32xf32> to vector<24x32xf32>
    %575 = arith.addf %573, %574 : vector<24x32xf32>
    %576 = arith.addf %534, %575 : vector<24x32xf32>
    %c0_296 = arith.constant 0 : index
    %c0_297 = arith.constant 0 : index
    %577 = vector.load %arg59[%c0_296, %c0_297] : memref<24x32xf32, #tpu.memory_space<vmem>>, vector<24x32xf32>
    tpu.vector_store %arg59[%c0_296, %c0_297], %576 {strides = array<i32>} : memref<24x32xf32, #tpu.memory_space<vmem>>, vector<24x32xf32>,
    return
  }
}

</mosaic_0001>

<llo_original>
// kernel: _lambda_.1
$region0: #{_lambda_.1}
  #allocation0 [shape = 'u32[]', space=smem, size = 0x4, offset = 0x4, fixed_abs, tag = 'smem constant byte address 0x4 - core index']
  #allocation1 [shape = 'u32[72,128]{1,0:T(1,128)}', space=vmem, size = 0x9000, scoped, tag = 'internal scratch']
  %s0 = inlined_call_operand.smem [shape: u32[61], index: -1, kind: input, shape index: {}]
  %s1 = sld [smem:[%s0]]
  %s2 = scalar_lea.smem %s0, 1
  %s3 = sld [smem:[%s2]]
  %s4 = scalar_lea.smem %s0, 2
  %s5 = sld [smem:[%s4]]
  %s6 = scalar_lea.smem %s0, 3
  %s7 = sld [smem:[%s6]]
  %s8 = scalar_lea.smem %s0, 4
  %s9 = sld [smem:[%s8]]
  %s10 = scalar_lea.smem %s0, 5
  %s11 = sld [smem:[%s10]]
  %s12 = scalar_lea.smem %s0, 6
  %s13 = sld [smem:[%s12]]
  %s14 = scalar_lea.smem %s0, 7
  %s15 = sld [smem:[%s14]]
  %s16 = scalar_lea.smem %s0, 8
  %s17 = sld [smem:[%s16]]
  %s18 = scalar_lea.smem %s0, 9
  %s19 = sld [smem:[%s18]]
  %s20 = scalar_lea.smem %s0, 10
  %s21 = sld [smem:[%s20]]
  %s22 = scalar_lea.smem %s0, 11
  %s23 = sld [smem:[%s22]]
  %s24 = scalar_lea.smem %s0, 12
  %s25 = sld [smem:[%s24]]
  %s26 = scalar_lea.smem %s0, 13
  %s27 = sld [smem:[%s26]]
  %s28 = scalar_lea.smem %s0, 14
  %s29 = sld [smem:[%s28]]
  %s30 = scalar_lea.smem %s0, 15
  %s31 = sld [smem:[%s30]]
  %s32 = scalar_lea.smem %s0, 16
  %s33 = sld [smem:[%s32]]
  %s34 = scalar_lea.smem %s0, 17
  %s35 = sld [smem:[%s34]]
  %s36 = scalar_lea.smem %s0, 18
  %s37 = sld [smem:[%s36]]
  %s38 = scalar_lea.smem %s0, 19
  %s39 = sld [smem:[%s38]]
  %s40 = scalar_lea.smem %s0, 20
  %s41 = sld [smem:[%s40]]
  %s42 = scalar_lea.smem %s0, 21
  %s43 = sld [smem:[%s42]]
  %s44 = scalar_lea.smem %s0, 22
  %s45 = sld [smem:[%s44]]
  %s46 = scalar_lea.smem %s0, 23
  %s47 = sld [smem:[%s46]]
  %s48 = scalar_lea.smem %s0, 24
  %s49 = sld [smem:[%s48]]
  %s50 = scalar_lea.smem %s0, 25
  %s51 = sld [smem:[%s50]]
  %s52 = scalar_lea.smem %s0, 26
  %s53 = sld [smem:[%s52]]
  %s54 = scalar_lea.smem %s0, 27
  %s55 = sld [smem:[%s54]]
  %s56 = scalar_lea.smem %s0, 28
  %s57 = sld [smem:[%s56]]
  %s58 = scalar_lea.smem %s0, 29
  %s59 = sld [smem:[%s58]]
  %s60 = scalar_lea.smem %s0, 30
  %s61 = sld [smem:[%s60]]
  %s62 = scalar_lea.smem %s0, 31
  %s63 = sld [smem:[%s62]]
  %s64 = scalar_lea.smem %s0, 32
  %s65 = sld [smem:[%s64]]
  %s66 = scalar_lea.smem %s0, 33
  %s67 = sld [smem:[%s66]]
  %s68 = scalar_lea.smem %s0, 34
  %s69 = sld [smem:[%s68]]
  %s70 = scalar_lea.smem %s0, 35
  %s71 = sld [smem:[%s70]]
  %s72 = scalar_lea.smem %s0, 36
  %s73 = sld [smem:[%s72]]
  %s74 = scalar_lea.smem %s0, 37
  %s75 = sld [smem:[%s74]]
  %s76 = scalar_lea.smem %s0, 38
  %s77 = sld [smem:[%s76]]
  %s78 = scalar_lea.smem %s0, 39
  %s79 = sld [smem:[%s78]]
  %s80 = scalar_lea.smem %s0, 40
  %s81 = sld [smem:[%s80]]
  %s82 = scalar_lea.smem %s0, 41
  %s83 = sld [smem:[%s82]]
  %s84 = scalar_lea.smem %s0, 42
  %s85 = sld [smem:[%s84]]
  %s86 = scalar_lea.smem %s0, 43
  %s87 = sld [smem:[%s86]]
  %s88 = scalar_lea.smem %s0, 44
  %s89 = sld [smem:[%s88]]
  %s90 = scalar_lea.smem %s0, 45
  %s91 = sld [smem:[%s90]]
  %s92 = scalar_lea.smem %s0, 46
  %s93 = sld [smem:[%s92]]
  %s94 = scalar_lea.smem %s0, 47
  %s95 = sld [smem:[%s94]]
  %s96 = scalar_lea.smem %s0, 48
  %s97 = sld [smem:[%s96]]
  %s98 = scalar_lea.smem %s0, 49
  %s99 = sld [smem:[%s98]]
  %s100 = scalar_lea.smem %s0, 50
  %s101 = sld [smem:[%s100]]
  %s102 = scalar_lea.smem %s0, 51
  %s103 = sld [smem:[%s102]]
  %s104 = scalar_lea.smem %s0, 52
  %s105 = sld [smem:[%s104]]
  %s106 = scalar_lea.smem %s0, 53
  %s107 = sld [smem:[%s106]]
  %s108 = scalar_lea.smem %s0, 54
  %s109 = sld [smem:[%s108]]
  %s110 = scalar_lea.smem %s0, 55
  %s111 = sld [smem:[%s110]]
  %s112 = scalar_lea.smem %s0, 56
  %s113 = sld [smem:[%s112]]
  %s114 = scalar_lea.smem %s0, 57
  %s115 = sld [smem:[%s114]]
  %s116 = scalar_lea.smem %s0, 58
  %s117 = sld [smem:[%s116]]
  %s118 = scalar_lea.smem %s0, 59
  %s119 = sld [smem:[%s118]]
  %s120 = scalar_lea.smem %s0, 60
  %s121 = sld [smem:[%s120]]
  %122 = xla_tuple %s119, %s121
  %s123 = sld [smem:[#allocation0]]
  $region254: #{_lambda_.1} parent=0
    _
  %s125 = ssub.s32 1, %s123
  %s126 = scalar_select 0, %s125, %s123
  $region1: #{_lambda_.1} parent=0
    #allocation2 [shape = 'u8[8192]{0}', space=vmem, size = 0x2000, scoped, tag = 'output window, operand 1, single buffered']
    #allocation3 [shape = 's32[1]{0}', space=sflag, size = 0x4, scoped, tag = 'scoped memory for _lambda_.1']
    %127 = vsyncpa [#allocation3], 0
    // Predicated region
    $region2: #{_lambda_.1} parent=1 // pred_check
      _
    $region3: #{_lambda_.1} parent=1 // pred_check_branch
      %129 = sbr.rel (0) target = $region5
    $region4: #{_lambda_.1} parent=1 // pred_region
      _
    $region5: #{_lambda_.1} parent=1 // pred_fallthru
      _
    // Predicated region
    $region6: #{_lambda_.1} parent=1 // pred_check
      _
    $region7: #{_lambda_.1} parent=1 // pred_check_branch
      %131 = sbr.rel (0) target = $region9
    $region8: #{_lambda_.1} parent=1 // pred_region
      _
    $region9: #{_lambda_.1} parent=1 // pred_fallthru
      _
    // Predicated region
    $region10: #{_lambda_.1} parent=1 // pred_check
      _
    $region11: #{_lambda_.1} parent=1 // pred_check_branch
      %133 = sbr.rel (0) target = $region13
    $region12: #{_lambda_.1} parent=1 // pred_region
      _
    $region13: #{_lambda_.1} parent=1 // pred_fallthru
      _
    // Predicated region
    $region14: #{_lambda_.1} parent=1 // pred_check
      _
    $region15: #{_lambda_.1} parent=1 // pred_check_branch
      %135 = sbr.rel (0) target = $region17
    $region16: #{_lambda_.1} parent=1 // pred_region
      _
    $region17: #{_lambda_.1} parent=1 // pred_fallthru
      _
    // Predicated region
    $region18: #{_lambda_.1} parent=1 // pred_check
      _
    $region19: #{_lambda_.1} parent=1 // pred_check_branch
      %137 = sbr.rel (0) target = $region21
    $region20: #{_lambda_.1} parent=1 // pred_region
      _
    $region21: #{_lambda_.1} parent=1 // pred_fallthru
      _
    // Predicated region
    $region22: #{_lambda_.1} parent=1 // pred_check
      _
    $region23: #{_lambda_.1} parent=1 // pred_check_branch
      %139 = sbr.rel (0) target = $region25
    $region24: #{_lambda_.1} parent=1 // pred_region
      _
    $region25: #{_lambda_.1} parent=1 // pred_fallthru
      _
    // Predicated region
    $region26: #{_lambda_.1} parent=1 // pred_check
      _
    $region27: #{_lambda_.1} parent=1 // pred_check_branch
      %141 = sbr.rel (0) target = $region29
    $region28: #{_lambda_.1} parent=1 // pred_region
      _
    $region29: #{_lambda_.1} parent=1 // pred_fallthru
      _
    // Predicated region
    $region30: #{_lambda_.1} parent=1 // pred_check
      _
    $region31: #{_lambda_.1} parent=1 // pred_check_branch
      %143 = sbr.rel (0) target = $region33
    $region32: #{_lambda_.1} parent=1 // pred_region
      _
    $region33: #{_lambda_.1} parent=1 // pred_fallthru
      _
    // Predicated region
    $region34: #{_lambda_.1} parent=1 // pred_check
      _
    $region35: #{_lambda_.1} parent=1 // pred_check_branch
      %145 = sbr.rel (0) target = $region37
    $region36: #{_lambda_.1} parent=1 // pred_region
      _
    $region37: #{_lambda_.1} parent=1 // pred_fallthru
      _
    // Predicated region
    $region38: #{_lambda_.1} parent=1 // pred_check
      _
    $region39: #{_lambda_.1} parent=1 // pred_check_branch
      %147 = sbr.rel (0) target = $region41
    $region40: #{_lambda_.1} parent=1 // pred_region
      _
    $region41: #{_lambda_.1} parent=1 // pred_fallthru
      _
    // Predicated region
    $region42: #{_lambda_.1} parent=1 // pred_check
      _
    $region43: #{_lambda_.1} parent=1 // pred_check_branch
      %149 = sbr.rel (0) target = $region45
    $region44: #{_lambda_.1} parent=1 // pred_region
      _
    $region45: #{_lambda_.1} parent=1 // pred_fallthru
      _
    // Predicated region
    $region46: #{_lambda_.1} parent=1 // pred_check
      _
    $region47: #{_lambda_.1} parent=1 // pred_check_branch
      %151 = sbr.rel (0) target = $region49
    $region48: #{_lambda_.1} parent=1 // pred_region
      _
    $region49: #{_lambda_.1} parent=1 // pred_fallthru
      _
    // Predicated region
    $region50: #{_lambda_.1} parent=1 // pred_check
      _
    $region51: #{_lambda_.1} parent=1 // pred_check_branch
      %153 = sbr.rel (0) target = $region53
    $region52: #{_lambda_.1} parent=1 // pred_region
      _
    $region53: #{_lambda_.1} parent=1 // pred_fallthru
      _
    // Predicated region
    $region54: #{_lambda_.1} parent=1 // pred_check
      _
    $region55: #{_lambda_.1} parent=1 // pred_check_branch
      %155 = sbr.rel (0) target = $region57
    $region56: #{_lambda_.1} parent=1 // pred_region
      _
    $region57: #{_lambda_.1} parent=1 // pred_fallthru
      _
    // Predicated region
    $region58: #{_lambda_.1} parent=1 // pred_check
      _
    $region59: #{_lambda_.1} parent=1 // pred_check_branch
      %157 = sbr.rel (0) target = $region61
    $region60: #{_lambda_.1} parent=1 // pred_region
      _
    $region61: #{_lambda_.1} parent=1 // pred_fallthru
      _
    // Predicated region
    $region62: #{_lambda_.1} parent=1 // pred_check
      _
    $region63: #{_lambda_.1} parent=1 // pred_check_branch
      %159 = sbr.rel (0) target = $region65
    $region64: #{_lambda_.1} parent=1 // pred_region
      _
    $region65: #{_lambda_.1} parent=1 // pred_fallthru
      _
    // Predicated region
    $region66: #{_lambda_.1} parent=1 // pred_check
      _
    $region67: #{_lambda_.1} parent=1 // pred_check_branch
      %161 = sbr.rel (0) target = $region69
    $region68: #{_lambda_.1} parent=1 // pred_region
      _
    $region69: #{_lambda_.1} parent=1 // pred_fallthru
      _
    // Predicated region
    $region70: #{_lambda_.1} parent=1 // pred_check
      _
    $region71: #{_lambda_.1} parent=1 // pred_check_branch
      %163 = sbr.rel (0) target = $region73
    $region72: #{_lambda_.1} parent=1 // pred_region
      _
    $region73: #{_lambda_.1} parent=1 // pred_fallthru
      _
    // Predicated region
    $region74: #{_lambda_.1} parent=1 // pred_check
      _
    $region75: #{_lambda_.1} parent=1 // pred_check_branch
      %165 = sbr.rel (0) target = $region77
    $region76: #{_lambda_.1} parent=1 // pred_region
      _
    $region77: #{_lambda_.1} parent=1 // pred_fallthru
      _
    // Predicated region
    $region78: #{_lambda_.1} parent=1 // pred_check
      _
    $region79: #{_lambda_.1} parent=1 // pred_check_branch
      %167 = sbr.rel (0) target = $region81
    $region80: #{_lambda_.1} parent=1 // pred_region
      _
    $region81: #{_lambda_.1} parent=1 // pred_fallthru
      _
    // Predicated region
    $region82: #{_lambda_.1} parent=1 // pred_check
      _
    $region83: #{_lambda_.1} parent=1 // pred_check_branch
      %169 = sbr.rel (0) target = $region85
    $region84: #{_lambda_.1} parent=1 // pred_region
      _
    $region85: #{_lambda_.1} parent=1 // pred_fallthru
      _
    // Predicated region
    $region86: #{_lambda_.1} parent=1 // pred_check
      _
    $region87: #{_lambda_.1} parent=1 // pred_check_branch
      %171 = sbr.rel (0) target = $region89
    $region88: #{_lambda_.1} parent=1 // pred_region
      _
    $region89: #{_lambda_.1} parent=1 // pred_fallthru
      _
    // Predicated region
    $region90: #{_lambda_.1} parent=1 // pred_check
      _
    $region91: #{_lambda_.1} parent=1 // pred_check_branch
      %173 = sbr.rel (0) target = $region93
    $region92: #{_lambda_.1} parent=1 // pred_region
      _
    $region93: #{_lambda_.1} parent=1 // pred_fallthru
      _
    // Predicated region
    $region94: #{_lambda_.1} parent=1 // pred_check
      _
    $region95: #{_lambda_.1} parent=1 // pred_check_branch
      %175 = sbr.rel (0) target = $region97
    $region96: #{_lambda_.1} parent=1 // pred_region
      _
    $region97: #{_lambda_.1} parent=1 // pred_fallthru
      _
    // Predicated region
    $region98: #{_lambda_.1} parent=1 // pred_check
      _
    $region99: #{_lambda_.1} parent=1 // pred_check_branch
      %177 = sbr.rel (0) target = $region101
    $region100: #{_lambda_.1} parent=1 // pred_region
      _
    $region101: #{_lambda_.1} parent=1 // pred_fallthru
      _
    // Predicated region
    $region102: #{_lambda_.1} parent=1 // pred_check
      _
    $region103: #{_lambda_.1} parent=1 // pred_check_branch
      %179 = sbr.rel (0) target = $region105
    $region104: #{_lambda_.1} parent=1 // pred_region
      _
    $region105: #{_lambda_.1} parent=1 // pred_fallthru
      _
    // Predicated region
    $region106: #{_lambda_.1} parent=1 // pred_check
      _
    $region107: #{_lambda_.1} parent=1 // pred_check_branch
      %181 = sbr.rel (0) target = $region109
    $region108: #{_lambda_.1} parent=1 // pred_region
      _
    $region109: #{_lambda_.1} parent=1 // pred_fallthru
      _
    // Predicated region
    $region110: #{_lambda_.1} parent=1 // pred_check
      _
    $region111: #{_lambda_.1} parent=1 // pred_check_branch
      %183 = sbr.rel (0) target = $region113
    $region112: #{_lambda_.1} parent=1 // pred_region
      _
    $region113: #{_lambda_.1} parent=1 // pred_fallthru
      _
    // Predicated region
    $region114: #{_lambda_.1} parent=1 // pred_check
      _
    $region115: #{_lambda_.1} parent=1 // pred_check_branch
      %185 = sbr.rel (0) target = $region117
    $region116: #{_lambda_.1} parent=1 // pred_region
      _
    $region117: #{_lambda_.1} parent=1 // pred_fallthru
      _
    // Predicated region
    $region118: #{_lambda_.1} parent=1 // pred_check
      _
    $region119: #{_lambda_.1} parent=1 // pred_check_branch
      %187 = sbr.rel (0) target = $region121
    $region120: #{_lambda_.1} parent=1 // pred_region
      _
    $region121: #{_lambda_.1} parent=1 // pred_fallthru
      _
    // Predicated region
    $region122: #{_lambda_.1} parent=1 // pred_check
      _
    $region123: #{_lambda_.1} parent=1 // pred_check_branch
      %189 = sbr.rel (0) target = $region125
    $region124: #{_lambda_.1} parent=1 // pred_region
      _
    $region125: #{_lambda_.1} parent=1 // pred_fallthru
      _
    // Predicated region
    $region126: #{_lambda_.1} parent=1 // pred_check
      _
    $region127: #{_lambda_.1} parent=1 // pred_check_branch
      %191 = sbr.rel (0) target = $region129
    $region128: #{_lambda_.1} parent=1 // pred_region
      _
    $region129: #{_lambda_.1} parent=1 // pred_fallthru
      _
    // Predicated region
    $region130: #{_lambda_.1} parent=1 // pred_check
      _
    $region131: #{_lambda_.1} parent=1 // pred_check_branch
      %193 = sbr.rel (0) target = $region133
    $region132: #{_lambda_.1} parent=1 // pred_region
      _
    $region133: #{_lambda_.1} parent=1 // pred_fallthru
      _
    // Predicated region
    $region134: #{_lambda_.1} parent=1 // pred_check
      _
    $region135: #{_lambda_.1} parent=1 // pred_check_branch
      %195 = sbr.rel (0) target = $region137
    $region136: #{_lambda_.1} parent=1 // pred_region
      _
    $region137: #{_lambda_.1} parent=1 // pred_fallthru
      _
    // Predicated region
    $region138: #{_lambda_.1} parent=1 // pred_check
      _
    $region139: #{_lambda_.1} parent=1 // pred_check_branch
      %197 = sbr.rel (0) target = $region141
    $region140: #{_lambda_.1} parent=1 // pred_region
      _
    $region141: #{_lambda_.1} parent=1 // pred_fallthru
      _
    // Predicated region
    $region142: #{_lambda_.1} parent=1 // pred_check
      _
    $region143: #{_lambda_.1} parent=1 // pred_check_branch
      %199 = sbr.rel (0) target = $region145
    $region144: #{_lambda_.1} parent=1 // pred_region
      _
    $region145: #{_lambda_.1} parent=1 // pred_fallthru
      _
    // Predicated region
    $region146: #{_lambda_.1} parent=1 // pred_check
      _
    $region147: #{_lambda_.1} parent=1 // pred_check_branch
      %201 = sbr.rel (0) target = $region149
    $region148: #{_lambda_.1} parent=1 // pred_region
      _
    $region149: #{_lambda_.1} parent=1 // pred_fallthru
      _
    // Predicated region
    $region150: #{_lambda_.1} parent=1 // pred_check
      _
    $region151: #{_lambda_.1} parent=1 // pred_check_branch
      %203 = sbr.rel (0) target = $region153
    $region152: #{_lambda_.1} parent=1 // pred_region
      _
    $region153: #{_lambda_.1} parent=1 // pred_fallthru
      _
    // Predicated region
    $region154: #{_lambda_.1} parent=1 // pred_check
      _
    $region155: #{_lambda_.1} parent=1 // pred_check_branch
      %205 = sbr.rel (0) target = $region157
    $region156: #{_lambda_.1} parent=1 // pred_region
      _
    $region157: #{_lambda_.1} parent=1 // pred_fallthru
      _
    // Predicated region
    $region158: #{_lambda_.1} parent=1 // pred_check
      _
    $region159: #{_lambda_.1} parent=1 // pred_check_branch
      %207 = sbr.rel (0) target = $region161
    $region160: #{_lambda_.1} parent=1 // pred_region
      _
    $region161: #{_lambda_.1} parent=1 // pred_fallthru
      _
    // Predicated region
    $region162: #{_lambda_.1} parent=1 // pred_check
      _
    $region163: #{_lambda_.1} parent=1 // pred_check_branch
      %209 = sbr.rel (0) target = $region165
    $region164: #{_lambda_.1} parent=1 // pred_region
      _
    $region165: #{_lambda_.1} parent=1 // pred_fallthru
      _
    // Predicated region
    $region166: #{_lambda_.1} parent=1 // pred_check
      _
    $region167: #{_lambda_.1} parent=1 // pred_check_branch
      %211 = sbr.rel (0) target = $region169
    $region168: #{_lambda_.1} parent=1 // pred_region
      _
    $region169: #{_lambda_.1} parent=1 // pred_fallthru
      _
    // Predicated region
    $region170: #{_lambda_.1} parent=1 // pred_check
      _
    $region171: #{_lambda_.1} parent=1 // pred_check_branch
      %213 = sbr.rel (0) target = $region173
    $region172: #{_lambda_.1} parent=1 // pred_region
      _
    $region173: #{_lambda_.1} parent=1 // pred_fallthru
      _
    // Predicated region
    $region174: #{_lambda_.1} parent=1 // pred_check
      _
    $region175: #{_lambda_.1} parent=1 // pred_check_branch
      %215 = sbr.rel (0) target = $region177
    $region176: #{_lambda_.1} parent=1 // pred_region
      _
    $region177: #{_lambda_.1} parent=1 // pred_fallthru
      _
    // Predicated region
    $region178: #{_lambda_.1} parent=1 // pred_check
      _
    $region179: #{_lambda_.1} parent=1 // pred_check_branch
      %217 = sbr.rel (0) target = $region181
    $region180: #{_lambda_.1} parent=1 // pred_region
      _
    $region181: #{_lambda_.1} parent=1 // pred_fallthru
      _
    // Predicated region
    $region182: #{_lambda_.1} parent=1 // pred_check
      _
    $region183: #{_lambda_.1} parent=1 // pred_check_branch
      %219 = sbr.rel (0) target = $region185
    $region184: #{_lambda_.1} parent=1 // pred_region
      _
    $region185: #{_lambda_.1} parent=1 // pred_fallthru
      _
    // Predicated region
    $region186: #{_lambda_.1} parent=1 // pred_check
      _
    $region187: #{_lambda_.1} parent=1 // pred_check_branch
      %221 = sbr.rel (0) target = $region189
    $region188: #{_lambda_.1} parent=1 // pred_region
      _
    $region189: #{_lambda_.1} parent=1 // pred_fallthru
      _
    // Predicated region
    $region190: #{_lambda_.1} parent=1 // pred_check
      _
    $region191: #{_lambda_.1} parent=1 // pred_check_branch
      %223 = sbr.rel (0) target = $region193
    $region192: #{_lambda_.1} parent=1 // pred_region
      _
    $region193: #{_lambda_.1} parent=1 // pred_fallthru
      _
    // Predicated region
    $region194: #{_lambda_.1} parent=1 // pred_check
      _
    $region195: #{_lambda_.1} parent=1 // pred_check_branch
      %225 = sbr.rel (0) target = $region197
    $region196: #{_lambda_.1} parent=1 // pred_region
      _
    $region197: #{_lambda_.1} parent=1 // pred_fallthru
      _
    // Predicated region
    $region198: #{_lambda_.1} parent=1 // pred_check
      _
    $region199: #{_lambda_.1} parent=1 // pred_check_branch
      %227 = sbr.rel (0) target = $region201
    $region200: #{_lambda_.1} parent=1 // pred_region
      _
    $region201: #{_lambda_.1} parent=1 // pred_fallthru
      _
    // Predicated region
    $region202: #{_lambda_.1} parent=1 // pred_check
      _
    $region203: #{_lambda_.1} parent=1 // pred_check_branch
      %229 = sbr.rel (0) target = $region205
    $region204: #{_lambda_.1} parent=1 // pred_region
      _
    $region205: #{_lambda_.1} parent=1 // pred_fallthru
      _
    // Predicated region
    $region206: #{_lambda_.1} parent=1 // pred_check
      _
    $region207: #{_lambda_.1} parent=1 // pred_check_branch
      %231 = sbr.rel (0) target = $region209
    $region208: #{_lambda_.1} parent=1 // pred_region
      _
    $region209: #{_lambda_.1} parent=1 // pred_fallthru
      _
    // Predicated region
    $region210: #{_lambda_.1} parent=1 // pred_check
      _
    $region211: #{_lambda_.1} parent=1 // pred_check_branch
      %233 = sbr.rel (0) target = $region213
    $region212: #{_lambda_.1} parent=1 // pred_region
      _
    $region213: #{_lambda_.1} parent=1 // pred_fallthru
      _
    // Predicated region
    $region214: #{_lambda_.1} parent=1 // pred_check
      _
    $region215: #{_lambda_.1} parent=1 // pred_check_branch
      %235 = sbr.rel (0) target = $region217
    $region216: #{_lambda_.1} parent=1 // pred_region
      _
    $region217: #{_lambda_.1} parent=1 // pred_fallthru
      _
    // Predicated region
    $region218: #{_lambda_.1} parent=1 // pred_check
      _
    $region219: #{_lambda_.1} parent=1 // pred_check_branch
      %237 = sbr.rel (0) target = $region221
    $region220: #{_lambda_.1} parent=1 // pred_region
      _
    $region221: #{_lambda_.1} parent=1 // pred_fallthru
      _
    // Predicated region
    $region222: #{_lambda_.1} parent=1 // pred_check
      _
    $region223: #{_lambda_.1} parent=1 // pred_check_branch
      %239 = sbr.rel (0) target = $region225
    $region224: #{_lambda_.1} parent=1 // pred_region
      _
    $region225: #{_lambda_.1} parent=1 // pred_fallthru
      _
    // Predicated region
    $region226: #{_lambda_.1} parent=1 // pred_check
      _
    $region227: #{_lambda_.1} parent=1 // pred_check_branch
      %241 = sbr.rel (0) target = $region229
    $region228: #{_lambda_.1} parent=1 // pred_region
      _
    $region229: #{_lambda_.1} parent=1 // pred_fallthru
      _
    // Predicated region
    $region230: #{_lambda_.1} parent=1 // pred_check
      _
    $region231: #{_lambda_.1} parent=1 // pred_check_branch
      %243 = sbr.rel (0) target = $region233
    $region232: #{_lambda_.1} parent=1 // pred_region
      _
    $region233: #{_lambda_.1} parent=1 // pred_fallthru
      _
    // Predicated region
    $region234: #{_lambda_.1} parent=1 // pred_check
      _
    $region235: #{_lambda_.1} parent=1 // pred_check_branch
      %245 = sbr.rel (0) target = $region237
    $region236: #{_lambda_.1} parent=1 // pred_region
      _
    $region237: #{_lambda_.1} parent=1 // pred_fallthru
      _
    %v247 = vld [vmem:[%s15] sm:$0xf]
    %v248 = vld [vmem:[%s15 + $0x4] sm:$0xf]
    %v249 = vld [vmem:[%s17] sm:$0x1]
    %v250 = vld [vmem:[%s1] sm:$0xff]
    %v251 = vld [vmem:[%s1 + $0x8] sm:$0xff]
    %v252 = vld [vmem:[%s1 + $0x10] sm:$0xff]
    %v253 = vpack.c.bf16 %v251, %v250
    %v254 = vpack.c.bf16 %v252, %v252
    %v256 = vperm.slane %v249, 0
    %v260 = vunpack.c.l.b16 %v247
    %v261 = vunpack.c.l.b16 %v248
    %v262 = vpack.c.b16 %v261, %v260
    %vm264 = vcmask 130048
    %v266 = vsel %vm264, %v253, 0
    %v269 = vsel %vm264, %v254, 0
    %271 = vmatpush.bf16.msra.mxu0 0
    %272 = vmatpush.bf16.msra.mxu0 0
    %273 = vmatpush.bf16.msra.mxu0 0
    %274 = vmatpush.bf16.msra.mxu0 0
    %275 = vmatpush.bf16.msra.mxu0 0
    %276 = vmatpush.bf16.msra.mxu0 0
    %277 = vmatpush.bf16.msra.mxu0 0
    %278 = vmatpush.bf16.msra.mxu0 %v262
    %279 = vmatmul.bf16.gmra.mxu0 %v266
    %v280 = vpop.f32.mrf.mxu0
    %v281 = vadd.f32 %v256, %v280
    %v282 = vpop.f32.mrf.mxu0
    %v283 = vadd.f32 %v256, %v282
    %284 = vmatmul.bf16.gmra.mxu0 %v269
    %v285 = vpop.f32.mrf.mxu0
    %v286 = vadd.f32 %v256, %v285
    %v287 = vpop.f32.mrf.mxu0
    %288 = vdwg.mxu0
    %v289 = vld [vmem:[%s5] sm:$0xff]
    %v290 = vld [vmem:[%s5 + $0x8] sm:$0xff]
    %v291 = vld [vmem:[%s5 + $0x10] sm:$0xff]
    %v292 = vpack.c.bf16 %v290, %v289
    %v293 = vpack.c.bf16 %v291, %v291
    %v295 = vsel %vm264, %v292, 0
    %v298 = vsel %vm264, %v293, 0
    %300 = vmatpush.bf16.msra.mxu0 0
    %301 = vmatpush.bf16.msra.mxu0 0
    %302 = vmatpush.bf16.msra.mxu0 0
    %303 = vmatpush.bf16.msra.mxu0 0
    %304 = vmatpush.bf16.msra.mxu0 0
    %305 = vmatpush.bf16.msra.mxu0 0
    %306 = vmatpush.bf16.msra.mxu0 0
    %307 = vmatpush.bf16.msra.mxu0 %v262
    %308 = vmatmul.bf16.gmra.mxu0 %v295
    %v309 = vpop.f32.mrf.mxu0
    %v310 = vadd.f32 %v256, %v309
    %v311 = vpop.f32.mrf.mxu0
    %v312 = vadd.f32 %v256, %v311
    %313 = vmatmul.bf16.gmra.mxu0 %v298
    %v314 = vpop.f32.mrf.mxu0
    %v315 = vadd.f32 %v256, %v314
    %v316 = vpop.f32.mrf.mxu0
    %317 = vdwg.mxu0
    %v318 = vld [vmem:[%s3] sm:$0xff]
    %v319 = vld [vmem:[%s7] sm:$0xff]
    %v320 = vld [vmem:[%s7 + $0x8] sm:$0xff]
    %v321 = vld [vmem:[%s9] sm:$0xff]
    %v322 = vld [vmem:[%s9 + $0x8] sm:$0xff]
    %v323 = vld [vmem:[%s23] sm:$0x1]
    %v324 = vld [vmem:[%s25] sm:$0x1]
    %v325 = vld [vmem:[%s27] sm:$0x1]
    %v326 = vld [vmem:[%s29] sm:$0x1]
    %v327 = vld [vmem:[%s31] sm:$0xf]
    %v328 = vld [vmem:[%s31 + $0x4] sm:$0xf]
    %v329 = vld [vmem:[%s31 + $0x8] sm:$0xf]
    %v330 = vld [vmem:[%s31 + $0xc] sm:$0xf]
    %v331 = vld [vmem:[%s33] sm:$0x1]
    %v332 = vld [vmem:[%s35] sm:$0xf]
    %v333 = vld [vmem:[%s35 + $0x4] sm:$0xf]
    %v334 = vld [vmem:[%s35 + $0x8] sm:$0xf]
    %v335 = vld [vmem:[%s35 + $0xc] sm:$0xf]
    %v336 = vld [vmem:[%s37] sm:$0x1]
    %v337 = vld [vmem:[%s39] sm:$0xf]
    %v338 = vld [vmem:[%s39 + $0x4] sm:$0xf]
    %v339 = vld [vmem:[%s39 + $0x8] sm:$0xf]
    %v340 = vld [vmem:[%s39 + $0xc] sm:$0xf]
    %v341 = vld [vmem:[%s41] sm:$0x1]
    %v342 = vld [vmem:[%s43] sm:$0x1]
    %v343 = vld [vmem:[%s45] sm:$0x1]
    %v344 = vld [vmem:[%s47] sm:$0xf]
    %v345 = vld [vmem:[%s47 + $0x4] sm:$0xf]
    %v346 = vld [vmem:[%s47 + $0x8] sm:$0xf]
    %v347 = vld [vmem:[%s47 + $0xc] sm:$0xf]
    %v348 = vld [vmem:[%s49] sm:$0x1]
    %v349 = vld [vmem:[%s51] sm:$0xf]
    %v350 = vld [vmem:[%s51 + $0x4] sm:$0xf]
    %v351 = vld [vmem:[%s51 + $0x8] sm:$0xf]
    %v352 = vld [vmem:[%s51 + $0xc] sm:$0xf]
    %v353 = vld [vmem:[%s53] sm:$0x1]
    %vm354 = vcmask 261120
    %v355 = vsel %vm354, %v319, 0.0
    %356 = vadd.xlane.f32.xlu0 %v355
    %v357 = vpop.xlane.xlu0 %356
    %v358 = vsel %vm354, %v320, 0.0
    %359 = vadd.xlane.f32.xlu0 %v358
    %v360 = vpop.xlane.xlu0 %359
    %v361 = vrcp.pop 32.0
    %v362 = vmul.f32 32.0, %v361
    %v363 = vsub.f32 1.0, %v362
    %v364 = vmul.f32 %v361, %v363
    %v365 = vadd.f32 %v361, %v364
    %vm366 = vweird.f32 %v361
    %v367 = vsel %vm366, %v361, %v365
    %v368 = vmul.f32 %v357, %v367
    %v369 = vmul.f32 %v360, %v367
    %v370 = vsub.f32 %v319, %v368
    %v371 = vsub.f32 %v320, %v369
    %v372 = vmul.f32 %v370, %v370
    %v373 = vmul.f32 %v371, %v371
    %v374 = vsel %vm354, %v372, 0.0
    %375 = vadd.xlane.f32.xlu0 %v374
    %v376 = vpop.xlane.xlu0 %375
    %v377 = vsel %vm354, %v373, 0.0
    %378 = vadd.xlane.f32.xlu0 %v377
    %v379 = vpop.xlane.xlu0 %378
    %v380 = vmul.f32 %v376, %v367
    %v381 = vmul.f32 %v379, %v367
    %v382 = vadd.f32 %v380, 1e-05
    %v383 = vadd.f32 %v381, 1e-05
    %v384 = vrsqrt.pop %v382
    %v385 = vmul.f32 %v384, %v382
    %v386 = vmul.f32 %v385, %v384
    %v387 = vmul.f32 0.5, %v386
    %v388 = vsub.f32 1.5, %v387
    %v389 = vmul.f32 %v384, %v388
    %vm390 = vweird.f32 %v382
    %vm391 = vweird.f32 %v384
    %vm392 = vmor %vm390, %vm391
    %v393 = vsel %vm392, %v384, %v389
    %v394 = vrsqrt.pop %v383
    %v395 = vmul.f32 %v394, %v383
    %v396 = vmul.f32 %v395, %v394
    %v397 = vmul.f32 0.5, %v396
    %v398 = vsub.f32 1.5, %v397
    %v399 = vmul.f32 %v394, %v398
    %vm400 = vweird.f32 %v383
    %vm401 = vweird.f32 %v394
    %vm402 = vmor %vm400, %vm401
    %v403 = vsel %vm402, %v394, %v399
    %v404 = vmul.f32 %v370, %v393
    %v405 = vmul.f32 %v371, %v403
    %v407 = vperm.slane %v323, 0
    %v409 = vmul.f32 %v404, %v407
    %v410 = vmul.f32 %v405, %v407
    %v412 = vperm.slane %v324, 0
    %v414 = vadd.f32 %v409, %v412
    %v415 = vadd.f32 %v410, %v412
    %v416 = vpack.c.bf16 %v415, %v414
    %v418 = vperm.slane %v331, 0
    %v424 = vunpack.c.l.b16 %v327
    %v425 = vunpack.c.l.b16 %v328
    %v426 = vunpack.c.l.b16 %v329
    %v427 = vunpack.c.l.b16 %v330
    %v428 = vpack.c.b16 %v425, %v424
    %v429 = vpack.c.b16 %v427, %v426
    %v433 = vsel %vm354, %v416, 0
    %435 = vmatpush.bf16.msra.mxu0 0
    %436 = vmatpush.bf16.msra.mxu0 0
    %437 = vmatpush.bf16.msra.mxu0 0
    %438 = vmatpush.bf16.msra.mxu0 0
    %439 = vmatpush.bf16.msra.mxu0 0
    %440 = vmatpush.bf16.msra.mxu0 0
    %441 = vmatpush.bf16.msra.mxu0 %v429
    %442 = vmatpush.bf16.msra.mxu0 %v428
    %443 = vmatmul.bf16.gmra.mxu0 %v433
    %v444 = vpop.f32.mrf.mxu0
    %v445 = vadd.f32 %v418, %v444
    %v446 = vpop.f32.mrf.mxu0
    %v447 = vadd.f32 %v418, %v446
    %448 = vdwg.mxu0
    %v449 = vsel %vm354, %v281, 0.0
    %450 = vadd.xlane.f32.xlu0 %v449
    %v451 = vpop.xlane.xlu0 %450
    %v452 = vsel %vm354, %v283, 0.0
    %453 = vadd.xlane.f32.xlu0 %v452
    %v454 = vpop.xlane.xlu0 %453
    %v455 = vsel %vm354, %v286, 0.0
    %456 = vadd.xlane.f32.xlu0 %v455
    %v457 = vpop.xlane.xlu0 %456
    %v458 = vsel %vm354, %v318, 0.0
    %459 = vadd.xlane.f32.xlu0 %v458
    %v460 = vpop.xlane.xlu0 %459
    %v461 = vmul.f32 %v451, %v367
    %v462 = vmul.f32 %v454, %v367
    %v463 = vmul.f32 %v457, %v367
    %v464 = vmul.f32 %v460, %v367
    %v465 = vsub.f32 %v281, %v461
    %v466 = vsub.f32 %v283, %v462
    %v467 = vsub.f32 %v286, %v463
    %v468 = vsub.f32 %v318, %v464
    %v469 = vmul.f32 %v465, %v465
    %v470 = vmul.f32 %v466, %v466
    %v471 = vmul.f32 %v467, %v467
    %v472 = vmul.f32 %v468, %v468
    %v473 = vsel %vm354, %v469, 0.0
    %474 = vadd.xlane.f32.xlu0 %v473
    %v475 = vpop.xlane.xlu0 %474
    %v476 = vsel %vm354, %v470, 0.0
    %477 = vadd.xlane.f32.xlu0 %v476
    %v478 = vpop.xlane.xlu0 %477
    %v479 = vsel %vm354, %v471, 0.0
    %480 = vadd.xlane.f32.xlu0 %v479
    %v481 = vpop.xlane.xlu0 %480
    %v482 = vsel %vm354, %v472, 0.0
    %483 = vadd.xlane.f32.xlu0 %v482
    %v484 = vpop.xlane.xlu0 %483
    %v485 = vmul.f32 %v475, %v367
    %v486 = vmul.f32 %v478, %v367
    %v487 = vmul.f32 %v481, %v367
    %v488 = vmul.f32 %v484, %v367
    %v489 = vadd.f32 %v485, 1e-05
    %v490 = vadd.f32 %v486, 1e-05
    %v491 = vadd.f32 %v487, 1e-05
    %v492 = vadd.f32 %v488, 1e-05
    %v493 = vrsqrt.pop %v489
    %v494 = vmul.f32 %v493, %v489
    %v495 = vmul.f32 %v494, %v493
    %v496 = vmul.f32 0.5, %v495
    %v497 = vsub.f32 1.5, %v496
    %v498 = vmul.f32 %v493, %v497
    %vm499 = vweird.f32 %v489
    %vm500 = vweird.f32 %v493
    %vm501 = vmor %vm499, %vm500
    %v502 = vsel %vm501, %v493, %v498
    %v503 = vrsqrt.pop %v490
    %v504 = vmul.f32 %v503, %v490
    %v505 = vmul.f32 %v504, %v503
    %v506 = vmul.f32 0.5, %v505
    %v507 = vsub.f32 1.5, %v506
    %v508 = vmul.f32 %v503, %v507
    %vm509 = vweird.f32 %v490
    %vm510 = vweird.f32 %v503
    %vm511 = vmor %vm509, %vm510
    %v512 = vsel %vm511, %v503, %v508
    %v513 = vrsqrt.pop %v491
    %v514 = vmul.f32 %v513, %v491
    %v515 = vmul.f32 %v514, %v513
    %v516 = vmul.f32 0.5, %v515
    %v517 = vsub.f32 1.5, %v516
    %v518 = vmul.f32 %v513, %v517
    %vm519 = vweird.f32 %v491
    %vm520 = vweird.f32 %v513
    %vm521 = vmor %vm519, %vm520
    %v522 = vsel %vm521, %v513, %v518
    %v523 = vrsqrt.pop %v492
    %v524 = vmul.f32 %v523, %v492
    %v525 = vmul.f32 %v524, %v523
    %v526 = vmul.f32 0.5, %v525
    %v527 = vsub.f32 1.5, %v526
    %v528 = vmul.f32 %v523, %v527
    %vm529 = vweird.f32 %v492
    %vm530 = vweird.f32 %v523
    %vm531 = vmor %vm529, %vm530
    %v532 = vsel %vm531, %v523, %v528
    %v533 = vmul.f32 %v465, %v502
    %v534 = vmul.f32 %v466, %v512
    %v535 = vmul.f32 %v467, %v522
    %v536 = vmul.f32 %v468, %v532
    %v538 = vperm.slane %v325, 0
    %v540 = vmul.f32 %v533, %v538
    %v541 = vmul.f32 %v534, %v538
    %v542 = vmul.f32 %v535, %v538
    %v543 = vmul.f32 %v536, %v538
    %v545 = vperm.slane %v326, 0
    %v547 = vadd.f32 %v540, %v545
    %v548 = vadd.f32 %v541, %v545
    %v549 = vadd.f32 %v542, %v545
    %v550 = vadd.f32 %v543, %v545
    %v551 = vpack.c.bf16 %v548, %v547
    %v552 = vpack.c.bf16 %v550, %v549
    %v554 = vperm.slane %v336, 0
    %v560 = vunpack.c.l.b16 %v332
    %v561 = vunpack.c.l.b16 %v333
    %v562 = vunpack.c.l.b16 %v334
    %v563 = vunpack.c.l.b16 %v335
    %v564 = vpack.c.b16 %v561, %v560
    %v565 = vpack.c.b16 %v563, %v562
    %v569 = vsel %vm354, %v551, 0
    %v572 = vsel %vm354, %v552, 0
    %574 = vmatpush.bf16.msra.mxu0 0
    %575 = vmatpush.bf16.msra.mxu0 0
    %576 = vmatpush.bf16.msra.mxu0 0
    %577 = vmatpush.bf16.msra.mxu0 0
    %578 = vmatpush.bf16.msra.mxu0 0
    %579 = vmatpush.bf16.msra.mxu0 0
    %580 = vmatpush.bf16.msra.mxu0 %v565
    %581 = vmatpush.bf16.msra.mxu0 %v564
    %582 = vmatmul.bf16.gmra.mxu0 %v569
    %v583 = vpop.f32.mrf.mxu0
    %v584 = vadd.f32 %v554, %v583
    %v585 = vpop.f32.mrf.mxu0
    %v586 = vadd.f32 %v554, %v585
    %587 = vmatmul.bf16.gmra.mxu0 %v572
    %v588 = vpop.f32.mrf.mxu0
    %v589 = vadd.f32 %v554, %v588
    %v590 = vpop.f32.mrf.mxu0
    %v591 = vadd.f32 %v554, %v590
    %592 = vdwg.mxu0
    %v593 = vpack.c.bf16 %v447, %v445
    %v594 = vpack.c.bf16 %v586, %v584
    %v595 = vpack.c.bf16 %v591, %v589
    %v597 = vsel %vm354, %v593, 0
    %v600 = vsel %vm354, %v594, 0
    %v603 = vsel %vm354, %v595, 0
    %605 = vmatpush.bf16.xpose.msra.mxu0 0
    %606 = vmatpush.bf16.xpose.msra.mxu0 0
    %607 = vmatpush.bf16.xpose.msra.mxu0 0
    %608 = vmatpush.bf16.xpose.msra.mxu0 0
    %609 = vmatpush.bf16.xpose.msra.mxu0 0
    %610 = vmatpush.bf16.xpose.msra.mxu0 0
    %611 = vmatpush.bf16.xpose.msra.mxu0 %v603
    %612 = vmatpush.bf16.xpose.msra.mxu0 %v600
    %613 = vmatmul.bf16.gmra.mxu0 %v597
    %v614 = vpop.f32.mrf.mxu0
    %v615 = vadd.f32 %v321, %v614
    %v616 = vpop.f32.mrf.mxu0
    %v617 = vadd.f32 %v322, %v616
    %618 = vdwg.mxu0
    %v619 = vsel %vm354, %v615, -inf
    %620 = vmax.xlane.f32.xlu0 %v619
    %v621 = vpop.xlane.xlu0 %620
    %v622 = vsel %vm354, %v617, -inf
    %623 = vmax.xlane.f32.xlu0 %v622
    %v624 = vpop.xlane.xlu0 %623
    %v625 = vsub.f32 %v615, %v621
    %v626 = vsub.f32 %v617, %v624
    %v627 = vmul.f32 %v625, 1.442695
    %v628 = vpow.pop %v627
    %v629 = vmul.f32 %v626, 1.442695
    %v630 = vpow.pop %v629
    %v631 = vsel %vm354, %v628, 0.0
    %632 = vadd.xlane.f32.xlu0 %v631
    %v633 = vpop.xlane.xlu0 %632
    %v634 = vsel %vm354, %v630, 0.0
    %635 = vadd.xlane.f32.xlu0 %v634
    %v636 = vpop.xlane.xlu0 %635
    %v637 = vpack.c.bf16 %v630, %v628
    %640 = vrot.lane.b32.xlu0 %v594, 96
    %v641 = vpop.permute.xlu0 %640
    %642 = vrot.lane.b32.xlu0 %v595, 96
    %v643 = vpop.permute.xlu0 %642
    %v647 = vsel %vm354, %v637, 0
    %649 = vmatpush.bf16.msra.mxu0 0
    %650 = vmatpush.bf16.msra.mxu0 0
    %651 = vmatpush.bf16.msra.mxu0 0
    %652 = vmatpush.bf16.msra.mxu0 0
    %653 = vmatpush.bf16.msra.mxu0 0
    %654 = vmatpush.bf16.msra.mxu0 0
    %655 = vmatpush.bf16.msra.mxu0 %v643
    %656 = vmatpush.bf16.msra.mxu0 %v641
    %657 = vmatmul.bf16.gmra.mxu0 %v647
    %v658 = vpop.f32.mrf.mxu0
    %v659 = vadd.f32 0.0, %v658
    %v660 = vpop.f32.mrf.mxu0
    %v661 = vadd.f32 0.0, %v660
    %662 = vdwg.mxu0
    %v663 = vrcp.pop %v633
    %v664 = vrcp.pop %v636
    %v665 = vmul.f32 %v659, %v663
    %v666 = vmul.f32 %v661, %v664
    %v667 = vpack.c.bf16 %v666, %v665
    %v669 = vperm.slane %v341, 0
    %v675 = vunpack.c.l.b16 %v337
    %v676 = vunpack.c.l.b16 %v338
    %v677 = vunpack.c.l.b16 %v339
    %v678 = vunpack.c.l.b16 %v340
    %v679 = vpack.c.b16 %v676, %v675
    %v680 = vpack.c.b16 %v678, %v677
    %v684 = vsel %vm354, %v667, 0
    %686 = vmatpush.bf16.msra.mxu0 0
    %687 = vmatpush.bf16.msra.mxu0 0
    %688 = vmatpush.bf16.msra.mxu0 0
    %689 = vmatpush.bf16.msra.mxu0 0
    %690 = vmatpush.bf16.msra.mxu0 0
    %691 = vmatpush.bf16.msra.mxu0 0
    %692 = vmatpush.bf16.msra.mxu0 %v680
    %693 = vmatpush.bf16.msra.mxu0 %v679
    %694 = vmatmul.bf16.gmra.mxu0 %v684
    %v695 = vpop.f32.mrf.mxu0
    %v696 = vadd.f32 %v669, %v695
    %v697 = vpop.f32.mrf.mxu0
    %v698 = vadd.f32 %v669, %v697
    %699 = vdwg.mxu0
    %v700 = vadd.f32 %v319, %v696
    %v701 = vadd.f32 %v320, %v698
    %v702 = vsel %vm354, %v700, 0.0
    %703 = vadd.xlane.f32.xlu0 %v702
    %v704 = vpop.xlane.xlu0 %703
    %v705 = vsel %vm354, %v701, 0.0
    %706 = vadd.xlane.f32.xlu0 %v705
    %v707 = vpop.xlane.xlu0 %706
    %v708 = vmul.f32 %v704, %v367
    %v709 = vmul.f32 %v707, %v367
    %v710 = vsub.f32 %v700, %v708
    %v711 = vsub.f32 %v701, %v709
    %v712 = vmul.f32 %v710, %v710
    %v713 = vmul.f32 %v711, %v711
    %v714 = vsel %vm354, %v712, 0.0
    %715 = vadd.xlane.f32.xlu0 %v714
    %v716 = vpop.xlane.xlu0 %715
    %v717 = vsel %vm354, %v713, 0.0
    %718 = vadd.xlane.f32.xlu0 %v717
    %v719 = vpop.xlane.xlu0 %718
    %v720 = vmul.f32 %v716, %v367
    %v721 = vmul.f32 %v719, %v367
    %v722 = vadd.f32 %v720, 1e-05
    %v723 = vadd.f32 %v721, 1e-05
    %v724 = vrsqrt.pop %v722
    %v725 = vmul.f32 %v724, %v722
    %v726 = vmul.f32 %v725, %v724
    %v727 = vmul.f32 0.5, %v726
    %v728 = vsub.f32 1.5, %v727
    %v729 = vmul.f32 %v724, %v728
    %vm730 = vweird.f32 %v722
    %vm731 = vweird.f32 %v724
    %vm732 = vmor %vm730, %vm731
    %v733 = vsel %vm732, %v724, %v729
    %v734 = vrsqrt.pop %v723
    %v735 = vmul.f32 %v734, %v723
    %v736 = vmul.f32 %v735, %v734
    %v737 = vmul.f32 0.5, %v736
    %v738 = vsub.f32 1.5, %v737
    %v739 = vmul.f32 %v734, %v738
    %vm740 = vweird.f32 %v723
    %vm741 = vweird.f32 %v734
    %vm742 = vmor %vm740, %vm741
    %v743 = vsel %vm742, %v734, %v739
    %v744 = vmul.f32 %v710, %v733
    %v745 = vmul.f32 %v711, %v743
    %v747 = vperm.slane %v342, 0
    %v749 = vmul.f32 %v744, %v747
    %v750 = vmul.f32 %v745, %v747
    %v752 = vperm.slane %v343, 0
    %v754 = vadd.f32 %v749, %v752
    %v755 = vadd.f32 %v750, %v752
    %v756 = vpack.c.bf16 %v755, %v754
    %v758 = vperm.slane %v348, 0
    %v764 = vunpack.c.l.b16 %v344
    %v765 = vunpack.c.l.b16 %v345
    %v766 = vunpack.c.l.b16 %v346
    %v767 = vunpack.c.l.b16 %v347
    %v768 = vpack.c.b16 %v765, %v764
    %v769 = vpack.c.b16 %v767, %v766
    %v773 = vsel %vm354, %v756, 0
    %775 = vmatpush.bf16.msra.mxu0 0
    %776 = vmatpush.bf16.msra.mxu0 0
    %777 = vmatpush.bf16.msra.mxu0 0
    %778 = vmatpush.bf16.msra.mxu0 0
    %779 = vmatpush.bf16.msra.mxu0 0
    %780 = vmatpush.bf16.msra.mxu0 0
    %781 = vmatpush.bf16.msra.mxu0 %v769
    %782 = vmatpush.bf16.msra.mxu0 %v768
    %783 = vmatmul.bf16.gmra.mxu0 %v773
    %v784 = vpop.f32.mrf.mxu0
    %v785 = vadd.f32 %v758, %v784
    %v786 = vpop.f32.mrf.mxu0
    %v787 = vadd.f32 %v758, %v786
    %788 = vdwg.mxu0
    %v789 = vmul.f32 %v785, %v785
    %v790 = vmul.f32 %v787, %v787
    %v791 = vmul.f32 %v785, %v789
    %v792 = vmul.f32 %v787, %v790
    %v793 = vmul.f32 %v791, 0.044715
    %v794 = vmul.f32 %v792, 0.044715
    %v795 = vadd.f32 %v785, %v793
    %v796 = vadd.f32 %v787, %v794
    %v797 = vmul.f32 %v795, 0.7978846
    %v798 = vmul.f32 %v796, 0.7978846
    %v799 = vtanh.pop %v797
    %v800 = vtanh.pop %v798
    %v801 = vadd.f32 %v799, 1.0
    %v802 = vadd.f32 %v800, 1.0
    %v803 = vmul.f32 %v801, 0.5
    %v804 = vmul.f32 %v802, 0.5
    %v805 = vmul.f32 %v785, %v803
    %v806 = vmul.f32 %v787, %v804
    %v807 = vpack.c.bf16 %v806, %v805
    %v809 = vperm.slane %v353, 0
    %v815 = vunpack.c.l.b16 %v349
    %v816 = vunpack.c.l.b16 %v350
    %v817 = vunpack.c.l.b16 %v351
    %v818 = vunpack.c.l.b16 %v352
    %v819 = vpack.c.b16 %v816, %v815
    %v820 = vpack.c.b16 %v818, %v817
    %v824 = vsel %vm354, %v807, 0
    %826 = vmatpush.bf16.msra.mxu0 0
    %827 = vmatpush.bf16.msra.mxu0 0
    %828 = vmatpush.bf16.msra.mxu0 0
    %829 = vmatpush.bf16.msra.mxu0 0
    %830 = vmatpush.bf16.msra.mxu0 0
    %831 = vmatpush.bf16.msra.mxu0 0
    %832 = vmatpush.bf16.msra.mxu0 %v820
    %833 = vmatpush.bf16.msra.mxu0 %v819
    %834 = vmatmul.bf16.gmra.mxu0 %v824
    %v835 = vpop.f32.mrf.mxu0
    %v836 = vadd.f32 %v809, %v835
    %v837 = vpop.f32.mrf.mxu0
    %v838 = vadd.f32 %v809, %v837
    %839 = vdwg.mxu0
    %v840 = vadd.f32 %v700, %v836
    %v841 = vadd.f32 %v701, %v838
    %v842 = vld [vmem:[%s19] sm:$0xf]
    %v843 = vld [vmem:[%s19 + $0x4] sm:$0xf]
    %v844 = vld [vmem:[%s19 + $0x8] sm:$0xf]
    %v845 = vld [vmem:[%s19 + $0xc] sm:$0xf]
    %v846 = vld [vmem:[%s21] sm:$0x1]
    %v847 = vpack.c.bf16 %v841, %v840
    %v849 = vperm.slane %v846, 0
    %v855 = vunpack.c.l.b16 %v842
    %v856 = vunpack.c.l.b16 %v843
    %v857 = vunpack.c.l.b16 %v844
    %v858 = vunpack.c.l.b16 %v845
    %v859 = vpack.c.b16 %v856, %v855
    %v860 = vpack.c.b16 %v858, %v857
    %v864 = vsel %vm354, %v847, 0
    %866 = vmatpush.bf16.msra.mxu0 0
    %867 = vmatpush.bf16.msra.mxu0 0
    %868 = vmatpush.bf16.msra.mxu0 0
    %869 = vmatpush.bf16.msra.mxu0 0
    %870 = vmatpush.bf16.msra.mxu0 0
    %871 = vmatpush.bf16.msra.mxu0 0
    %872 = vmatpush.bf16.msra.mxu0 %v860
    %873 = vmatpush.bf16.msra.mxu0 %v859
    %874 = vmatmul.bf16.gmra.mxu0 %v864
    %v875 = vpop.f32.mrf.mxu0
    %v876 = vadd.f32 %v849, %v875
    %v877 = vpop.f32.mrf.mxu0
    %v878 = vadd.f32 %v849, %v877
    %879 = vdwg.mxu0
    %880 = vst.msk [vmem:[#allocation2] sm:$0xff] %vm354, %v876
    %881 = vst.msk [vmem:[#allocation2 + $0x8] sm:$0xff] %vm354, %v878
    %v882 = vld [vmem:[%s11] sm:$0xff]
    %v883 = vld [vmem:[%s11 + $0x8] sm:$0xff]
    %v884 = vld [vmem:[%s55] sm:$0x1]
    %v885 = vld [vmem:[%s57] sm:$0x1]
    %v886 = vld [vmem:[%s59] sm:$0x1]
    %v887 = vld [vmem:[%s61] sm:$0x1]
    %v888 = vld [vmem:[%s63] sm:$0xf]
    %v889 = vld [vmem:[%s63 + $0x4] sm:$0xf]
    %v890 = vld [vmem:[%s63 + $0x8] sm:$0xf]
    %v891 = vld [vmem:[%s63 + $0xc] sm:$0xf]
    %v892 = vld [vmem:[%s65] sm:$0x1]
    %v893 = vld [vmem:[%s67] sm:$0xf]
    %v894 = vld [vmem:[%s67 + $0x4] sm:$0xf]
    %v895 = vld [vmem:[%s67 + $0x8] sm:$0xf]
    %v896 = vld [vmem:[%s67 + $0xc] sm:$0xf]
    %v897 = vld [vmem:[%s69] sm:$0x1]
    %v898 = vld [vmem:[%s71] sm:$0xf]
    %v899 = vld [vmem:[%s71 + $0x4] sm:$0xf]
    %v900 = vld [vmem:[%s71 + $0x8] sm:$0xf]
    %v901 = vld [vmem:[%s71 + $0xc] sm:$0xf]
    %v902 = vld [vmem:[%s73] sm:$0x1]
    %v903 = vld [vmem:[%s75] sm:$0x1]
    %v904 = vld [vmem:[%s77] sm:$0x1]
    %v905 = vld [vmem:[%s79] sm:$0xf]
    %v906 = vld [vmem:[%s79 + $0x4] sm:$0xf]
    %v907 = vld [vmem:[%s79 + $0x8] sm:$0xf]
    %v908 = vld [vmem:[%s79 + $0xc] sm:$0xf]
    %v909 = vld [vmem:[%s81] sm:$0x1]
    %v910 = vld [vmem:[%s83] sm:$0xf]
    %v911 = vld [vmem:[%s83 + $0x4] sm:$0xf]
    %v912 = vld [vmem:[%s83 + $0x8] sm:$0xf]
    %v913 = vld [vmem:[%s83 + $0xc] sm:$0xf]
    %v914 = vld [vmem:[%s85] sm:$0x1]
    %v915 = vsel %vm354, %v840, 0.0
    %916 = vadd.xlane.f32.xlu0 %v915
    %v917 = vpop.xlane.xlu0 %916
    %v918 = vsel %vm354, %v841, 0.0
    %919 = vadd.xlane.f32.xlu0 %v918
    %v920 = vpop.xlane.xlu0 %919
    %v921 = vmul.f32 %v917, %v367
    %v922 = vmul.f32 %v920, %v367
    %v923 = vsub.f32 %v840, %v921
    %v924 = vsub.f32 %v841, %v922
    %v925 = vmul.f32 %v923, %v923
    %v926 = vmul.f32 %v924, %v924
    %v927 = vsel %vm354, %v925, 0.0
    %928 = vadd.xlane.f32.xlu0 %v927
    %v929 = vpop.xlane.xlu0 %928
    %v930 = vsel %vm354, %v926, 0.0
    %931 = vadd.xlane.f32.xlu0 %v930
    %v932 = vpop.xlane.xlu0 %931
    %v933 = vmul.f32 %v929, %v367
    %v934 = vmul.f32 %v932, %v367
    %v935 = vadd.f32 %v933, 1e-05
    %v936 = vadd.f32 %v934, 1e-05
    %v937 = vrsqrt.pop %v935
    %v938 = vmul.f32 %v937, %v935
    %v939 = vmul.f32 %v938, %v937
    %v940 = vmul.f32 0.5, %v939
    %v941 = vsub.f32 1.5, %v940
    %v942 = vmul.f32 %v937, %v941
    %vm943 = vweird.f32 %v935
    %vm944 = vweird.f32 %v937
    %vm945 = vmor %vm943, %vm944
    %v946 = vsel %vm945, %v937, %v942
    %v947 = vrsqrt.pop %v936
    %v948 = vmul.f32 %v947, %v936
    %v949 = vmul.f32 %v948, %v947
    %v950 = vmul.f32 0.5, %v949
    %v951 = vsub.f32 1.5, %v950
    %v952 = vmul.f32 %v947, %v951
    %vm953 = vweird.f32 %v936
    %vm954 = vweird.f32 %v947
    %vm955 = vmor %vm953, %vm954
    %v956 = vsel %vm955, %v947, %v952
    %v957 = vmul.f32 %v923, %v946
    %v958 = vmul.f32 %v924, %v956
    %v960 = vperm.slane %v884, 0
    %v962 = vmul.f32 %v957, %v960
    %v963 = vmul.f32 %v958, %v960
    %v965 = vperm.slane %v885, 0
    %v967 = vadd.f32 %v962, %v965
    %v968 = vadd.f32 %v963, %v965
    %v969 = vpack.c.bf16 %v968, %v967
    %v971 = vperm.slane %v892, 0
    %v977 = vunpack.c.l.b16 %v888
    %v978 = vunpack.c.l.b16 %v889
    %v979 = vunpack.c.l.b16 %v890
    %v980 = vunpack.c.l.b16 %v891
    %v981 = vpack.c.b16 %v978, %v977
    %v982 = vpack.c.b16 %v980, %v979
    %v986 = vsel %vm354, %v969, 0
    %988 = vmatpush.bf16.msra.mxu0 0
    %989 = vmatpush.bf16.msra.mxu0 0
    %990 = vmatpush.bf16.msra.mxu0 0
    %991 = vmatpush.bf16.msra.mxu0 0
    %992 = vmatpush.bf16.msra.mxu0 0
    %993 = vmatpush.bf16.msra.mxu0 0
    %994 = vmatpush.bf16.msra.mxu0 %v982
    %995 = vmatpush.bf16.msra.mxu0 %v981
    %996 = vmatmul.bf16.gmra.mxu0 %v986
    %v997 = vpop.f32.mrf.mxu0
    %v998 = vadd.f32 %v971, %v997
    %v999 = vpop.f32.mrf.mxu0
    %v1000 = vadd.f32 %v971, %v999
    %1001 = vdwg.mxu0
    %v1003 = vperm.slane %v886, 0
    %v1005 = vmul.f32 %v957, %v1003
    %v1006 = vmul.f32 %v958, %v1003
    %v1008 = vperm.slane %v887, 0
    %v1010 = vadd.f32 %v1005, %v1008
    %v1011 = vadd.f32 %v1006, %v1008
    %v1012 = vpack.c.bf16 %v1011, %v1010
    %v1014 = vperm.slane %v897, 0
    %v1020 = vunpack.c.l.b16 %v893
    %v1021 = vunpack.c.l.b16 %v894
    %v1022 = vunpack.c.l.b16 %v895
    %v1023 = vunpack.c.l.b16 %v896
    %v1024 = vpack.c.b16 %v1021, %v1020
    %v1025 = vpack.c.b16 %v1023, %v1022
    %v1029 = vsel %vm354, %v1012, 0
    %1031 = vmatpush.bf16.msra.mxu0 0
    %1032 = vmatpush.bf16.msra.mxu0 0
    %1033 = vmatpush.bf16.msra.mxu0 0
    %1034 = vmatpush.bf16.msra.mxu0 0
    %1035 = vmatpush.bf16.msra.mxu0 0
    %1036 = vmatpush.bf16.msra.mxu0 0
    %1037 = vmatpush.bf16.msra.mxu0 %v1025
    %1038 = vmatpush.bf16.msra.mxu0 %v1024
    %1039 = vmatmul.bf16.gmra.mxu0 %v1029
    %v1040 = vpop.f32.mrf.mxu0
    %v1041 = vadd.f32 %v1014, %v1040
    %v1042 = vpop.f32.mrf.mxu0
    %v1043 = vadd.f32 %v1014, %v1042
    %1044 = vdwg.mxu0
    %v1045 = vpack.c.bf16 %v1000, %v998
    %v1046 = vpack.c.bf16 %v1043, %v1041
    %v1048 = vsel %vm354, %v1045, 0
    %v1051 = vsel %vm354, %v1046, 0
    %1053 = vmatpush.bf16.xpose.msra.mxu0 0
    %1054 = vmatpush.bf16.xpose.msra.mxu0 0
    %1055 = vmatpush.bf16.xpose.msra.mxu0 0
    %1056 = vmatpush.bf16.xpose.msra.mxu0 0
    %1057 = vmatpush.bf16.xpose.msra.mxu0 0
    %1058 = vmatpush.bf16.xpose.msra.mxu0 0
    %1059 = vmatpush.bf16.xpose.msra.mxu0 0
    %1060 = vmatpush.bf16.xpose.msra.mxu0 %v1051
    %1061 = vmatmul.bf16.gmra.mxu0 %v1048
    %v1062 = vpop.f32.mrf.mxu0
    %v1063 = vadd.f32 %v882, %v1062
    %v1064 = vpop.f32.mrf.mxu0
    %v1065 = vadd.f32 %v883, %v1064
    %1066 = vdwg.mxu0
    %v1067 = vsel %vm264, %v1063, -inf
    %1068 = vmax.xlane.f32.xlu0 %v1067
    %v1069 = vpop.xlane.xlu0 %1068
    %v1070 = vsel %vm264, %v1065, -inf
    %1071 = vmax.xlane.f32.xlu0 %v1070
    %v1072 = vpop.xlane.xlu0 %1071
    %v1073 = vsub.f32 %v1063, %v1069
    %v1074 = vsub.f32 %v1065, %v1072
    %v1075 = vmul.f32 %v1073, 1.442695
    %v1076 = vpow.pop %v1075
    %v1077 = vmul.f32 %v1074, 1.442695
    %v1078 = vpow.pop %v1077
    %v1079 = vsel %vm264, %v1076, 0.0
    %1080 = vadd.xlane.f32.xlu0 %v1079
    %v1081 = vpop.xlane.xlu0 %1080
    %v1082 = vsel %vm264, %v1078, 0.0
    %1083 = vadd.xlane.f32.xlu0 %v1082
    %v1084 = vpop.xlane.xlu0 %1083
    %v1085 = vpack.c.bf16 %v1078, %v1076
    %1087 = vrot.lane.b32.xlu0 %v1046, 96
    %v1088 = vpop.permute.xlu0 %1087
    %v1091 = vsel %vm264, %v1085, 0
    %1093 = vmatpush.bf16.msra.mxu0 0
    %1094 = vmatpush.bf16.msra.mxu0 0
    %1095 = vmatpush.bf16.msra.mxu0 0
    %1096 = vmatpush.bf16.msra.mxu0 0
    %1097 = vmatpush.bf16.msra.mxu0 0
    %1098 = vmatpush.bf16.msra.mxu0 0
    %1099 = vmatpush.bf16.msra.mxu0 0
    %1100 = vmatpush.bf16.msra.mxu0 %v1088
    %1101 = vmatmul.bf16.gmra.mxu0 %v1091
    %v1102 = vpop.f32.mrf.mxu0
    %v1103 = vadd.f32 0.0, %v1102
    %v1104 = vpop.f32.mrf.mxu0
    %v1105 = vadd.f32 0.0, %v1104
    %1106 = vdwg.mxu0
    %v1107 = vrcp.pop %v1081
    %v1108 = vrcp.pop %v1084
    %v1109 = vmul.f32 %v1103, %v1107
    %v1110 = vmul.f32 %v1105, %v1108
    %v1111 = vpack.c.bf16 %v1110, %v1109
    %v1113 = vperm.slane %v902, 0
    %v1119 = vunpack.c.l.b16 %v898
    %v1120 = vunpack.c.l.b16 %v899
    %v1121 = vunpack.c.l.b16 %v900
    %v1122 = vunpack.c.l.b16 %v901
    %v1123 = vpack.c.b16 %v1120, %v1119
    %v1124 = vpack.c.b16 %v1122, %v1121
    %v1128 = vsel %vm354, %v1111, 0
    %1130 = vmatpush.bf16.msra.mxu0 0
    %1131 = vmatpush.bf16.msra.mxu0 0
    %1132 = vmatpush.bf16.msra.mxu0 0
    %1133 = vmatpush.bf16.msra.mxu0 0
    %1134 = vmatpush.bf16.msra.mxu0 0
    %1135 = vmatpush.bf16.msra.mxu0 0
    %1136 = vmatpush.bf16.msra.mxu0 %v1124
    %1137 = vmatpush.bf16.msra.mxu0 %v1123
    %1138 = vmatmul.bf16.gmra.mxu0 %v1128
    %v1139 = vpop.f32.mrf.mxu0
    %v1140 = vadd.f32 %v1113, %v1139
    %v1141 = vpop.f32.mrf.mxu0
    %v1142 = vadd.f32 %v1113, %v1141
    %1143 = vdwg.mxu0
    %v1144 = vadd.f32 %v840, %v1140
    %v1145 = vadd.f32 %v841, %v1142
    %v1146 = vsel %vm354, %v1144, 0.0
    %1147 = vadd.xlane.f32.xlu0 %v1146
    %v1148 = vpop.xlane.xlu0 %1147
    %v1149 = vsel %vm354, %v1145, 0.0
    %1150 = vadd.xlane.f32.xlu0 %v1149
    %v1151 = vpop.xlane.xlu0 %1150
    %v1152 = vmul.f32 %v1148, %v367
    %v1153 = vmul.f32 %v1151, %v367
    %v1154 = vsub.f32 %v1144, %v1152
    %v1155 = vsub.f32 %v1145, %v1153
    %v1156 = vmul.f32 %v1154, %v1154
    %v1157 = vmul.f32 %v1155, %v1155
    %v1158 = vsel %vm354, %v1156, 0.0
    %1159 = vadd.xlane.f32.xlu0 %v1158
    %v1160 = vpop.xlane.xlu0 %1159
    %v1161 = vsel %vm354, %v1157, 0.0
    %1162 = vadd.xlane.f32.xlu0 %v1161
    %v1163 = vpop.xlane.xlu0 %1162
    %v1164 = vmul.f32 %v1160, %v367
    %v1165 = vmul.f32 %v1163, %v367
    %v1166 = vadd.f32 %v1164, 1e-05
    %v1167 = vadd.f32 %v1165, 1e-05
    %v1168 = vrsqrt.pop %v1166
    %v1169 = vmul.f32 %v1168, %v1166
    %v1170 = vmul.f32 %v1169, %v1168
    %v1171 = vmul.f32 0.5, %v1170
    %v1172 = vsub.f32 1.5, %v1171
    %v1173 = vmul.f32 %v1168, %v1172
    %vm1174 = vweird.f32 %v1166
    %vm1175 = vweird.f32 %v1168
    %vm1176 = vmor %vm1174, %vm1175
    %v1177 = vsel %vm1176, %v1168, %v1173
    %v1178 = vrsqrt.pop %v1167
    %v1179 = vmul.f32 %v1178, %v1167
    %v1180 = vmul.f32 %v1179, %v1178
    %v1181 = vmul.f32 0.5, %v1180
    %v1182 = vsub.f32 1.5, %v1181
    %v1183 = vmul.f32 %v1178, %v1182
    %vm1184 = vweird.f32 %v1167
    %vm1185 = vweird.f32 %v1178
    %vm1186 = vmor %vm1184, %vm1185
    %v1187 = vsel %vm1186, %v1178, %v1183
    %v1188 = vmul.f32 %v1154, %v1177
    %v1189 = vmul.f32 %v1155, %v1187
    %v1191 = vperm.slane %v903, 0
    %v1193 = vmul.f32 %v1188, %v1191
    %v1194 = vmul.f32 %v1189, %v1191
    %v1196 = vperm.slane %v904, 0
    %v1198 = vadd.f32 %v1193, %v1196
    %v1199 = vadd.f32 %v1194, %v1196
    %v1200 = vpack.c.bf16 %v1199, %v1198
    %v1202 = vperm.slane %v909, 0
    %v1208 = vunpack.c.l.b16 %v905
    %v1209 = vunpack.c.l.b16 %v906
    %v1210 = vunpack.c.l.b16 %v907
    %v1211 = vunpack.c.l.b16 %v908
    %v1212 = vpack.c.b16 %v1209, %v1208
    %v1213 = vpack.c.b16 %v1211, %v1210
    %v1217 = vsel %vm354, %v1200, 0
    %1219 = vmatpush.bf16.msra.mxu0 0
    %1220 = vmatpush.bf16.msra.mxu0 0
    %1221 = vmatpush.bf16.msra.mxu0 0
    %1222 = vmatpush.bf16.msra.mxu0 0
    %1223 = vmatpush.bf16.msra.mxu0 0
    %1224 = vmatpush.bf16.msra.mxu0 0
    %1225 = vmatpush.bf16.msra.mxu0 %v1213
    %1226 = vmatpush.bf16.msra.mxu0 %v1212
    %1227 = vmatmul.bf16.gmra.mxu0 %v1217
    %v1228 = vpop.f32.mrf.mxu0
    %v1229 = vadd.f32 %v1202, %v1228
    %v1230 = vpop.f32.mrf.mxu0
    %v1231 = vadd.f32 %v1202, %v1230
    %1232 = vdwg.mxu0
    %v1233 = vmul.f32 %v1229, %v1229
    %v1234 = vmul.f32 %v1231, %v1231
    %v1235 = vmul.f32 %v1229, %v1233
    %v1236 = vmul.f32 %v1231, %v1234
    %v1237 = vmul.f32 %v1235, 0.044715
    %v1238 = vmul.f32 %v1236, 0.044715
    %v1239 = vadd.f32 %v1229, %v1237
    %v1240 = vadd.f32 %v1231, %v1238
    %v1241 = vmul.f32 %v1239, 0.7978846
    %v1242 = vmul.f32 %v1240, 0.7978846
    %v1243 = vtanh.pop %v1241
    %v1244 = vtanh.pop %v1242
    %v1245 = vadd.f32 %v1243, 1.0
    %v1246 = vadd.f32 %v1244, 1.0
    %v1247 = vmul.f32 %v1245, 0.5
    %v1248 = vmul.f32 %v1246, 0.5
    %v1249 = vmul.f32 %v1229, %v1247
    %v1250 = vmul.f32 %v1231, %v1248
    %v1251 = vpack.c.bf16 %v1250, %v1249
    %v1253 = vperm.slane %v914, 0
    %v1259 = vunpack.c.l.b16 %v910
    %v1260 = vunpack.c.l.b16 %v911
    %v1261 = vunpack.c.l.b16 %v912
    %v1262 = vunpack.c.l.b16 %v913
    %v1263 = vpack.c.b16 %v1260, %v1259
    %v1264 = vpack.c.b16 %v1262, %v1261
    %v1268 = vsel %vm354, %v1251, 0
    %1270 = vmatpush.bf16.msra.mxu0 0
    %1271 = vmatpush.bf16.msra.mxu0 0
    %1272 = vmatpush.bf16.msra.mxu0 0
    %1273 = vmatpush.bf16.msra.mxu0 0
    %1274 = vmatpush.bf16.msra.mxu0 0
    %1275 = vmatpush.bf16.msra.mxu0 0
    %1276 = vmatpush.bf16.msra.mxu0 %v1264
    %1277 = vmatpush.bf16.msra.mxu0 %v1263
    %1278 = vmatmul.bf16.gmra.mxu0 %v1268
    %v1279 = vpop.f32.mrf.mxu0
    %v1280 = vadd.f32 %v1253, %v1279
    %v1281 = vpop.f32.mrf.mxu0
    %v1282 = vadd.f32 %v1253, %v1281
    %1283 = vdwg.mxu0
    %v1284 = vadd.f32 %v1144, %v1280
    %v1285 = vadd.f32 %v1145, %v1282
    %s1286 = scalar_lea.vmem %s55, 1
    %v1287 = vld [vmem:[%s1286] sm:$0x1]
    %s1288 = scalar_lea.vmem %s57, 1
    %v1289 = vld [vmem:[%s1288] sm:$0x1]
    %s1290 = scalar_lea.vmem %s59, 1
    %v1291 = vld [vmem:[%s1290] sm:$0x1]
    %s1292 = scalar_lea.vmem %s61, 1
    %v1293 = vld [vmem:[%s1292] sm:$0x1]
    %s1294 = scalar_lea.vmem %s63, 16
    %v1295 = vld [vmem:[%s1294] sm:$0xf]
    %v1296 = vld [vmem:[%s1294 + $0x4] sm:$0xf]
    %v1297 = vld [vmem:[%s1294 + $0x8] sm:$0xf]
    %v1298 = vld [vmem:[%s1294 + $0xc] sm:$0xf]
    %s1299 = scalar_lea.vmem %s65, 1
    %v1300 = vld [vmem:[%s1299] sm:$0x1]
    %s1301 = scalar_lea.vmem %s67, 16
    %v1302 = vld [vmem:[%s1301] sm:$0xf]
    %v1303 = vld [vmem:[%s1301 + $0x4] sm:$0xf]
    %v1304 = vld [vmem:[%s1301 + $0x8] sm:$0xf]
    %v1305 = vld [vmem:[%s1301 + $0xc] sm:$0xf]
    %s1306 = scalar_lea.vmem %s69, 1
    %v1307 = vld [vmem:[%s1306] sm:$0x1]
    %s1308 = scalar_lea.vmem %s71, 16
    %v1309 = vld [vmem:[%s1308] sm:$0xf]
    %v1310 = vld [vmem:[%s1308 + $0x4] sm:$0xf]
    %v1311 = vld [vmem:[%s1308 + $0x8] sm:$0xf]
    %v1312 = vld [vmem:[%s1308 + $0xc] sm:$0xf]
    %s1313 = scalar_lea.vmem %s73, 1
    %v1314 = vld [vmem:[%s1313] sm:$0x1]
    %s1315 = scalar_lea.vmem %s75, 1
    %v1316 = vld [vmem:[%s1315] sm:$0x1]
    %s1317 = scalar_lea.vmem %s77, 1
    %v1318 = vld [vmem:[%s1317] sm:$0x1]
    %s1319 = scalar_lea.vmem %s79, 16
    %v1320 = vld [vmem:[%s1319] sm:$0xf]
    %v1321 = vld [vmem:[%s1319 + $0x4] sm:$0xf]
    %v1322 = vld [vmem:[%s1319 + $0x8] sm:$0xf]
    %v1323 = vld [vmem:[%s1319 + $0xc] sm:$0xf]
    %s1324 = scalar_lea.vmem %s81, 1
    %v1325 = vld [vmem:[%s1324] sm:$0x1]
    %s1326 = scalar_lea.vmem %s83, 16
    %v1327 = vld [vmem:[%s1326] sm:$0xf]
    %v1328 = vld [vmem:[%s1326 + $0x4] sm:$0xf]
    %v1329 = vld [vmem:[%s1326 + $0x8] sm:$0xf]
    %v1330 = vld [vmem:[%s1326 + $0xc] sm:$0xf]
    %s1331 = scalar_lea.vmem %s85, 1
    %v1332 = vld [vmem:[%s1331] sm:$0x1]
    %v1333 = vsel %vm354, %v1284, 0.0
    %1334 = vadd.xlane.f32.xlu0 %v1333
    %v1335 = vpop.xlane.xlu0 %1334
    %v1336 = vsel %vm354, %v1285, 0.0
    %1337 = vadd.xlane.f32.xlu0 %v1336
    %v1338 = vpop.xlane.xlu0 %1337
    %v1339 = vmul.f32 %v1335, %v367
    %v1340 = vmul.f32 %v1338, %v367
    %v1341 = vsub.f32 %v1284, %v1339
    %v1342 = vsub.f32 %v1285, %v1340
    %v1343 = vmul.f32 %v1341, %v1341
    %v1344 = vmul.f32 %v1342, %v1342
    %v1345 = vsel %vm354, %v1343, 0.0
    %1346 = vadd.xlane.f32.xlu0 %v1345
    %v1347 = vpop.xlane.xlu0 %1346
    %v1348 = vsel %vm354, %v1344, 0.0
    %1349 = vadd.xlane.f32.xlu0 %v1348
    %v1350 = vpop.xlane.xlu0 %1349
    %v1351 = vmul.f32 %v1347, %v367
    %v1352 = vmul.f32 %v1350, %v367
    %v1353 = vadd.f32 %v1351, 1e-05
    %v1354 = vadd.f32 %v1352, 1e-05
    %v1355 = vrsqrt.pop %v1353
    %v1356 = vmul.f32 %v1355, %v1353
    %v1357 = vmul.f32 %v1356, %v1355
    %v1358 = vmul.f32 0.5, %v1357
    %v1359 = vsub.f32 1.5, %v1358
    %v1360 = vmul.f32 %v1355, %v1359
    %vm1361 = vweird.f32 %v1353
    %vm1362 = vweird.f32 %v1355
    %vm1363 = vmor %vm1361, %vm1362
    %v1364 = vsel %vm1363, %v1355, %v1360
    %v1365 = vrsqrt.pop %v1354
    %v1366 = vmul.f32 %v1365, %v1354
    %v1367 = vmul.f32 %v1366, %v1365
    %v1368 = vmul.f32 0.5, %v1367
    %v1369 = vsub.f32 1.5, %v1368
    %v1370 = vmul.f32 %v1365, %v1369
    %vm1371 = vweird.f32 %v1354
    %vm1372 = vweird.f32 %v1365
    %vm1373 = vmor %vm1371, %vm1372
    %v1374 = vsel %vm1373, %v1365, %v1370
    %v1375 = vmul.f32 %v1341, %v1364
    %v1376 = vmul.f32 %v1342, %v1374
    %v1378 = vperm.slane %v1287, 0
    %v1380 = vmul.f32 %v1375, %v1378
    %v1381 = vmul.f32 %v1376, %v1378
    %v1383 = vperm.slane %v1289, 0
    %v1385 = vadd.f32 %v1380, %v1383
    %v1386 = vadd.f32 %v1381, %v1383
    %v1387 = vpack.c.bf16 %v1386, %v1385
    %v1389 = vperm.slane %v1300, 0
    %v1395 = vunpack.c.l.b16 %v1295
    %v1396 = vunpack.c.l.b16 %v1296
    %v1397 = vunpack.c.l.b16 %v1297
    %v1398 = vunpack.c.l.b16 %v1298
    %v1399 = vpack.c.b16 %v1396, %v1395
    %v1400 = vpack.c.b16 %v1398, %v1397
    %v1404 = vsel %vm354, %v1387, 0
    %1406 = vmatpush.bf16.msra.mxu0 0
    %1407 = vmatpush.bf16.msra.mxu0 0
    %1408 = vmatpush.bf16.msra.mxu0 0
    %1409 = vmatpush.bf16.msra.mxu0 0
    %1410 = vmatpush.bf16.msra.mxu0 0
    %1411 = vmatpush.bf16.msra.mxu0 0
    %1412 = vmatpush.bf16.msra.mxu0 %v1400
    %1413 = vmatpush.bf16.msra.mxu0 %v1399
    %1414 = vmatmul.bf16.gmra.mxu0 %v1404
    %v1415 = vpop.f32.mrf.mxu0
    %v1416 = vadd.f32 %v1389, %v1415
    %v1417 = vpop.f32.mrf.mxu0
    %v1418 = vadd.f32 %v1389, %v1417
    %1419 = vdwg.mxu0
    %v1421 = vperm.slane %v1291, 0
    %v1423 = vmul.f32 %v1375, %v1421
    %v1424 = vmul.f32 %v1376, %v1421
    %v1426 = vperm.slane %v1293, 0
    %v1428 = vadd.f32 %v1423, %v1426
    %v1429 = vadd.f32 %v1424, %v1426
    %v1430 = vpack.c.bf16 %v1429, %v1428
    %v1432 = vperm.slane %v1307, 0
    %v1438 = vunpack.c.l.b16 %v1302
    %v1439 = vunpack.c.l.b16 %v1303
    %v1440 = vunpack.c.l.b16 %v1304
    %v1441 = vunpack.c.l.b16 %v1305
    %v1442 = vpack.c.b16 %v1439, %v1438
    %v1443 = vpack.c.b16 %v1441, %v1440
    %v1447 = vsel %vm354, %v1430, 0
    %1449 = vmatpush.bf16.msra.mxu0 0
    %1450 = vmatpush.bf16.msra.mxu0 0
    %1451 = vmatpush.bf16.msra.mxu0 0
    %1452 = vmatpush.bf16.msra.mxu0 0
    %1453 = vmatpush.bf16.msra.mxu0 0
    %1454 = vmatpush.bf16.msra.mxu0 0
    %1455 = vmatpush.bf16.msra.mxu0 %v1443
    %1456 = vmatpush.bf16.msra.mxu0 %v1442
    %1457 = vmatmul.bf16.gmra.mxu0 %v1447
    %v1458 = vpop.f32.mrf.mxu0
    %v1459 = vadd.f32 %v1432, %v1458
    %v1460 = vpop.f32.mrf.mxu0
    %v1461 = vadd.f32 %v1432, %v1460
    %1462 = vdwg.mxu0
    %v1463 = vpack.c.bf16 %v1418, %v1416
    %v1464 = vpack.c.bf16 %v1461, %v1459
    %v1466 = vsel %vm354, %v1463, 0
    %v1469 = vsel %vm354, %v1464, 0
    %1471 = vmatpush.bf16.xpose.msra.mxu0 0
    %1472 = vmatpush.bf16.xpose.msra.mxu0 0
    %1473 = vmatpush.bf16.xpose.msra.mxu0 0
    %1474 = vmatpush.bf16.xpose.msra.mxu0 0
    %1475 = vmatpush.bf16.xpose.msra.mxu0 0
    %1476 = vmatpush.bf16.xpose.msra.mxu0 0
    %1477 = vmatpush.bf16.xpose.msra.mxu0 0
    %1478 = vmatpush.bf16.xpose.msra.mxu0 %v1469
    %1479 = vmatmul.bf16.gmra.mxu0 %v1466
    %v1480 = vpop.f32.mrf.mxu0
    %v1481 = vadd.f32 %v882, %v1480
    %v1482 = vpop.f32.mrf.mxu0
    %v1483 = vadd.f32 %v883, %v1482
    %1484 = vdwg.mxu0
    %v1485 = vsel %vm264, %v1481, -inf
    %1486 = vmax.xlane.f32.xlu0 %v1485
    %v1487 = vpop.xlane.xlu0 %1486
    %v1488 = vsel %vm264, %v1483, -inf
    %1489 = vmax.xlane.f32.xlu0 %v1488
    %v1490 = vpop.xlane.xlu0 %1489
    %v1491 = vsub.f32 %v1481, %v1487
    %v1492 = vsub.f32 %v1483, %v1490
    %v1493 = vmul.f32 %v1491, 1.442695
    %v1494 = vpow.pop %v1493
    %v1495 = vmul.f32 %v1492, 1.442695
    %v1496 = vpow.pop %v1495
    %v1497 = vsel %vm264, %v1494, 0.0
    %1498 = vadd.xlane.f32.xlu0 %v1497
    %v1499 = vpop.xlane.xlu0 %1498
    %v1500 = vsel %vm264, %v1496, 0.0
    %1501 = vadd.xlane.f32.xlu0 %v1500
    %v1502 = vpop.xlane.xlu0 %1501
    %v1503 = vpack.c.bf16 %v1496, %v1494
    %1505 = vrot.lane.b32.xlu0 %v1464, 96
    %v1506 = vpop.permute.xlu0 %1505
    %v1509 = vsel %vm264, %v1503, 0
    %1511 = vmatpush.bf16.msra.mxu0 0
    %1512 = vmatpush.bf16.msra.mxu0 0
    %1513 = vmatpush.bf16.msra.mxu0 0
    %1514 = vmatpush.bf16.msra.mxu0 0
    %1515 = vmatpush.bf16.msra.mxu0 0
    %1516 = vmatpush.bf16.msra.mxu0 0
    %1517 = vmatpush.bf16.msra.mxu0 0
    %1518 = vmatpush.bf16.msra.mxu0 %v1506
    %1519 = vmatmul.bf16.gmra.mxu0 %v1509
    %v1520 = vpop.f32.mrf.mxu0
    %v1521 = vadd.f32 0.0, %v1520
    %v1522 = vpop.f32.mrf.mxu0
    %v1523 = vadd.f32 0.0, %v1522
    %1524 = vdwg.mxu0
    %v1525 = vrcp.pop %v1499
    %v1526 = vrcp.pop %v1502
    %v1527 = vmul.f32 %v1521, %v1525
    %v1528 = vmul.f32 %v1523, %v1526
    %v1529 = vpack.c.bf16 %v1528, %v1527
    %v1531 = vperm.slane %v1314, 0
    %v1537 = vunpack.c.l.b16 %v1309
    %v1538 = vunpack.c.l.b16 %v1310
    %v1539 = vunpack.c.l.b16 %v1311
    %v1540 = vunpack.c.l.b16 %v1312
    %v1541 = vpack.c.b16 %v1538, %v1537
    %v1542 = vpack.c.b16 %v1540, %v1539
    %v1546 = vsel %vm354, %v1529, 0
    %1548 = vmatpush.bf16.msra.mxu0 0
    %1549 = vmatpush.bf16.msra.mxu0 0
    %1550 = vmatpush.bf16.msra.mxu0 0
    %1551 = vmatpush.bf16.msra.mxu0 0
    %1552 = vmatpush.bf16.msra.mxu0 0
    %1553 = vmatpush.bf16.msra.mxu0 0
    %1554 = vmatpush.bf16.msra.mxu0 %v1542
    %1555 = vmatpush.bf16.msra.mxu0 %v1541
    %1556 = vmatmul.bf16.gmra.mxu0 %v1546
    %v1557 = vpop.f32.mrf.mxu0
    %v1558 = vadd.f32 %v1531, %v1557
    %v1559 = vpop.f32.mrf.mxu0
    %v1560 = vadd.f32 %v1531, %v1559
    %1561 = vdwg.mxu0
    %v1562 = vadd.f32 %v1284, %v1558
    %v1563 = vadd.f32 %v1285, %v1560
    %v1564 = vsel %vm354, %v1562, 0.0
    %1565 = vadd.xlane.f32.xlu0 %v1564
    %v1566 = vpop.xlane.xlu0 %1565
    %v1567 = vsel %vm354, %v1563, 0.0
    %1568 = vadd.xlane.f32.xlu0 %v1567
    %v1569 = vpop.xlane.xlu0 %1568
    %v1570 = vmul.f32 %v1566, %v367
    %v1571 = vmul.f32 %v1569, %v367
    %v1572 = vsub.f32 %v1562, %v1570
    %v1573 = vsub.f32 %v1563, %v1571
    %v1574 = vmul.f32 %v1572, %v1572
    %v1575 = vmul.f32 %v1573, %v1573
    %v1576 = vsel %vm354, %v1574, 0.0
    %1577 = vadd.xlane.f32.xlu0 %v1576
    %v1578 = vpop.xlane.xlu0 %1577
    %v1579 = vsel %vm354, %v1575, 0.0
    %1580 = vadd.xlane.f32.xlu0 %v1579
    %v1581 = vpop.xlane.xlu0 %1580
    %v1582 = vmul.f32 %v1578, %v367
    %v1583 = vmul.f32 %v1581, %v367
    %v1584 = vadd.f32 %v1582, 1e-05
    %v1585 = vadd.f32 %v1583, 1e-05
    %v1586 = vrsqrt.pop %v1584
    %v1587 = vmul.f32 %v1586, %v1584
    %v1588 = vmul.f32 %v1587, %v1586
    %v1589 = vmul.f32 0.5, %v1588
    %v1590 = vsub.f32 1.5, %v1589
    %v1591 = vmul.f32 %v1586, %v1590
    %vm1592 = vweird.f32 %v1584
    %vm1593 = vweird.f32 %v1586
    %vm1594 = vmor %vm1592, %vm1593
    %v1595 = vsel %vm1594, %v1586, %v1591
    %v1596 = vrsqrt.pop %v1585
    %v1597 = vmul.f32 %v1596, %v1585
    %v1598 = vmul.f32 %v1597, %v1596
    %v1599 = vmul.f32 0.5, %v1598
    %v1600 = vsub.f32 1.5, %v1599
    %v1601 = vmul.f32 %v1596, %v1600
    %vm1602 = vweird.f32 %v1585
    %vm1603 = vweird.f32 %v1596
    %vm1604 = vmor %vm1602, %vm1603
    %v1605 = vsel %vm1604, %v1596, %v1601
    %v1606 = vmul.f32 %v1572, %v1595
    %v1607 = vmul.f32 %v1573, %v1605
    %v1609 = vperm.slane %v1316, 0
    %v1611 = vmul.f32 %v1606, %v1609
    %v1612 = vmul.f32 %v1607, %v1609
    %v1614 = vperm.slane %v1318, 0
    %v1616 = vadd.f32 %v1611, %v1614
    %v1617 = vadd.f32 %v1612, %v1614
    %v1618 = vpack.c.bf16 %v1617, %v1616
    %v1620 = vperm.slane %v1325, 0
    %v1626 = vunpack.c.l.b16 %v1320
    %v1627 = vunpack.c.l.b16 %v1321
    %v1628 = vunpack.c.l.b16 %v1322
    %v1629 = vunpack.c.l.b16 %v1323
    %v1630 = vpack.c.b16 %v1627, %v1626
    %v1631 = vpack.c.b16 %v1629, %v1628
    %v1635 = vsel %vm354, %v1618, 0
    %1637 = vmatpush.bf16.msra.mxu0 0
    %1638 = vmatpush.bf16.msra.mxu0 0
    %1639 = vmatpush.bf16.msra.mxu0 0
    %1640 = vmatpush.bf16.msra.mxu0 0
    %1641 = vmatpush.bf16.msra.mxu0 0
    %1642 = vmatpush.bf16.msra.mxu0 0
    %1643 = vmatpush.bf16.msra.mxu0 %v1631
    %1644 = vmatpush.bf16.msra.mxu0 %v1630
    %1645 = vmatmul.bf16.gmra.mxu0 %v1635
    %v1646 = vpop.f32.mrf.mxu0
    %v1647 = vadd.f32 %v1620, %v1646
    %v1648 = vpop.f32.mrf.mxu0
    %v1649 = vadd.f32 %v1620, %v1648
    %1650 = vdwg.mxu0
    %v1651 = vmul.f32 %v1647, %v1647
    %v1652 = vmul.f32 %v1649, %v1649
    %v1653 = vmul.f32 %v1647, %v1651
    %v1654 = vmul.f32 %v1649, %v1652
    %v1655 = vmul.f32 %v1653, 0.044715
    %v1656 = vmul.f32 %v1654, 0.044715
    %v1657 = vadd.f32 %v1647, %v1655
    %v1658 = vadd.f32 %v1649, %v1656
    %v1659 = vmul.f32 %v1657, 0.7978846
    %v1660 = vmul.f32 %v1658, 0.7978846
    %v1661 = vtanh.pop %v1659
    %v1662 = vtanh.pop %v1660
    %v1663 = vadd.f32 %v1661, 1.0
    %v1664 = vadd.f32 %v1662, 1.0
    %v1665 = vmul.f32 %v1663, 0.5
    %v1666 = vmul.f32 %v1664, 0.5
    %v1667 = vmul.f32 %v1647, %v1665
    %v1668 = vmul.f32 %v1649, %v1666
    %v1669 = vpack.c.bf16 %v1668, %v1667
    %v1671 = vperm.slane %v1332, 0
    %v1677 = vunpack.c.l.b16 %v1327
    %v1678 = vunpack.c.l.b16 %v1328
    %v1679 = vunpack.c.l.b16 %v1329
    %v1680 = vunpack.c.l.b16 %v1330
    %v1681 = vpack.c.b16 %v1678, %v1677
    %v1682 = vpack.c.b16 %v1680, %v1679
    %v1686 = vsel %vm354, %v1669, 0
    %1688 = vmatpush.bf16.msra.mxu0 0
    %1689 = vmatpush.bf16.msra.mxu0 0
    %1690 = vmatpush.bf16.msra.mxu0 0
    %1691 = vmatpush.bf16.msra.mxu0 0
    %1692 = vmatpush.bf16.msra.mxu0 0
    %1693 = vmatpush.bf16.msra.mxu0 0
    %1694 = vmatpush.bf16.msra.mxu0 %v1682
    %1695 = vmatpush.bf16.msra.mxu0 %v1681
    %1696 = vmatmul.bf16.gmra.mxu0 %v1686
    %v1697 = vpop.f32.mrf.mxu0
    %v1698 = vadd.f32 %v1671, %v1697
    %v1699 = vpop.f32.mrf.mxu0
    %v1700 = vadd.f32 %v1671, %v1699
    %1701 = vdwg.mxu0
    %v1702 = vadd.f32 %v1562, %v1698
    %v1703 = vadd.f32 %v1563, %v1700
    %v1704 = vld [vmem:[%s13] sm:$0xff]
    %v1705 = vld [vmem:[%s13 + $0x8] sm:$0xff]
    %v1706 = vld [vmem:[%s13 + $0x10] sm:$0xff]
    %v1707 = vld [vmem:[%s87] sm:$0x1]
    %v1708 = vld [vmem:[%s89] sm:$0x1]
    %v1709 = vld [vmem:[%s91] sm:$0x1]
    %v1710 = vld [vmem:[%s93] sm:$0x1]
    %v1711 = vld [vmem:[%s95] sm:$0xf]
    %v1712 = vld [vmem:[%s95 + $0x4] sm:$0xf]
    %v1713 = vld [vmem:[%s95 + $0x8] sm:$0xf]
    %v1714 = vld [vmem:[%s95 + $0xc] sm:$0xf]
    %v1715 = vld [vmem:[%s97] sm:$0x1]
    %v1716 = vld [vmem:[%s99] sm:$0xf]
    %v1717 = vld [vmem:[%s99 + $0x4] sm:$0xf]
    %v1718 = vld [vmem:[%s99 + $0x8] sm:$0xf]
    %v1719 = vld [vmem:[%s99 + $0xc] sm:$0xf]
    %v1720 = vld [vmem:[%s101] sm:$0x1]
    %v1721 = vld [vmem:[%s103] sm:$0xf]
    %v1722 = vld [vmem:[%s103 + $0x4] sm:$0xf]
    %v1723 = vld [vmem:[%s103 + $0x8] sm:$0xf]
    %v1724 = vld [vmem:[%s103 + $0xc] sm:$0xf]
    %v1725 = vld [vmem:[%s105] sm:$0x1]
    %v1726 = vld [vmem:[%s107] sm:$0x1]
    %v1727 = vld [vmem:[%s109] sm:$0x1]
    %v1728 = vld [vmem:[%s111] sm:$0xf]
    %v1729 = vld [vmem:[%s111 + $0x4] sm:$0xf]
    %v1730 = vld [vmem:[%s111 + $0x8] sm:$0xf]
    %v1731 = vld [vmem:[%s111 + $0xc] sm:$0xf]
    %v1732 = vld [vmem:[%s113] sm:$0x1]
    %v1733 = vld [vmem:[%s115] sm:$0xf]
    %v1734 = vld [vmem:[%s115 + $0x4] sm:$0xf]
    %v1735 = vld [vmem:[%s115 + $0x8] sm:$0xf]
    %v1736 = vld [vmem:[%s115 + $0xc] sm:$0xf]
    %v1737 = vld [vmem:[%s117] sm:$0x1]
    %v1738 = vsel %vm354, %v310, 0.0
    %1739 = vadd.xlane.f32.xlu0 %v1738
    %v1740 = vpop.xlane.xlu0 %1739
    %v1741 = vsel %vm354, %v312, 0.0
    %1742 = vadd.xlane.f32.xlu0 %v1741
    %v1743 = vpop.xlane.xlu0 %1742
    %v1744 = vsel %vm354, %v315, 0.0
    %1745 = vadd.xlane.f32.xlu0 %v1744
    %v1746 = vpop.xlane.xlu0 %1745
    %v1747 = vmul.f32 %v1740, %v367
    %v1748 = vmul.f32 %v1743, %v367
    %v1749 = vmul.f32 %v1746, %v367
    %v1750 = vsub.f32 %v310, %v1747
    %v1751 = vsub.f32 %v312, %v1748
    %v1752 = vsub.f32 %v315, %v1749
    %v1753 = vmul.f32 %v1750, %v1750
    %v1754 = vmul.f32 %v1751, %v1751
    %v1755 = vmul.f32 %v1752, %v1752
    %v1756 = vsel %vm354, %v1753, 0.0
    %1757 = vadd.xlane.f32.xlu0 %v1756
    %v1758 = vpop.xlane.xlu0 %1757
    %v1759 = vsel %vm354, %v1754, 0.0
    %1760 = vadd.xlane.f32.xlu0 %v1759
    %v1761 = vpop.xlane.xlu0 %1760
    %v1762 = vsel %vm354, %v1755, 0.0
    %1763 = vadd.xlane.f32.xlu0 %v1762
    %v1764 = vpop.xlane.xlu0 %1763
    %v1765 = vmul.f32 %v1758, %v367
    %v1766 = vmul.f32 %v1761, %v367
    %v1767 = vmul.f32 %v1764, %v367
    %v1768 = vadd.f32 %v1765, 1e-05
    %v1769 = vadd.f32 %v1766, 1e-05
    %v1770 = vadd.f32 %v1767, 1e-05
    %v1771 = vrsqrt.pop %v1768
    %v1772 = vmul.f32 %v1771, %v1768
    %v1773 = vmul.f32 %v1772, %v1771
    %v1774 = vmul.f32 0.5, %v1773
    %v1775 = vsub.f32 1.5, %v1774
    %v1776 = vmul.f32 %v1771, %v1775
    %vm1777 = vweird.f32 %v1768
    %vm1778 = vweird.f32 %v1771
    %vm1779 = vmor %vm1777, %vm1778
    %v1780 = vsel %vm1779, %v1771, %v1776
    %v1781 = vrsqrt.pop %v1769
    %v1782 = vmul.f32 %v1781, %v1769
    %v1783 = vmul.f32 %v1782, %v1781
    %v1784 = vmul.f32 0.5, %v1783
    %v1785 = vsub.f32 1.5, %v1784
    %v1786 = vmul.f32 %v1781, %v1785
    %vm1787 = vweird.f32 %v1769
    %vm1788 = vweird.f32 %v1781
    %vm1789 = vmor %vm1787, %vm1788
    %v1790 = vsel %vm1789, %v1781, %v1786
    %v1791 = vrsqrt.pop %v1770
    %v1792 = vmul.f32 %v1791, %v1770
    %v1793 = vmul.f32 %v1792, %v1791
    %v1794 = vmul.f32 0.5, %v1793
    %v1795 = vsub.f32 1.5, %v1794
    %v1796 = vmul.f32 %v1791, %v1795
    %vm1797 = vweird.f32 %v1770
    %vm1798 = vweird.f32 %v1791
    %vm1799 = vmor %vm1797, %vm1798
    %v1800 = vsel %vm1799, %v1791, %v1796
    %v1801 = vmul.f32 %v1750, %v1780
    %v1802 = vmul.f32 %v1751, %v1790
    %v1803 = vmul.f32 %v1752, %v1800
    %v1805 = vperm.slane %v1707, 0
    %v1807 = vmul.f32 %v1801, %v1805
    %v1808 = vmul.f32 %v1802, %v1805
    %v1809 = vmul.f32 %v1803, %v1805
    %v1811 = vperm.slane %v1708, 0
    %v1813 = vadd.f32 %v1807, %v1811
    %v1814 = vadd.f32 %v1808, %v1811
    %v1815 = vadd.f32 %v1809, %v1811
    %v1816 = vpack.c.bf16 %v1814, %v1813
    %v1817 = vpack.c.bf16 %v1815, %v1815
    %v1819 = vperm.slane %v1715, 0
    %v1825 = vunpack.c.l.b16 %v1711
    %v1826 = vunpack.c.l.b16 %v1712
    %v1827 = vunpack.c.l.b16 %v1713
    %v1828 = vunpack.c.l.b16 %v1714
    %v1829 = vpack.c.b16 %v1826, %v1825
    %v1830 = vpack.c.b16 %v1828, %v1827
    %v1834 = vsel %vm354, %v1816, 0
    %v1837 = vsel %vm354, %v1817, 0
    %1839 = vmatpush.bf16.msra.mxu0 0
    %1840 = vmatpush.bf16.msra.mxu0 0
    %1841 = vmatpush.bf16.msra.mxu0 0
    %1842 = vmatpush.bf16.msra.mxu0 0
    %1843 = vmatpush.bf16.msra.mxu0 0
    %1844 = vmatpush.bf16.msra.mxu0 0
    %1845 = vmatpush.bf16.msra.mxu0 %v1830
    %1846 = vmatpush.bf16.msra.mxu0 %v1829
    %1847 = vmatmul.bf16.gmra.mxu0 %v1834
    %v1848 = vpop.f32.mrf.mxu0
    %v1849 = vadd.f32 %v1819, %v1848
    %v1850 = vpop.f32.mrf.mxu0
    %v1851 = vadd.f32 %v1819, %v1850
    %1852 = vmatmul.bf16.gmra.mxu0 %v1837
    %v1853 = vpop.f32.mrf.mxu0
    %v1854 = vadd.f32 %v1819, %v1853
    %v1855 = vpop.f32.mrf.mxu0
    %1856 = vdwg.mxu0
    %v1857 = vsel %vm354, %v1702, 0.0
    %1858 = vadd.xlane.f32.xlu0 %v1857
    %v1859 = vpop.xlane.xlu0 %1858
    %v1860 = vsel %vm354, %v1703, 0.0
    %1861 = vadd.xlane.f32.xlu0 %v1860
    %v1862 = vpop.xlane.xlu0 %1861
    %v1863 = vmul.f32 %v1859, %v367
    %v1864 = vmul.f32 %v1862, %v367
    %v1865 = vsub.f32 %v1702, %v1863
    %v1866 = vsub.f32 %v1703, %v1864
    %v1867 = vmul.f32 %v1865, %v1865
    %v1868 = vmul.f32 %v1866, %v1866
    %v1869 = vsel %vm354, %v1867, 0.0
    %1870 = vadd.xlane.f32.xlu0 %v1869
    %v1871 = vpop.xlane.xlu0 %1870
    %v1872 = vsel %vm354, %v1868, 0.0
    %1873 = vadd.xlane.f32.xlu0 %v1872
    %v1874 = vpop.xlane.xlu0 %1873
    %v1875 = vmul.f32 %v1871, %v367
    %v1876 = vmul.f32 %v1874, %v367
    %v1877 = vadd.f32 %v1875, 1e-05
    %v1878 = vadd.f32 %v1876, 1e-05
    %v1879 = vrsqrt.pop %v1877
    %v1880 = vmul.f32 %v1879, %v1877
    %v1881 = vmul.f32 %v1880, %v1879
    %v1882 = vmul.f32 0.5, %v1881
    %v1883 = vsub.f32 1.5, %v1882
    %v1884 = vmul.f32 %v1879, %v1883
    %vm1885 = vweird.f32 %v1877
    %vm1886 = vweird.f32 %v1879
    %vm1887 = vmor %vm1885, %vm1886
    %v1888 = vsel %vm1887, %v1879, %v1884
    %v1889 = vrsqrt.pop %v1878
    %v1890 = vmul.f32 %v1889, %v1878
    %v1891 = vmul.f32 %v1890, %v1889
    %v1892 = vmul.f32 0.5, %v1891
    %v1893 = vsub.f32 1.5, %v1892
    %v1894 = vmul.f32 %v1889, %v1893
    %vm1895 = vweird.f32 %v1878
    %vm1896 = vweird.f32 %v1889
    %vm1897 = vmor %vm1895, %vm1896
    %v1898 = vsel %vm1897, %v1889, %v1894
    %v1899 = vmul.f32 %v1865, %v1888
    %v1900 = vmul.f32 %v1866, %v1898
    %v1902 = vperm.slane %v1709, 0
    %v1904 = vmul.f32 %v1899, %v1902
    %v1905 = vmul.f32 %v1900, %v1902
    %v1907 = vperm.slane %v1710, 0
    %v1909 = vadd.f32 %v1904, %v1907
    %v1910 = vadd.f32 %v1905, %v1907
    %v1911 = vpack.c.bf16 %v1910, %v1909
    %v1913 = vperm.slane %v1720, 0
    %v1919 = vunpack.c.l.b16 %v1716
    %v1920 = vunpack.c.l.b16 %v1717
    %v1921 = vunpack.c.l.b16 %v1718
    %v1922 = vunpack.c.l.b16 %v1719
    %v1923 = vpack.c.b16 %v1920, %v1919
    %v1924 = vpack.c.b16 %v1922, %v1921
    %v1928 = vsel %vm354, %v1911, 0
    %1930 = vmatpush.bf16.msra.mxu0 0
    %1931 = vmatpush.bf16.msra.mxu0 0
    %1932 = vmatpush.bf16.msra.mxu0 0
    %1933 = vmatpush.bf16.msra.mxu0 0
    %1934 = vmatpush.bf16.msra.mxu0 0
    %1935 = vmatpush.bf16.msra.mxu0 0
    %1936 = vmatpush.bf16.msra.mxu0 %v1924
    %1937 = vmatpush.bf16.msra.mxu0 %v1923
    %1938 = vmatmul.bf16.gmra.mxu0 %v1928
    %v1939 = vpop.f32.mrf.mxu0
    %v1940 = vadd.f32 %v1913, %v1939
    %v1941 = vpop.f32.mrf.mxu0
    %v1942 = vadd.f32 %v1913, %v1941
    %1943 = vdwg.mxu0
    %v1944 = vpack.c.bf16 %v1851, %v1849
    %v1945 = vpack.c.bf16 %v1854, %v1854
    %v1946 = vpack.c.bf16 %v1942, %v1940
    %v1948 = vsel %vm354, %v1944, 0
    %v1951 = vsel %vm354, %v1945, 0
    %v1954 = vsel %vm354, %v1946, 0
    %1956 = vmatpush.bf16.xpose.msra.mxu0 0
    %1957 = vmatpush.bf16.xpose.msra.mxu0 0
    %1958 = vmatpush.bf16.xpose.msra.mxu0 0
    %1959 = vmatpush.bf16.xpose.msra.mxu0 0
    %1960 = vmatpush.bf16.xpose.msra.mxu0 0
    %1961 = vmatpush.bf16.xpose.msra.mxu0 0
    %1962 = vmatpush.bf16.xpose.msra.mxu0 0
    %1963 = vmatpush.bf16.xpose.msra.mxu0 %v1954
    %1964 = vmatmul.bf16.gmra.mxu0 %v1948
    %v1965 = vpop.f32.mrf.mxu0
    %v1966 = vadd.f32 %v1704, %v1965
    %v1967 = vpop.f32.mrf.mxu0
    %v1968 = vadd.f32 %v1705, %v1967
    %1969 = vmatmul.bf16.gmra.mxu0 %v1951
    %v1970 = vpop.f32.mrf.mxu0
    %v1971 = vadd.f32 %v1706, %v1970
    %v1972 = vpop.f32.mrf.mxu0
    %1973 = vdwg.mxu0
    %v1974 = vsel %vm264, %v1966, -inf
    %1975 = vmax.xlane.f32.xlu0 %v1974
    %v1976 = vpop.xlane.xlu0 %1975
    %v1977 = vsel %vm264, %v1968, -inf
    %1978 = vmax.xlane.f32.xlu0 %v1977
    %v1979 = vpop.xlane.xlu0 %1978
    %v1980 = vsel %vm264, %v1971, -inf
    %1981 = vmax.xlane.f32.xlu0 %v1980
    %v1982 = vpop.xlane.xlu0 %1981
    %v1983 = vsub.f32 %v1966, %v1976
    %v1984 = vsub.f32 %v1968, %v1979
    %v1985 = vsub.f32 %v1971, %v1982
    %v1986 = vmul.f32 %v1983, 1.442695
    %v1987 = vpow.pop %v1986
    %v1988 = vmul.f32 %v1984, 1.442695
    %v1989 = vpow.pop %v1988
    %v1990 = vmul.f32 %v1985, 1.442695
    %v1991 = vpow.pop %v1990
    %v1992 = vsel %vm264, %v1987, 0.0
    %1993 = vadd.xlane.f32.xlu0 %v1992
    %v1994 = vpop.xlane.xlu0 %1993
    %v1995 = vsel %vm264, %v1989, 0.0
    %1996 = vadd.xlane.f32.xlu0 %v1995
    %v1997 = vpop.xlane.xlu0 %1996
    %v1998 = vsel %vm264, %v1991, 0.0
    %1999 = vadd.xlane.f32.xlu0 %v1998
    %v2000 = vpop.xlane.xlu0 %1999
    %v2001 = vpack.c.bf16 %v1989, %v1987
    %v2002 = vpack.c.bf16 %v1991, %v1991
    %2004 = vrot.lane.b32.xlu0 %v1946, 96
    %v2005 = vpop.permute.xlu0 %2004
    %v2008 = vsel %vm264, %v2001, 0
    %v2011 = vsel %vm264, %v2002, 0
    %2013 = vmatpush.bf16.msra.mxu0 0
    %2014 = vmatpush.bf16.msra.mxu0 0
    %2015 = vmatpush.bf16.msra.mxu0 0
    %2016 = vmatpush.bf16.msra.mxu0 0
    %2017 = vmatpush.bf16.msra.mxu0 0
    %2018 = vmatpush.bf16.msra.mxu0 0
    %2019 = vmatpush.bf16.msra.mxu0 0
    %2020 = vmatpush.bf16.msra.mxu0 %v2005
    %2021 = vmatmul.bf16.gmra.mxu0 %v2008
    %v2022 = vpop.f32.mrf.mxu0
    %v2023 = vadd.f32 0.0, %v2022
    %v2024 = vpop.f32.mrf.mxu0
    %v2025 = vadd.f32 0.0, %v2024
    %2026 = vmatmul.bf16.gmra.mxu0 %v2011
    %v2027 = vpop.f32.mrf.mxu0
    %v2028 = vadd.f32 0.0, %v2027
    %v2029 = vpop.f32.mrf.mxu0
    %2030 = vdwg.mxu0
    %v2031 = vrcp.pop %v1994
    %v2032 = vrcp.pop %v1997
    %v2033 = vrcp.pop %v2000
    %v2034 = vmul.f32 %v2023, %v2031
    %v2035 = vmul.f32 %v2025, %v2032
    %v2036 = vmul.f32 %v2028, %v2033
    %v2037 = vpack.c.bf16 %v2035, %v2034
    %v2038 = vpack.c.bf16 %v2036, %v2036
    %v2040 = vperm.slane %v1725, 0
    %v2046 = vunpack.c.l.b16 %v1721
    %v2047 = vunpack.c.l.b16 %v1722
    %v2048 = vunpack.c.l.b16 %v1723
    %v2049 = vunpack.c.l.b16 %v1724
    %v2050 = vpack.c.b16 %v2047, %v2046
    %v2051 = vpack.c.b16 %v2049, %v2048
    %v2055 = vsel %vm354, %v2037, 0
    %v2058 = vsel %vm354, %v2038, 0
    %2060 = vmatpush.bf16.msra.mxu0 0
    %2061 = vmatpush.bf16.msra.mxu0 0
    %2062 = vmatpush.bf16.msra.mxu0 0
    %2063 = vmatpush.bf16.msra.mxu0 0
    %2064 = vmatpush.bf16.msra.mxu0 0
    %2065 = vmatpush.bf16.msra.mxu0 0
    %2066 = vmatpush.bf16.msra.mxu0 %v2051
    %2067 = vmatpush.bf16.msra.mxu0 %v2050
    %2068 = vmatmul.bf16.gmra.mxu0 %v2055
    %v2069 = vpop.f32.mrf.mxu0
    %v2070 = vadd.f32 %v2040, %v2069
    %v2071 = vpop.f32.mrf.mxu0
    %v2072 = vadd.f32 %v2040, %v2071
    %2073 = vmatmul.bf16.gmra.mxu0 %v2058
    %v2074 = vpop.f32.mrf.mxu0
    %v2075 = vadd.f32 %v2040, %v2074
    %v2076 = vpop.f32.mrf.mxu0
    %2077 = vdwg.mxu0
    %v2078 = vadd.f32 %v310, %v2070
    %v2079 = vadd.f32 %v312, %v2072
    %v2080 = vadd.f32 %v315, %v2075
    %v2081 = vsel %vm354, %v2078, 0.0
    %2082 = vadd.xlane.f32.xlu0 %v2081
    %v2083 = vpop.xlane.xlu0 %2082
    %v2084 = vsel %vm354, %v2079, 0.0
    %2085 = vadd.xlane.f32.xlu0 %v2084
    %v2086 = vpop.xlane.xlu0 %2085
    %v2087 = vsel %vm354, %v2080, 0.0
    %2088 = vadd.xlane.f32.xlu0 %v2087
    %v2089 = vpop.xlane.xlu0 %2088
    %v2090 = vmul.f32 %v2083, %v367
    %v2091 = vmul.f32 %v2086, %v367
    %v2092 = vmul.f32 %v2089, %v367
    %v2093 = vsub.f32 %v2078, %v2090
    %v2094 = vsub.f32 %v2079, %v2091
    %v2095 = vsub.f32 %v2080, %v2092
    %v2096 = vmul.f32 %v2093, %v2093
    %v2097 = vmul.f32 %v2094, %v2094
    %v2098 = vmul.f32 %v2095, %v2095
    %v2099 = vsel %vm354, %v2096, 0.0
    %2100 = vadd.xlane.f32.xlu0 %v2099
    %v2101 = vpop.xlane.xlu0 %2100
    %v2102 = vsel %vm354, %v2097, 0.0
    %2103 = vadd.xlane.f32.xlu0 %v2102
    %v2104 = vpop.xlane.xlu0 %2103
    %v2105 = vsel %vm354, %v2098, 0.0
    %2106 = vadd.xlane.f32.xlu0 %v2105
    %v2107 = vpop.xlane.xlu0 %2106
    %v2108 = vmul.f32 %v2101, %v367
    %v2109 = vmul.f32 %v2104, %v367
    %v2110 = vmul.f32 %v2107, %v367
    %v2111 = vadd.f32 %v2108, 1e-05
    %v2112 = vadd.f32 %v2109, 1e-05
    %v2113 = vadd.f32 %v2110, 1e-05
    %v2114 = vrsqrt.pop %v2111
    %v2115 = vmul.f32 %v2114, %v2111
    %v2116 = vmul.f32 %v2115, %v2114
    %v2117 = vmul.f32 0.5, %v2116
    %v2118 = vsub.f32 1.5, %v2117
    %v2119 = vmul.f32 %v2114, %v2118
    %vm2120 = vweird.f32 %v2111
    %vm2121 = vweird.f32 %v2114
    %vm2122 = vmor %vm2120, %vm2121
    %v2123 = vsel %vm2122, %v2114, %v2119
    %v2124 = vrsqrt.pop %v2112
    %v2125 = vmul.f32 %v2124, %v2112
    %v2126 = vmul.f32 %v2125, %v2124
    %v2127 = vmul.f32 0.5, %v2126
    %v2128 = vsub.f32 1.5, %v2127
    %v2129 = vmul.f32 %v2124, %v2128
    %vm2130 = vweird.f32 %v2112
    %vm2131 = vweird.f32 %v2124
    %vm2132 = vmor %vm2130, %vm2131
    %v2133 = vsel %vm2132, %v2124, %v2129
    %v2134 = vrsqrt.pop %v2113
    %v2135 = vmul.f32 %v2134, %v2113
    %v2136 = vmul.f32 %v2135, %v2134
    %v2137 = vmul.f32 0.5, %v2136
    %v2138 = vsub.f32 1.5, %v2137
    %v2139 = vmul.f32 %v2134, %v2138
    %vm2140 = vweird.f32 %v2113
    %vm2141 = vweird.f32 %v2134
    %vm2142 = vmor %vm2140, %vm2141
    %v2143 = vsel %vm2142, %v2134, %v2139
    %v2144 = vmul.f32 %v2093, %v2123
    %v2145 = vmul.f32 %v2094, %v2133
    %v2146 = vmul.f32 %v2095, %v2143
    %v2148 = vperm.slane %v1726, 0
    %v2150 = vmul.f32 %v2144, %v2148
    %v2151 = vmul.f32 %v2145, %v2148
    %v2152 = vmul.f32 %v2146, %v2148
    %v2154 = vperm.slane %v1727, 0
    %v2156 = vadd.f32 %v2150, %v2154
    %v2157 = vadd.f32 %v2151, %v2154
    %v2158 = vadd.f32 %v2152, %v2154
    %v2159 = vpack.c.bf16 %v2157, %v2156
    %v2160 = vpack.c.bf16 %v2158, %v2158
    %v2162 = vperm.slane %v1732, 0
    %v2168 = vunpack.c.l.b16 %v1728
    %v2169 = vunpack.c.l.b16 %v1729
    %v2170 = vunpack.c.l.b16 %v1730
    %v2171 = vunpack.c.l.b16 %v1731
    %v2172 = vpack.c.b16 %v2169, %v2168
    %v2173 = vpack.c.b16 %v2171, %v2170
    %v2177 = vsel %vm354, %v2159, 0
    %v2180 = vsel %vm354, %v2160, 0
    %2182 = vmatpush.bf16.msra.mxu0 0
    %2183 = vmatpush.bf16.msra.mxu0 0
    %2184 = vmatpush.bf16.msra.mxu0 0
    %2185 = vmatpush.bf16.msra.mxu0 0
    %2186 = vmatpush.bf16.msra.mxu0 0
    %2187 = vmatpush.bf16.msra.mxu0 0
    %2188 = vmatpush.bf16.msra.mxu0 %v2173
    %2189 = vmatpush.bf16.msra.mxu0 %v2172
    %2190 = vmatmul.bf16.gmra.mxu0 %v2177
    %v2191 = vpop.f32.mrf.mxu0
    %v2192 = vadd.f32 %v2162, %v2191
    %v2193 = vpop.f32.mrf.mxu0
    %v2194 = vadd.f32 %v2162, %v2193
    %2195 = vmatmul.bf16.gmra.mxu0 %v2180
    %v2196 = vpop.f32.mrf.mxu0
    %v2197 = vadd.f32 %v2162, %v2196
    %v2198 = vpop.f32.mrf.mxu0
    %2199 = vdwg.mxu0
    %v2200 = vmul.f32 %v2192, %v2192
    %v2201 = vmul.f32 %v2194, %v2194
    %v2202 = vmul.f32 %v2197, %v2197
    %v2203 = vmul.f32 %v2192, %v2200
    %v2204 = vmul.f32 %v2194, %v2201
    %v2205 = vmul.f32 %v2197, %v2202
    %v2206 = vmul.f32 %v2203, 0.044715
    %v2207 = vmul.f32 %v2204, 0.044715
    %v2208 = vmul.f32 %v2205, 0.044715
    %v2209 = vadd.f32 %v2192, %v2206
    %v2210 = vadd.f32 %v2194, %v2207
    %v2211 = vadd.f32 %v2197, %v2208
    %v2212 = vmul.f32 %v2209, 0.7978846
    %v2213 = vmul.f32 %v2210, 0.7978846
    %v2214 = vmul.f32 %v2211, 0.7978846
    %v2215 = vtanh.pop %v2212
    %v2216 = vtanh.pop %v2213
    %v2217 = vtanh.pop %v2214
    %v2218 = vadd.f32 %v2215, 1.0
    %v2219 = vadd.f32 %v2216, 1.0
    %v2220 = vadd.f32 %v2217, 1.0
    %v2221 = vmul.f32 %v2218, 0.5
    %v2222 = vmul.f32 %v2219, 0.5
    %v2223 = vmul.f32 %v2220, 0.5
    %v2224 = vmul.f32 %v2192, %v2221
    %v2225 = vmul.f32 %v2194, %v2222
    %v2226 = vmul.f32 %v2197, %v2223
    %v2227 = vpack.c.bf16 %v2225, %v2224
    %v2228 = vpack.c.bf16 %v2226, %v2226
    %v2230 = vperm.slane %v1737, 0
    %v2236 = vunpack.c.l.b16 %v1733
    %v2237 = vunpack.c.l.b16 %v1734
    %v2238 = vunpack.c.l.b16 %v1735
    %v2239 = vunpack.c.l.b16 %v1736
    %v2240 = vpack.c.b16 %v2237, %v2236
    %v2241 = vpack.c.b16 %v2239, %v2238
    %v2245 = vsel %vm354, %v2227, 0
    %v2248 = vsel %vm354, %v2228, 0
    %2250 = vmatpush.bf16.msra.mxu0 0
    %2251 = vmatpush.bf16.msra.mxu0 0
    %2252 = vmatpush.bf16.msra.mxu0 0
    %2253 = vmatpush.bf16.msra.mxu0 0
    %2254 = vmatpush.bf16.msra.mxu0 0
    %2255 = vmatpush.bf16.msra.mxu0 0
    %2256 = vmatpush.bf16.msra.mxu0 %v2241
    %2257 = vmatpush.bf16.msra.mxu0 %v2240
    %2258 = vmatmul.bf16.gmra.mxu0 %v2245
    %v2259 = vpop.f32.mrf.mxu0
    %v2260 = vadd.f32 %v2230, %v2259
    %v2261 = vpop.f32.mrf.mxu0
    %v2262 = vadd.f32 %v2230, %v2261
    %2263 = vmatmul.bf16.gmra.mxu0 %v2248
    %v2264 = vpop.f32.mrf.mxu0
    %v2265 = vadd.f32 %v2230, %v2264
    %v2266 = vpop.f32.mrf.mxu0
    %2267 = vdwg.mxu0
    %v2268 = vadd.f32 %v2078, %v2260
    %v2269 = vadd.f32 %v2079, %v2262
    %v2270 = vadd.f32 %v2080, %v2265
    %2271 = vst.msk [vmem:[%s119] sm:$0xff] %vm354, %v2268
    %2272 = vst.msk [vmem:[%s119 + $0x8] sm:$0xff] %vm354, %v2269
    %2273 = vst.msk [vmem:[%s119 + $0x10] sm:$0xff] %vm354, %v2270
    // Predicated region
    $region238: #{_lambda_.1} parent=1 // pred_check
      _
    $region239: #{_lambda_.1} parent=1 // pred_check_branch
      %2275 = sbr.rel (0) target = $region241
    $region240: #{_lambda_.1} parent=1 // pred_region
      _
    $region241: #{_lambda_.1} parent=1 // pred_fallthru
      _
    // Predicated region
    $region242: #{_lambda_.1} parent=1 // pred_check
      _
    $region243: #{_lambda_.1} parent=1 // pred_check_branch
      %2277 = sbr.rel (0) target = $region245
    $region244: #{_lambda_.1} parent=1 // pred_region
      %2279 = vsyncadd [#allocation3], 0
      %s2280 = sshll.u32 [#allocation2], 4
      %s2281 = int_to_ptr.vmem [resolvable:$true] %s2280
      %s2282 = sshll.u32 %s121, 4
      %s2283 = int_to_ptr.hbm [resolvable:$true] %s2282
      %2288 = dma.vmem_to_hbm [thread:$0]  %s2281, 256, %s2283, [#allocation3], 128, 128, 8
    $region245: #{_lambda_.1} parent=1 // pred_fallthru
      _
    // Predicated region
    $region246: #{_lambda_.1} parent=1 // pred_check
      _
    $region247: #{_lambda_.1} parent=1 // pred_check_branch
      %2290 = sbr.rel (0) target = $region249
    $region248: #{_lambda_.1} parent=1 // pred_region
      _
    $region249: #{_lambda_.1} parent=1 // pred_fallthru
      _
    // Predicated region
    $region250: #{_lambda_.1} parent=1 // pred_check
      _
    $region251: #{_lambda_.1} parent=1 // pred_check_branch
      %2292 = sbr.rel (0) target = $region253
    $region252: #{_lambda_.1} parent=1 // pred_region
      %2294 = dma.done [#allocation3], 256
    $region253: #{_lambda_.1} parent=1 // pred_fallthru
      _
    %2295 = vsyncpa [#allocation3], 1

</llo_original>
